<compile_context>
chip_gen: v7x
topology: tpu7x:2x2x1
jax: 0.10.0
libtpu: 0.0.40
codegen_flags: <defaults>
</compile_context>

<pallas_src>
import jax
import jax.numpy as jnp
from jax import lax
from jax.experimental import pallas as pl
from jax.experimental.pallas import tpu as pltpu

# ---- small synthetic config (GPTNeoX-like) ----
B, S = 2, 8            # batch, sequence
H, NH = 64, 2          # hidden size, attention heads
HD = H // NH           # head dim
FF = 4 * H             # MLP intermediate
V = 128                # vocab size == embed_out.out_features == v_head.in_features
NLAYERS = 2
OUT_ROWS = 8           # sublane padding for the (per-sequence) scalar reward output


def _layernorm(x, w, b, eps=1e-5):
    mu = jnp.mean(x, axis=-1, keepdims=True)
    var = jnp.mean((x - mu) ** 2, axis=-1, keepdims=True)
    return (x - mu) * lax.rsqrt(var + eps) * w + b


# ------------------------------------------------------------------
# Fused per-sequence kernel (grid over batch):
#   for l in range(NLAYERS):  x <- x + attn_l(ln1(x)) + mlp_l(ln2(x))
#   reward = mean_seq(ln_f(x)) @ (W_out @ w_vhead)
# ------------------------------------------------------------------
def reward_model_kernel(x_ref, cos_ref, sin_ref, rot_ref, bias_ref,
                        ln1w_ref, ln1b_ref, ln2w_ref, ln2b_ref,
                        wq_ref, bq_ref, wk_ref, bk_ref, wv_ref, bv_ref,
                        wo_ref, bo_ref,
                        w1_ref, b1_ref, w2_ref, b2_ref,
                        lnfw_ref, lnfb_ref, weff_ref,
                        o_ref):
    bf16 = jnp.bfloat16
    f32 = jnp.float32

    x = x_ref[0]                       # (S, H)  f32
    cos = cos_ref[...]                 # (S, HD) f32
    sin = sin_ref[...]                 # (S, HD) f32
    rot = rot_ref[...]                 # (HD, HD) bf16 exact +/-1 rotate_half matrix
    bias = bias_ref[...]               # (S, S)  f32 additive causal mask (0 / -1e30)

    # TODO(synk): real GPTNeoX uses head-interleaved QKV packing, rotary_pct=0.25 and
    # exact (erf) GELU; synthetic weights make those distinctions immaterial here.
    for l in range(NLAYERS):
        # ---------------- attention branch (parallel residual) ----------------
        h_ln = _layernorm(x, ln1w_ref[l], ln1b_ref[l])        # f32 VPU math
        h_bf = h_ln.astype(bf16)                              # cast only at MXU input
        attn = bo_ref[l]                                      # (1, H), added once
        for h in range(NH):                                   # NH = 2, fully unrolled
            q = jnp.dot(h_bf, wq_ref[l, h], preferred_element_type=f32) + bq_ref[l, h]
            k = jnp.dot(h_bf, wk_ref[l, h], preferred_element_type=f32) + bk_ref[l, h]
            v = jnp.dot(h_bf, wv_ref[l, h], preferred_element_type=f32) + bv_ref[l, h]
            # rotary; 1/sqrt(HD) already folded into wq/bq in the wrapper
            q = q * cos + jnp.dot(q.astype(bf16), rot, preferred_element_type=f32) * sin
            k = k * cos + jnp.dot(k.astype(bf16), rot, preferred_element_type=f32) * sin
            s = lax.dot_general(q.astype(bf16), k.astype(bf16),
                                (((1,), (1,)), ((), ())),      # contract head dims
                                preferred_element_type=f32) + bias
            p = jnp.exp(s - jnp.max(s, axis=-1, keepdims=True))
            p = p * pl.reciprocal(jnp.sum(p, axis=-1, keepdims=True), approx=True)
            ctx = jnp.dot(p.astype(bf16), v.astype(bf16),
                          preferred_element_type=f32)          # (S, HD)
            # fold this head's context straight through its W_o row block: no scratch,
            # no sub-128-lane column stores, no concatenate.
            attn = attn + jnp.dot(ctx.astype(bf16), wo_ref[l, h],
                                  preferred_element_type=f32)  # (S, H)

        # ---------------- MLP branch ----------------
        h2 = _layernorm(x, ln2w_ref[l], ln2b_ref[l])
        hid = jnp.dot(h2.astype(bf16), w1_ref[l],
                      preferred_element_type=f32) + b1_ref[l]  # (S, FF)
        hid = jax.nn.gelu(hid, approximate=True)
        mlp = jnp.dot(hid.astype(bf16), w2_ref[l],
                      preferred_element_type=f32) + b2_ref[l]  # (S, H)

        x = x + attn + mlp

    # ---------------- folded head ----------------
    xf = _layernorm(x, lnfw_ref[...], lnfb_ref[...])           # (S, H)
    pooled = jnp.mean(xf, axis=0, keepdims=True)               # (1, H) mean over seq
    # weff is (H, 128) bf16: column 0 holds W_out @ w_vhead, rest is lane padding.
    res = jnp.dot(pooled.astype(bf16), weff_ref[...],
                  preferred_element_type=f32)                  # (1, 128)
    o_ref[0] = jnp.broadcast_to(res, (OUT_ROWS, 128))          # lane/sublane-dense store


# ------------------------------------------------------------------
# Deterministic synthetic parameters ("checkpoint" stays f32; kernel layout prep below)
# ------------------------------------------------------------------
def init_params(key):
    def norm(k, shape, scale=0.02):
        return scale * jax.random.normal(k, shape, dtype=jnp.float32)

    ks = iter(jax.random.split(key, 12))
    return {
        "embed_in": norm(next(ks), (V, H)),
        "ln1_w": jnp.ones((NLAYERS, 1, H), jnp.float32),
        "ln1_b": jnp.zeros((NLAYERS, 1, H), jnp.float32),
        "ln2_w": jnp.ones((NLAYERS, 1, H), jnp.float32),
        "ln2_b": jnp.zeros((NLAYERS, 1, H), jnp.float32),
        "w_qkv": norm(next(ks), (NLAYERS, H, 3 * H)),
        "b_qkv": norm(next(ks), (NLAYERS, 1, 3 * H)),
        "w_o":   norm(next(ks), (NLAYERS, H, H)),
        "b_o":   norm(next(ks), (NLAYERS, 1, H)),
        "w_ff1": norm(next(ks), (NLAYERS, H, FF)),
        "b_ff1": norm(next(ks), (NLAYERS, 1, FF)),
        "w_ff2": norm(next(ks), (NLAYERS, FF, H)),
        "b_ff2": norm(next(ks), (NLAYERS, 1, H)),
        "lnf_w": jnp.ones((1, H), jnp.float32),
        "lnf_b": jnp.zeros((1, H), jnp.float32),
        "w_out": norm(next(ks), (H, V)),      # embed_out: Linear(H, V, bias=False)
        "w_vhead": norm(next(ks), (V, 1)),    # v_head:    Linear(V, 1, bias=False)
    }


# ------------------------------------------------------------------
# Forward:  reward = v_head(mean_seq(GPTNeoX(input_ids).logits)).squeeze(-1)
# ------------------------------------------------------------------
@jax.jit
def reward_model_forward(params, input_ids):
    bf16 = jnp.bfloat16

    # glue: token embedding gather kept in XLA (data-dependent gather)
    x = params["embed_in"][input_ids]                                # (B, S, H) f32

    # rotary tables, one head's worth (identical across heads): (S, HD)
    pos = jnp.arange(S, dtype=jnp.float32)
    inv_freq = 1.0 / (10000.0 ** (jnp.arange(0, HD, 2, dtype=jnp.float32) / HD))
    freqs = pos[:, None] * inv_freq[None, :]                         # (S, HD/2)
    emb = jnp.concatenate([freqs, freqs], axis=-1)                   # (S, HD)
    cos, sin = jnp.cos(emb), jnp.sin(emb)

    # rotate_half as an exact +/-1 permutation matrix, bf16 (exactly representable)
    half = HD // 2
    eye = jnp.eye(half, dtype=jnp.float32)
    zero = jnp.zeros((half, half), jnp.float32)
    rot = jnp.block([[zero, eye], [-eye, zero]]).astype(bf16)        # (HD, HD)

    # additive causal bias, hoisted out of the kernel
    ri = jnp.arange(S)
    bias = jnp.where(ri[None, :] <= ri[:, None], 0.0, -1e30).astype(jnp.float32)

    # split fused QKV into per-head, lane-aligned bf16 slabs; fold 1/sqrt(HD) into q
    scale = 1.0 / (HD ** 0.5)
    w_qkv, b_qkv = params["w_qkv"], params["b_qkv"]

    def split_heads_w(w):        # (L, H, H) -> (L, NH, H, HD)
        return jnp.transpose(w.reshape(NLAYERS, H, NH, HD), (0, 2, 1, 3))

    def split_heads_b(b):        # (L, 1, H) -> (L, NH, 1, HD)
        return jnp.transpose(b.reshape(NLAYERS, 1, NH, HD), (0, 2, 1, 3))

    wq = split_heads_w(w_qkv[:, :, 0 * H:1 * H] * scale).astype(bf16)
    wk = split_heads_w(w_qkv[:, :, 1 * H:2 * H]).astype(bf16)
    wv = split_heads_w(w_qkv[:, :, 2 * H:3 * H]).astype(bf16)
    bq = split_heads_b(b_qkv[:, :, 0 * H:1 * H] * scale)
    bk = split_heads_b(b_qkv[:, :, 1 * H:2 * H])
    bv = split_heads_b(b_qkv[:, :, 2 * H:3 * H])

    # per-head row blocks of the output projection: (L, H, H) -> (L, NH, HD, H)
    wo = params["w_o"].reshape(NLAYERS, NH, HD, H).astype(bf16)
    w1 = params["w_ff1"].astype(bf16)
    w2 = params["w_ff2"].astype(bf16)

    # folded head weight: W_out @ w_vhead, lane-padded for a dense (1, 128) matmul/store
    w_eff = jnp.dot(params["w_out"], params["w_vhead"])              # (H, 1)
    weff = jnp.pad(w_eff, ((0, 0), (0, 127))).astype(bf16)           # (H, 128)

    args = (x, cos, sin, rot, bias,
            params["ln1_w"], params["ln1_b"], params["ln2_w"], params["ln2_b"],
            wq, bq, wk, bk, wv, bv,
            wo, params["b_o"],
            w1, params["b_ff1"], w2, params["b_ff2"],
            params["lnf_w"], params["lnf_b"], weff)

    vmem = pl.BlockSpec(memory_space=pltpu.MemorySpace.VMEM)
    in_specs = [pl.BlockSpec((1, S, H), lambda b: (b, 0, 0))] + [vmem] * (len(args) - 1)

    # advisory cost estimate so XLA schedules the surrounding gather sensibly
    flops = 2 * B * NLAYERS * (S * H * 3 * H          # qkv projections
                               + 2 * S * HD * HD * NH  # rotary permutation matmuls
                               + 2 * S * S * HD * NH   # scores + p@v
                               + S * H * H             # output projection
                               + 2 * S * H * FF)       # MLP
    flops += 2 * B * (S * H + H * 128)                 # pooling + folded head
    transcendentals = B * NLAYERS * (NH * S * S + S * FF)
    bytes_accessed = sum(int(a.size) * a.dtype.itemsize for a in args) \
        + B * OUT_ROWS * 128 * 4

    out = pl.pallas_call(
        reward_model_kernel,
        grid=(B,),
        out_shape=jax.ShapeDtypeStruct((B, OUT_ROWS, 128), jnp.float32),
        in_specs=in_specs,
        out_specs=pl.BlockSpec((1, OUT_ROWS, 128), lambda b: (b, 0, 0)),
        compiler_params=pltpu.CompilerParams(dimension_semantics=("parallel",)),
        cost_estimate=pl.CostEstimate(flops=flops,
                                      transcendentals=transcendentals,
                                      bytes_accessed=bytes_accessed),
    )(*args)
    return out[:, 0, 0]                                              # .squeeze(-1) -> (B,)


if __name__ == "__main__":
    key = jax.random.PRNGKey(0)
    k_ids, k_params = jax.random.split(key)
    input_ids = jax.random.randint(k_ids, (B, S), 0, V, dtype=jnp.int32)
    params = init_params(k_params)

    out = reward_model_forward(params, input_ids)
    out = jax.block_until_ready(out)
    assert out.shape == (B,) and out.dtype == jnp.float32
    assert bool(jnp.all(jnp.isfinite(out)))
    print("KERNEL_OK")
</pallas_src>

<mosaic_0001>
module attributes {stable_mosaic.version = 11 : i64} {
  func.func @reward_model_kernel(%arg0: i32, %arg1: memref<1x8x64xf32, #tpu.memory_space<vmem>>, %arg2: memref<8x32xf32, #tpu.memory_space<vmem>>, %arg3: memref<8x32xf32, #tpu.memory_space<vmem>>, %arg4: memref<32x32xbf16, #tpu.memory_space<vmem>>, %arg5: memref<8x8xf32, #tpu.memory_space<vmem>>, %arg6: memref<2x1x64xf32, #tpu.memory_space<vmem>>, %arg7: memref<2x1x64xf32, #tpu.memory_space<vmem>>, %arg8: memref<2x1x64xf32, #tpu.memory_space<vmem>>, %arg9: memref<2x1x64xf32, #tpu.memory_space<vmem>>, %arg10: memref<2x2x64x32xbf16, #tpu.memory_space<vmem>>, %arg11: memref<2x2x1x32xf32, #tpu.memory_space<vmem>>, %arg12: memref<2x2x64x32xbf16, #tpu.memory_space<vmem>>, %arg13: memref<2x2x1x32xf32, #tpu.memory_space<vmem>>, %arg14: memref<2x2x64x32xbf16, #tpu.memory_space<vmem>>, %arg15: memref<2x2x1x32xf32, #tpu.memory_space<vmem>>, %arg16: memref<2x2x32x64xbf16, #tpu.memory_space<vmem>>, %arg17: memref<2x1x64xf32, #tpu.memory_space<vmem>>, %arg18: memref<2x64x256xbf16, #tpu.memory_space<vmem>>, %arg19: memref<2x1x256xf32, #tpu.memory_space<vmem>>, %arg20: memref<2x256x64xbf16, #tpu.memory_space<vmem>>, %arg21: memref<2x1x64xf32, #tpu.memory_space<vmem>>, %arg22: memref<1x64xf32, #tpu.memory_space<vmem>>, %arg23: memref<1x64xf32, #tpu.memory_space<vmem>>, %arg24: memref<64x128xbf16, #tpu.memory_space<vmem>>, %arg25: memref<1x8x128xf32, #tpu.memory_space<vmem>>) attributes {dimension_semantics = [#tpu.dimension_semantics<parallel>], iteration_bounds = array<i64: 2>, scalar_prefetch = 0 : i64, scratch_operands = 0 : i64, tpu.core_type = #tpu.core_type<tc>, window_params = [{transform_indices = @transform_0, window_bounds = array<i64: 1, 8, 64>}, {pipeline_mode = #tpu.pipeline_mode<synchronous>, transform_indices = @transform_1, window_bounds = array<i64: 8, 32>}, {pipeline_mode = #tpu.pipeline_mode<synchronous>, transform_indices = @transform_2, window_bounds = array<i64: 8, 32>}, {pipeline_mode = #tpu.pipeline_mode<synchronous>, transform_indices = @transform_3, window_bounds = array<i64: 32, 32>}, {pipeline_mode = #tpu.pipeline_mode<synchronous>, transform_indices = @transform_4, window_bounds = array<i64: 8, 8>}, {pipeline_mode = #tpu.pipeline_mode<synchronous>, transform_indices = @transform_5, window_bounds = array<i64: 2, 1, 64>}, {pipeline_mode = #tpu.pipeline_mode<synchronous>, transform_indices = @transform_6, window_bounds = array<i64: 2, 1, 64>}, {pipeline_mode = #tpu.pipeline_mode<synchronous>, transform_indices = @transform_7, window_bounds = array<i64: 2, 1, 64>}, {pipeline_mode = #tpu.pipeline_mode<synchronous>, transform_indices = @transform_8, window_bounds = array<i64: 2, 1, 64>}, {pipeline_mode = #tpu.pipeline_mode<synchronous>, transform_indices = @transform_9, window_bounds = array<i64: 2, 2, 64, 32>}, {pipeline_mode = #tpu.pipeline_mode<synchronous>, transform_indices = @transform_10, window_bounds = array<i64: 2, 2, 1, 32>}, {pipeline_mode = #tpu.pipeline_mode<synchronous>, transform_indices = @transform_11, window_bounds = array<i64: 2, 2, 64, 32>}, {pipeline_mode = #tpu.pipeline_mode<synchronous>, transform_indices = @transform_12, window_bounds = array<i64: 2, 2, 1, 32>}, {pipeline_mode = #tpu.pipeline_mode<synchronous>, transform_indices = @transform_13, window_bounds = array<i64: 2, 2, 64, 32>}, {pipeline_mode = #tpu.pipeline_mode<synchronous>, transform_indices = @transform_14, window_bounds = array<i64: 2, 2, 1, 32>}, {pipeline_mode = #tpu.pipeline_mode<synchronous>, transform_indices = @transform_15, window_bounds = array<i64: 2, 2, 32, 64>}, {pipeline_mode = #tpu.pipeline_mode<synchronous>, transform_indices = @transform_16, window_bounds = array<i64: 2, 1, 64>}, {pipeline_mode = #tpu.pipeline_mode<synchronous>, transform_indices = @transform_17, window_bounds = array<i64: 2, 64, 256>}, {pipeline_mode = #tpu.pipeline_mode<synchronous>, transform_indices = @transform_18, window_bounds = array<i64: 2, 1, 256>}, {pipeline_mode = #tpu.pipeline_mode<synchronous>, transform_indices = @transform_19, window_bounds = array<i64: 2, 256, 64>}, {pipeline_mode = #tpu.pipeline_mode<synchronous>, transform_indices = @transform_20, window_bounds = array<i64: 2, 1, 64>}, {pipeline_mode = #tpu.pipeline_mode<synchronous>, transform_indices = @transform_21, window_bounds = array<i64: 1, 64>}, {pipeline_mode = #tpu.pipeline_mode<synchronous>, transform_indices = @transform_22, window_bounds = array<i64: 1, 64>}, {pipeline_mode = #tpu.pipeline_mode<synchronous>, transform_indices = @transform_23, window_bounds = array<i64: 64, 128>}, {transform_indices = @transform_24, window_bounds = array<i64: 1, 8, 128>}]} {
    %c0 = arith.constant 0 : index
    %c0_0 = arith.constant 0 : index
    %c0_1 = arith.constant 0 : index
    %0 = vector.load %arg1[%c0, %c0_0, %c0_1] : memref<1x8x64xf32, #tpu.memory_space<vmem>>, vector<1x8x64xf32>
    %1 = vector.shape_cast %0 : vector<1x8x64xf32> to vector<8x64xf32>
    %c0_2 = arith.constant 0 : index
    %c0_3 = arith.constant 0 : index
    %2 = vector.load %arg2[%c0_2, %c0_3] : memref<8x32xf32, #tpu.memory_space<vmem>>, vector<8x32xf32>
    %c0_4 = arith.constant 0 : index
    %c0_5 = arith.constant 0 : index
    %3 = vector.load %arg3[%c0_4, %c0_5] : memref<8x32xf32, #tpu.memory_space<vmem>>, vector<8x32xf32>
    %c0_6 = arith.constant 0 : index
    %c0_7 = arith.constant 0 : index
    %4 = vector.load %arg4[%c0_6, %c0_7] : memref<32x32xbf16, #tpu.memory_space<vmem>>, vector<32x32xbf16>
    %c0_8 = arith.constant 0 : index
    %c0_9 = arith.constant 0 : index
    %5 = vector.load %arg5[%c0_8, %c0_9] : memref<8x8xf32, #tpu.memory_space<vmem>>, vector<8x8xf32>
    %c0_10 = arith.constant 0 : index
    %c0_11 = arith.constant 0 : index
    %c0_12 = arith.constant 0 : index
    %6 = vector.load %arg6[%c0_10, %c0_11, %c0_12] : memref<2x1x64xf32, #tpu.memory_space<vmem>>, vector<1x1x64xf32>
    %7 = vector.shape_cast %6 : vector<1x1x64xf32> to vector<1x64xf32>
    %c0_13 = arith.constant 0 : index
    %c0_14 = arith.constant 0 : index
    %c0_15 = arith.constant 0 : index
    %8 = vector.load %arg7[%c0_13, %c0_14, %c0_15] : memref<2x1x64xf32, #tpu.memory_space<vmem>>, vector<1x1x64xf32>
    %9 = vector.shape_cast %8 : vector<1x1x64xf32> to vector<1x64xf32>
    %cst = arith.constant dense<0.000000e+00> : vector<8xf32>
    %10 = vector.multi_reduction <add>, %1, %cst [1] : vector<8x64xf32> to vector<8xf32>
    %11 = vector.shape_cast %10 : vector<8xf32> to vector<8x1xf32>
    %cst_16 = arith.constant 6.400000e+01 : f32
    %12 = vector.broadcast %cst_16 : f32 to vector<8x1xf32>
    %13 = arith.divf %11, %12 : vector<8x1xf32>
    %14 = vector.broadcast %13 : vector<8x1xf32> to vector<8x64xf32>
    %15 = arith.subf %1, %14 : vector<8x64xf32>
    %16 = arith.mulf %15, %15 : vector<8x64xf32>
    %cst_17 = arith.constant dense<0.000000e+00> : vector<8xf32>
    %17 = vector.multi_reduction <add>, %16, %cst_17 [1] : vector<8x64xf32> to vector<8xf32>
    %18 = vector.shape_cast %17 : vector<8xf32> to vector<8x1xf32>
    %cst_18 = arith.constant 6.400000e+01 : f32
    %19 = vector.broadcast %cst_18 : f32 to vector<8x1xf32>
    %20 = arith.divf %18, %19 : vector<8x1xf32>
    %21 = vector.broadcast %13 : vector<8x1xf32> to vector<8x64xf32>
    %22 = arith.subf %1, %21 : vector<8x64xf32>
    %cst_19 = arith.constant 9.99999974E-6 : f32
    %23 = vector.broadcast %cst_19 : f32 to vector<8x1xf32>
    %24 = arith.addf %20, %23 : vector<8x1xf32>
    %25 = math.rsqrt %24 : vector<8x1xf32>
    %26 = vector.broadcast %25 : vector<8x1xf32> to vector<8x64xf32>
    %27 = arith.mulf %22, %26 : vector<8x64xf32>
    %28 = vector.broadcast %7 : vector<1x64xf32> to vector<8x64xf32>
    %29 = arith.mulf %27, %28 : vector<8x64xf32>
    %30 = vector.broadcast %9 : vector<1x64xf32> to vector<8x64xf32>
    %31 = arith.addf %29, %30 : vector<8x64xf32>
    %32 = arith.truncf %31 : vector<8x64xf32> to vector<8x64xbf16>
    %c0_20 = arith.constant 0 : index
    %c0_21 = arith.constant 0 : index
    %c0_22 = arith.constant 0 : index
    %33 = vector.load %arg17[%c0_20, %c0_21, %c0_22] : memref<2x1x64xf32, #tpu.memory_space<vmem>>, vector<1x1x64xf32>
    %34 = vector.shape_cast %33 : vector<1x1x64xf32> to vector<1x64xf32>
    %c0_23 = arith.constant 0 : index
    %c0_24 = arith.constant 0 : index
    %c0_25 = arith.constant 0 : index
    %c0_26 = arith.constant 0 : index
    %35 = vector.load %arg10[%c0_23, %c0_24, %c0_25, %c0_26] : memref<2x2x64x32xbf16, #tpu.memory_space<vmem>>, vector<1x1x64x32xbf16>
    %36 = vector.shape_cast %35 : vector<1x1x64x32xbf16> to vector<64x32xbf16>
    %cst_27 = arith.constant dense<0.000000e+00> : vector<8x32xf32>
    %37 = tpu.matmul %32, %36, %cst_27 {dimension_numbers = #tpu.dot_dimension_numbers<[1], [0], [0], [1], [0, 0, 1, 1], [], []>} : vector<8x64xbf16>, vector<64x32xbf16>, vector<8x32xf32> -> vector<8x32xf32>
    %c0_28 = arith.constant 0 : index
    %c0_29 = arith.constant 0 : index
    %c0_30 = arith.constant 0 : index
    %c0_31 = arith.constant 0 : index
    %38 = vector.load %arg11[%c0_28, %c0_29, %c0_30, %c0_31] : memref<2x2x1x32xf32, #tpu.memory_space<vmem>>, vector<1x1x1x32xf32>
    %39 = vector.shape_cast %38 : vector<1x1x1x32xf32> to vector<1x32xf32>
    %40 = vector.broadcast %39 : vector<1x32xf32> to vector<8x32xf32>
    %41 = arith.addf %37, %40 : vector<8x32xf32>
    %c0_32 = arith.constant 0 : index
    %c0_33 = arith.constant 0 : index
    %c0_34 = arith.constant 0 : index
    %c0_35 = arith.constant 0 : index
    %42 = vector.load %arg12[%c0_32, %c0_33, %c0_34, %c0_35] : memref<2x2x64x32xbf16, #tpu.memory_space<vmem>>, vector<1x1x64x32xbf16>
    %43 = vector.shape_cast %42 : vector<1x1x64x32xbf16> to vector<64x32xbf16>
    %cst_36 = arith.constant dense<0.000000e+00> : vector<8x32xf32>
    %44 = tpu.matmul %32, %43, %cst_36 {dimension_numbers = #tpu.dot_dimension_numbers<[1], [0], [0], [1], [0, 0, 1, 1], [], []>} : vector<8x64xbf16>, vector<64x32xbf16>, vector<8x32xf32> -> vector<8x32xf32>
    %c0_37 = arith.constant 0 : index
    %c0_38 = arith.constant 0 : index
    %c0_39 = arith.constant 0 : index
    %c0_40 = arith.constant 0 : index
    %45 = vector.load %arg13[%c0_37, %c0_38, %c0_39, %c0_40] : memref<2x2x1x32xf32, #tpu.memory_space<vmem>>, vector<1x1x1x32xf32>
    %46 = vector.shape_cast %45 : vector<1x1x1x32xf32> to vector<1x32xf32>
    %47 = vector.broadcast %46 : vector<1x32xf32> to vector<8x32xf32>
    %48 = arith.addf %44, %47 : vector<8x32xf32>
    %c0_41 = arith.constant 0 : index
    %c0_42 = arith.constant 0 : index
    %c0_43 = arith.constant 0 : index
    %c0_44 = arith.constant 0 : index
    %49 = vector.load %arg14[%c0_41, %c0_42, %c0_43, %c0_44] : memref<2x2x64x32xbf16, #tpu.memory_space<vmem>>, vector<1x1x64x32xbf16>
    %50 = vector.shape_cast %49 : vector<1x1x64x32xbf16> to vector<64x32xbf16>
    %cst_45 = arith.constant dense<0.000000e+00> : vector<8x32xf32>
    %51 = tpu.matmul %32, %50, %cst_45 {dimension_numbers = #tpu.dot_dimension_numbers<[1], [0], [0], [1], [0, 0, 1, 1], [], []>} : vector<8x64xbf16>, vector<64x32xbf16>, vector<8x32xf32> -> vector<8x32xf32>
    %c0_46 = arith.constant 0 : index
    %c0_47 = arith.constant 0 : index
    %c0_48 = arith.constant 0 : index
    %c0_49 = arith.constant 0 : index
    %52 = vector.load %arg15[%c0_46, %c0_47, %c0_48, %c0_49] : memref<2x2x1x32xf32, #tpu.memory_space<vmem>>, vector<1x1x1x32xf32>
    %53 = vector.shape_cast %52 : vector<1x1x1x32xf32> to vector<1x32xf32>
    %54 = vector.broadcast %53 : vector<1x32xf32> to vector<8x32xf32>
    %55 = arith.addf %51, %54 : vector<8x32xf32>
    %56 = arith.mulf %41, %2 : vector<8x32xf32>
    %57 = arith.truncf %41 : vector<8x32xf32> to vector<8x32xbf16>
    %cst_50 = arith.constant dense<0.000000e+00> : vector<8x32xf32>
    %58 = tpu.matmul %57, %4, %cst_50 {dimension_numbers = #tpu.dot_dimension_numbers<[1], [0], [0], [1], [0, 0, 1, 1], [], []>} : vector<8x32xbf16>, vector<32x32xbf16>, vector<8x32xf32> -> vector<8x32xf32>
    %59 = arith.mulf %58, %3 : vector<8x32xf32>
    %60 = arith.addf %56, %59 : vector<8x32xf32>
    %61 = arith.mulf %48, %2 : vector<8x32xf32>
    %62 = arith.truncf %48 : vector<8x32xf32> to vector<8x32xbf16>
    %cst_51 = arith.constant dense<0.000000e+00> : vector<8x32xf32>
    %63 = tpu.matmul %62, %4, %cst_51 {dimension_numbers = #tpu.dot_dimension_numbers<[1], [0], [0], [1], [0, 0, 1, 1], [], []>} : vector<8x32xbf16>, vector<32x32xbf16>, vector<8x32xf32> -> vector<8x32xf32>
    %64 = arith.mulf %63, %3 : vector<8x32xf32>
    %65 = arith.addf %61, %64 : vector<8x32xf32>
    %66 = arith.truncf %60 : vector<8x32xf32> to vector<8x32xbf16>
    %67 = arith.truncf %65 : vector<8x32xf32> to vector<8x32xbf16>
    %cst_52 = arith.constant dense<0.000000e+00> : vector<8x8xf32>
    %68 = tpu.matmul %66, %67, %cst_52 {dimension_numbers = #tpu.dot_dimension_numbers<[1], [1], [0], [0], [0, 0, 1, 0], [], []>} : vector<8x32xbf16>, vector<8x32xbf16>, vector<8x8xf32> -> vector<8x8xf32>
    %69 = arith.addf %68, %5 : vector<8x8xf32>
    %cst_53 = arith.constant dense<0xFF800000> : vector<8xf32>
    %70 = vector.multi_reduction <maximumf>, %69, %cst_53 [1] : vector<8x8xf32> to vector<8xf32>
    %71 = vector.shape_cast %70 : vector<8xf32> to vector<8x1xf32>
    %72 = vector.broadcast %71 : vector<8x1xf32> to vector<8x8xf32>
    %73 = arith.subf %69, %72 : vector<8x8xf32>
    %74 = math.exp %73 : vector<8x8xf32>
    %cst_54 = arith.constant dense<0.000000e+00> : vector<8xf32>
    %75 = vector.multi_reduction <add>, %74, %cst_54 [1] : vector<8x8xf32> to vector<8xf32>
    %76 = vector.shape_cast %75 : vector<8xf32> to vector<8x1xf32>
    %77 = tpu.reciprocal %76 {approx = true} : vector<8x1xf32> -> vector<8x1xf32>
    %78 = vector.broadcast %77 : vector<8x1xf32> to vector<8x8xf32>
    %79 = arith.mulf %74, %78 : vector<8x8xf32>
    %80 = arith.truncf %79 : vector<8x8xf32> to vector<8x8xbf16>
    %81 = arith.truncf %55 : vector<8x32xf32> to vector<8x32xbf16>
    %cst_55 = arith.constant dense<0.000000e+00> : vector<8x32xf32>
    %82 = tpu.matmul %80, %81, %cst_55 {dimension_numbers = #tpu.dot_dimension_numbers<[1], [0], [0], [1], [0, 0, 1, 1], [], []>} : vector<8x8xbf16>, vector<8x32xbf16>, vector<8x32xf32> -> vector<8x32xf32>
    %83 = arith.truncf %82 : vector<8x32xf32> to vector<8x32xbf16>
    %c0_56 = arith.constant 0 : index
    %c0_57 = arith.constant 0 : index
    %c0_58 = arith.constant 0 : index
    %c0_59 = arith.constant 0 : index
    %84 = vector.load %arg16[%c0_56, %c0_57, %c0_58, %c0_59] : memref<2x2x32x64xbf16, #tpu.memory_space<vmem>>, vector<1x1x32x64xbf16>
    %85 = vector.shape_cast %84 : vector<1x1x32x64xbf16> to vector<32x64xbf16>
    %cst_60 = arith.constant dense<0.000000e+00> : vector<8x64xf32>
    %86 = tpu.matmul %83, %85, %cst_60 {dimension_numbers = #tpu.dot_dimension_numbers<[1], [0], [0], [1], [0, 0, 1, 1], [], []>} : vector<8x32xbf16>, vector<32x64xbf16>, vector<8x64xf32> -> vector<8x64xf32>
    %87 = vector.broadcast %34 : vector<1x64xf32> to vector<8x64xf32>
    %88 = arith.addf %87, %86 : vector<8x64xf32>
    %c0_61 = arith.constant 0 : index
    %c1 = arith.constant 1 : index
    %c0_62 = arith.constant 0 : index
    %c0_63 = arith.constant 0 : index
    %89 = vector.load %arg10[%c0_61, %c1, %c0_62, %c0_63] : memref<2x2x64x32xbf16, #tpu.memory_space<vmem>>, vector<1x1x64x32xbf16>
    %90 = vector.shape_cast %89 : vector<1x1x64x32xbf16> to vector<64x32xbf16>
    %cst_64 = arith.constant dense<0.000000e+00> : vector<8x32xf32>
    %91 = tpu.matmul %32, %90, %cst_64 {dimension_numbers = #tpu.dot_dimension_numbers<[1], [0], [0], [1], [0, 0, 1, 1], [], []>} : vector<8x64xbf16>, vector<64x32xbf16>, vector<8x32xf32> -> vector<8x32xf32>
    %c0_65 = arith.constant 0 : index
    %c1_66 = arith.constant 1 : index
    %c0_67 = arith.constant 0 : index
    %c0_68 = arith.constant 0 : index
    %92 = vector.load %arg11[%c0_65, %c1_66, %c0_67, %c0_68] : memref<2x2x1x32xf32, #tpu.memory_space<vmem>>, vector<1x1x1x32xf32>
    %93 = vector.shape_cast %92 : vector<1x1x1x32xf32> to vector<1x32xf32>
    %94 = vector.broadcast %93 : vector<1x32xf32> to vector<8x32xf32>
    %95 = arith.addf %91, %94 : vector<8x32xf32>
    %c0_69 = arith.constant 0 : index
    %c1_70 = arith.constant 1 : index
    %c0_71 = arith.constant 0 : index
    %c0_72 = arith.constant 0 : index
    %96 = vector.load %arg12[%c0_69, %c1_70, %c0_71, %c0_72] : memref<2x2x64x32xbf16, #tpu.memory_space<vmem>>, vector<1x1x64x32xbf16>
    %97 = vector.shape_cast %96 : vector<1x1x64x32xbf16> to vector<64x32xbf16>
    %cst_73 = arith.constant dense<0.000000e+00> : vector<8x32xf32>
    %98 = tpu.matmul %32, %97, %cst_73 {dimension_numbers = #tpu.dot_dimension_numbers<[1], [0], [0], [1], [0, 0, 1, 1], [], []>} : vector<8x64xbf16>, vector<64x32xbf16>, vector<8x32xf32> -> vector<8x32xf32>
    %c0_74 = arith.constant 0 : index
    %c1_75 = arith.constant 1 : index
    %c0_76 = arith.constant 0 : index
    %c0_77 = arith.constant 0 : index
    %99 = vector.load %arg13[%c0_74, %c1_75, %c0_76, %c0_77] : memref<2x2x1x32xf32, #tpu.memory_space<vmem>>, vector<1x1x1x32xf32>
    %100 = vector.shape_cast %99 : vector<1x1x1x32xf32> to vector<1x32xf32>
    %101 = vector.broadcast %100 : vector<1x32xf32> to vector<8x32xf32>
    %102 = arith.addf %98, %101 : vector<8x32xf32>
    %c0_78 = arith.constant 0 : index
    %c1_79 = arith.constant 1 : index
    %c0_80 = arith.constant 0 : index
    %c0_81 = arith.constant 0 : index
    %103 = vector.load %arg14[%c0_78, %c1_79, %c0_80, %c0_81] : memref<2x2x64x32xbf16, #tpu.memory_space<vmem>>, vector<1x1x64x32xbf16>
    %104 = vector.shape_cast %103 : vector<1x1x64x32xbf16> to vector<64x32xbf16>
    %cst_82 = arith.constant dense<0.000000e+00> : vector<8x32xf32>
    %105 = tpu.matmul %32, %104, %cst_82 {dimension_numbers = #tpu.dot_dimension_numbers<[1], [0], [0], [1], [0, 0, 1, 1], [], []>} : vector<8x64xbf16>, vector<64x32xbf16>, vector<8x32xf32> -> vector<8x32xf32>
    %c0_83 = arith.constant 0 : index
    %c1_84 = arith.constant 1 : index
    %c0_85 = arith.constant 0 : index
    %c0_86 = arith.constant 0 : index
    %106 = vector.load %arg15[%c0_83, %c1_84, %c0_85, %c0_86] : memref<2x2x1x32xf32, #tpu.memory_space<vmem>>, vector<1x1x1x32xf32>
    %107 = vector.shape_cast %106 : vector<1x1x1x32xf32> to vector<1x32xf32>
    %108 = vector.broadcast %107 : vector<1x32xf32> to vector<8x32xf32>
    %109 = arith.addf %105, %108 : vector<8x32xf32>
    %110 = arith.mulf %95, %2 : vector<8x32xf32>
    %111 = arith.truncf %95 : vector<8x32xf32> to vector<8x32xbf16>
    %cst_87 = arith.constant dense<0.000000e+00> : vector<8x32xf32>
    %112 = tpu.matmul %111, %4, %cst_87 {dimension_numbers = #tpu.dot_dimension_numbers<[1], [0], [0], [1], [0, 0, 1, 1], [], []>} : vector<8x32xbf16>, vector<32x32xbf16>, vector<8x32xf32> -> vector<8x32xf32>
    %113 = arith.mulf %112, %3 : vector<8x32xf32>
    %114 = arith.addf %110, %113 : vector<8x32xf32>
    %115 = arith.mulf %102, %2 : vector<8x32xf32>
    %116 = arith.truncf %102 : vector<8x32xf32> to vector<8x32xbf16>
    %cst_88 = arith.constant dense<0.000000e+00> : vector<8x32xf32>
    %117 = tpu.matmul %116, %4, %cst_88 {dimension_numbers = #tpu.dot_dimension_numbers<[1], [0], [0], [1], [0, 0, 1, 1], [], []>} : vector<8x32xbf16>, vector<32x32xbf16>, vector<8x32xf32> -> vector<8x32xf32>
    %118 = arith.mulf %117, %3 : vector<8x32xf32>
    %119 = arith.addf %115, %118 : vector<8x32xf32>
    %120 = arith.truncf %114 : vector<8x32xf32> to vector<8x32xbf16>
    %121 = arith.truncf %119 : vector<8x32xf32> to vector<8x32xbf16>
    %cst_89 = arith.constant dense<0.000000e+00> : vector<8x8xf32>
    %122 = tpu.matmul %120, %121, %cst_89 {dimension_numbers = #tpu.dot_dimension_numbers<[1], [1], [0], [0], [0, 0, 1, 0], [], []>} : vector<8x32xbf16>, vector<8x32xbf16>, vector<8x8xf32> -> vector<8x8xf32>
    %123 = arith.addf %122, %5 : vector<8x8xf32>
    %cst_90 = arith.constant dense<0xFF800000> : vector<8xf32>
    %124 = vector.multi_reduction <maximumf>, %123, %cst_90 [1] : vector<8x8xf32> to vector<8xf32>
    %125 = vector.shape_cast %124 : vector<8xf32> to vector<8x1xf32>
    %126 = vector.broadcast %125 : vector<8x1xf32> to vector<8x8xf32>
    %127 = arith.subf %123, %126 : vector<8x8xf32>
    %128 = math.exp %127 : vector<8x8xf32>
    %cst_91 = arith.constant dense<0.000000e+00> : vector<8xf32>
    %129 = vector.multi_reduction <add>, %128, %cst_91 [1] : vector<8x8xf32> to vector<8xf32>
    %130 = vector.shape_cast %129 : vector<8xf32> to vector<8x1xf32>
    %131 = tpu.reciprocal %130 {approx = true} : vector<8x1xf32> -> vector<8x1xf32>
    %132 = vector.broadcast %131 : vector<8x1xf32> to vector<8x8xf32>
    %133 = arith.mulf %128, %132 : vector<8x8xf32>
    %134 = arith.truncf %133 : vector<8x8xf32> to vector<8x8xbf16>
    %135 = arith.truncf %109 : vector<8x32xf32> to vector<8x32xbf16>
    %cst_92 = arith.constant dense<0.000000e+00> : vector<8x32xf32>
    %136 = tpu.matmul %134, %135, %cst_92 {dimension_numbers = #tpu.dot_dimension_numbers<[1], [0], [0], [1], [0, 0, 1, 1], [], []>} : vector<8x8xbf16>, vector<8x32xbf16>, vector<8x32xf32> -> vector<8x32xf32>
    %137 = arith.truncf %136 : vector<8x32xf32> to vector<8x32xbf16>
    %c0_93 = arith.constant 0 : index
    %c1_94 = arith.constant 1 : index
    %c0_95 = arith.constant 0 : index
    %c0_96 = arith.constant 0 : index
    %138 = vector.load %arg16[%c0_93, %c1_94, %c0_95, %c0_96] : memref<2x2x32x64xbf16, #tpu.memory_space<vmem>>, vector<1x1x32x64xbf16>
    %139 = vector.shape_cast %138 : vector<1x1x32x64xbf16> to vector<32x64xbf16>
    %cst_97 = arith.constant dense<0.000000e+00> : vector<8x64xf32>
    %140 = tpu.matmul %137, %139, %cst_97 {dimension_numbers = #tpu.dot_dimension_numbers<[1], [0], [0], [1], [0, 0, 1, 1], [], []>} : vector<8x32xbf16>, vector<32x64xbf16>, vector<8x64xf32> -> vector<8x64xf32>
    %141 = arith.addf %88, %140 : vector<8x64xf32>
    %c0_98 = arith.constant 0 : index
    %c0_99 = arith.constant 0 : index
    %c0_100 = arith.constant 0 : index
    %142 = vector.load %arg8[%c0_98, %c0_99, %c0_100] : memref<2x1x64xf32, #tpu.memory_space<vmem>>, vector<1x1x64xf32>
    %143 = vector.shape_cast %142 : vector<1x1x64xf32> to vector<1x64xf32>
    %c0_101 = arith.constant 0 : index
    %c0_102 = arith.constant 0 : index
    %c0_103 = arith.constant 0 : index
    %144 = vector.load %arg9[%c0_101, %c0_102, %c0_103] : memref<2x1x64xf32, #tpu.memory_space<vmem>>, vector<1x1x64xf32>
    %145 = vector.shape_cast %144 : vector<1x1x64xf32> to vector<1x64xf32>
    %cst_104 = arith.constant dense<0.000000e+00> : vector<8xf32>
    %146 = vector.multi_reduction <add>, %1, %cst_104 [1] : vector<8x64xf32> to vector<8xf32>
    %147 = vector.shape_cast %146 : vector<8xf32> to vector<8x1xf32>
    %cst_105 = arith.constant 6.400000e+01 : f32
    %148 = vector.broadcast %cst_105 : f32 to vector<8x1xf32>
    %149 = arith.divf %147, %148 : vector<8x1xf32>
    %150 = vector.broadcast %149 : vector<8x1xf32> to vector<8x64xf32>
    %151 = arith.subf %1, %150 : vector<8x64xf32>
    %152 = arith.mulf %151, %151 : vector<8x64xf32>
    %cst_106 = arith.constant dense<0.000000e+00> : vector<8xf32>
    %153 = vector.multi_reduction <add>, %152, %cst_106 [1] : vector<8x64xf32> to vector<8xf32>
    %154 = vector.shape_cast %153 : vector<8xf32> to vector<8x1xf32>
    %cst_107 = arith.constant 6.400000e+01 : f32
    %155 = vector.broadcast %cst_107 : f32 to vector<8x1xf32>
    %156 = arith.divf %154, %155 : vector<8x1xf32>
    %157 = vector.broadcast %149 : vector<8x1xf32> to vector<8x64xf32>
    %158 = arith.subf %1, %157 : vector<8x64xf32>
    %cst_108 = arith.constant 9.99999974E-6 : f32
    %159 = vector.broadcast %cst_108 : f32 to vector<8x1xf32>
    %160 = arith.addf %156, %159 : vector<8x1xf32>
    %161 = math.rsqrt %160 : vector<8x1xf32>
    %162 = vector.broadcast %161 : vector<8x1xf32> to vector<8x64xf32>
    %163 = arith.mulf %158, %162 : vector<8x64xf32>
    %164 = vector.broadcast %143 : vector<1x64xf32> to vector<8x64xf32>
    %165 = arith.mulf %163, %164 : vector<8x64xf32>
    %166 = vector.broadcast %145 : vector<1x64xf32> to vector<8x64xf32>
    %167 = arith.addf %165, %166 : vector<8x64xf32>
    %168 = arith.truncf %167 : vector<8x64xf32> to vector<8x64xbf16>
    %c0_109 = arith.constant 0 : index
    %c0_110 = arith.constant 0 : index
    %c0_111 = arith.constant 0 : index
    %169 = vector.load %arg18[%c0_109, %c0_110, %c0_111] : memref<2x64x256xbf16, #tpu.memory_space<vmem>>, vector<1x64x256xbf16>
    %170 = vector.shape_cast %169 : vector<1x64x256xbf16> to vector<64x256xbf16>
    %cst_112 = arith.constant dense<0.000000e+00> : vector<8x256xf32>
    %171 = tpu.matmul %168, %170, %cst_112 {dimension_numbers = #tpu.dot_dimension_numbers<[1], [0], [0], [1], [0, 0, 1, 1], [], []>} : vector<8x64xbf16>, vector<64x256xbf16>, vector<8x256xf32> -> vector<8x256xf32>
    %c0_113 = arith.constant 0 : index
    %c0_114 = arith.constant 0 : index
    %c0_115 = arith.constant 0 : index
    %172 = vector.load %arg19[%c0_113, %c0_114, %c0_115] : memref<2x1x256xf32, #tpu.memory_space<vmem>>, vector<1x1x256xf32>
    %173 = vector.shape_cast %172 : vector<1x1x256xf32> to vector<1x256xf32>
    %174 = vector.broadcast %173 : vector<1x256xf32> to vector<8x256xf32>
    %175 = arith.addf %171, %174 : vector<8x256xf32>
    %176 = arith.mulf %175, %175 : vector<8x256xf32>
    %177 = arith.mulf %175, %176 : vector<8x256xf32>
    %cst_116 = arith.constant 4.471500e-02 : f32
    %178 = vector.broadcast %cst_116 : f32 to vector<8x256xf32>
    %179 = arith.mulf %178, %177 : vector<8x256xf32>
    %180 = arith.addf %175, %179 : vector<8x256xf32>
    %cst_117 = arith.constant 0.797884583 : f32
    %181 = vector.broadcast %cst_117 : f32 to vector<8x256xf32>
    %182 = arith.mulf %181, %180 : vector<8x256xf32>
    %183 = math.tanh %182 : vector<8x256xf32>
    %cst_118 = arith.constant 1.000000e+00 : f32
    %184 = vector.broadcast %cst_118 : f32 to vector<8x256xf32>
    %185 = arith.addf %184, %183 : vector<8x256xf32>
    %cst_119 = arith.constant 5.000000e-01 : f32
    %186 = vector.broadcast %cst_119 : f32 to vector<8x256xf32>
    %187 = arith.mulf %186, %185 : vector<8x256xf32>
    %188 = arith.mulf %175, %187 : vector<8x256xf32>
    %189 = arith.truncf %188 : vector<8x256xf32> to vector<8x256xbf16>
    %c0_120 = arith.constant 0 : index
    %c0_121 = arith.constant 0 : index
    %c0_122 = arith.constant 0 : index
    %190 = vector.load %arg20[%c0_120, %c0_121, %c0_122] : memref<2x256x64xbf16, #tpu.memory_space<vmem>>, vector<1x256x64xbf16>
    %191 = vector.shape_cast %190 : vector<1x256x64xbf16> to vector<256x64xbf16>
    %cst_123 = arith.constant dense<0.000000e+00> : vector<8x64xf32>
    %192 = tpu.matmul %189, %191, %cst_123 {dimension_numbers = #tpu.dot_dimension_numbers<[1], [0], [0], [1], [0, 0, 1, 1], [], []>} : vector<8x256xbf16>, vector<256x64xbf16>, vector<8x64xf32> -> vector<8x64xf32>
    %c0_124 = arith.constant 0 : index
    %c0_125 = arith.constant 0 : index
    %c0_126 = arith.constant 0 : index
    %193 = vector.load %arg21[%c0_124, %c0_125, %c0_126] : memref<2x1x64xf32, #tpu.memory_space<vmem>>, vector<1x1x64xf32>
    %194 = vector.shape_cast %193 : vector<1x1x64xf32> to vector<1x64xf32>
    %195 = vector.broadcast %194 : vector<1x64xf32> to vector<8x64xf32>
    %196 = arith.addf %192, %195 : vector<8x64xf32>
    %197 = arith.addf %1, %141 : vector<8x64xf32>
    %198 = arith.addf %197, %196 : vector<8x64xf32>
    %c1_127 = arith.constant 1 : index
    %c0_128 = arith.constant 0 : index
    %c0_129 = arith.constant 0 : index
    %199 = vector.load %arg6[%c1_127, %c0_128, %c0_129] : memref<2x1x64xf32, #tpu.memory_space<vmem>>, vector<1x1x64xf32>
    %200 = vector.shape_cast %199 : vector<1x1x64xf32> to vector<1x64xf32>
    %c1_130 = arith.constant 1 : index
    %c0_131 = arith.constant 0 : index
    %c0_132 = arith.constant 0 : index
    %201 = vector.load %arg7[%c1_130, %c0_131, %c0_132] : memref<2x1x64xf32, #tpu.memory_space<vmem>>, vector<1x1x64xf32>
    %202 = vector.shape_cast %201 : vector<1x1x64xf32> to vector<1x64xf32>
    %cst_133 = arith.constant dense<0.000000e+00> : vector<8xf32>
    %203 = vector.multi_reduction <add>, %198, %cst_133 [1] : vector<8x64xf32> to vector<8xf32>
    %204 = vector.shape_cast %203 : vector<8xf32> to vector<8x1xf32>
    %cst_134 = arith.constant 6.400000e+01 : f32
    %205 = vector.broadcast %cst_134 : f32 to vector<8x1xf32>
    %206 = arith.divf %204, %205 : vector<8x1xf32>
    %207 = vector.broadcast %206 : vector<8x1xf32> to vector<8x64xf32>
    %208 = arith.subf %198, %207 : vector<8x64xf32>
    %209 = arith.mulf %208, %208 : vector<8x64xf32>
    %cst_135 = arith.constant dense<0.000000e+00> : vector<8xf32>
    %210 = vector.multi_reduction <add>, %209, %cst_135 [1] : vector<8x64xf32> to vector<8xf32>
    %211 = vector.shape_cast %210 : vector<8xf32> to vector<8x1xf32>
    %cst_136 = arith.constant 6.400000e+01 : f32
    %212 = vector.broadcast %cst_136 : f32 to vector<8x1xf32>
    %213 = arith.divf %211, %212 : vector<8x1xf32>
    %214 = vector.broadcast %206 : vector<8x1xf32> to vector<8x64xf32>
    %215 = arith.subf %198, %214 : vector<8x64xf32>
    %cst_137 = arith.constant 9.99999974E-6 : f32
    %216 = vector.broadcast %cst_137 : f32 to vector<8x1xf32>
    %217 = arith.addf %213, %216 : vector<8x1xf32>
    %218 = math.rsqrt %217 : vector<8x1xf32>
    %219 = vector.broadcast %218 : vector<8x1xf32> to vector<8x64xf32>
    %220 = arith.mulf %215, %219 : vector<8x64xf32>
    %221 = vector.broadcast %200 : vector<1x64xf32> to vector<8x64xf32>
    %222 = arith.mulf %220, %221 : vector<8x64xf32>
    %223 = vector.broadcast %202 : vector<1x64xf32> to vector<8x64xf32>
    %224 = arith.addf %222, %223 : vector<8x64xf32>
    %225 = arith.truncf %224 : vector<8x64xf32> to vector<8x64xbf16>
    %c1_138 = arith.constant 1 : index
    %c0_139 = arith.constant 0 : index
    %c0_140 = arith.constant 0 : index
    %226 = vector.load %arg17[%c1_138, %c0_139, %c0_140] : memref<2x1x64xf32, #tpu.memory_space<vmem>>, vector<1x1x64xf32>
    %227 = vector.shape_cast %226 : vector<1x1x64xf32> to vector<1x64xf32>
    %c1_141 = arith.constant 1 : index
    %c0_142 = arith.constant 0 : index
    %c0_143 = arith.constant 0 : index
    %c0_144 = arith.constant 0 : index
    %228 = vector.load %arg10[%c1_141, %c0_142, %c0_143, %c0_144] : memref<2x2x64x32xbf16, #tpu.memory_space<vmem>>, vector<1x1x64x32xbf16>
    %229 = vector.shape_cast %228 : vector<1x1x64x32xbf16> to vector<64x32xbf16>
    %cst_145 = arith.constant dense<0.000000e+00> : vector<8x32xf32>
    %230 = tpu.matmul %225, %229, %cst_145 {dimension_numbers = #tpu.dot_dimension_numbers<[1], [0], [0], [1], [0, 0, 1, 1], [], []>} : vector<8x64xbf16>, vector<64x32xbf16>, vector<8x32xf32> -> vector<8x32xf32>
    %c1_146 = arith.constant 1 : index
    %c0_147 = arith.constant 0 : index
    %c0_148 = arith.constant 0 : index
    %c0_149 = arith.constant 0 : index
    %231 = vector.load %arg11[%c1_146, %c0_147, %c0_148, %c0_149] : memref<2x2x1x32xf32, #tpu.memory_space<vmem>>, vector<1x1x1x32xf32>
    %232 = vector.shape_cast %231 : vector<1x1x1x32xf32> to vector<1x32xf32>
    %233 = vector.broadcast %232 : vector<1x32xf32> to vector<8x32xf32>
    %234 = arith.addf %230, %233 : vector<8x32xf32>
    %c1_150 = arith.constant 1 : index
    %c0_151 = arith.constant 0 : index
    %c0_152 = arith.constant 0 : index
    %c0_153 = arith.constant 0 : index
    %235 = vector.load %arg12[%c1_150, %c0_151, %c0_152, %c0_153] : memref<2x2x64x32xbf16, #tpu.memory_space<vmem>>, vector<1x1x64x32xbf16>
    %236 = vector.shape_cast %235 : vector<1x1x64x32xbf16> to vector<64x32xbf16>
    %cst_154 = arith.constant dense<0.000000e+00> : vector<8x32xf32>
    %237 = tpu.matmul %225, %236, %cst_154 {dimension_numbers = #tpu.dot_dimension_numbers<[1], [0], [0], [1], [0, 0, 1, 1], [], []>} : vector<8x64xbf16>, vector<64x32xbf16>, vector<8x32xf32> -> vector<8x32xf32>
    %c1_155 = arith.constant 1 : index
    %c0_156 = arith.constant 0 : index
    %c0_157 = arith.constant 0 : index
    %c0_158 = arith.constant 0 : index
    %238 = vector.load %arg13[%c1_155, %c0_156, %c0_157, %c0_158] : memref<2x2x1x32xf32, #tpu.memory_space<vmem>>, vector<1x1x1x32xf32>
    %239 = vector.shape_cast %238 : vector<1x1x1x32xf32> to vector<1x32xf32>
    %240 = vector.broadcast %239 : vector<1x32xf32> to vector<8x32xf32>
    %241 = arith.addf %237, %240 : vector<8x32xf32>
    %c1_159 = arith.constant 1 : index
    %c0_160 = arith.constant 0 : index
    %c0_161 = arith.constant 0 : index
    %c0_162 = arith.constant 0 : index
    %242 = vector.load %arg14[%c1_159, %c0_160, %c0_161, %c0_162] : memref<2x2x64x32xbf16, #tpu.memory_space<vmem>>, vector<1x1x64x32xbf16>
    %243 = vector.shape_cast %242 : vector<1x1x64x32xbf16> to vector<64x32xbf16>
    %cst_163 = arith.constant dense<0.000000e+00> : vector<8x32xf32>
    %244 = tpu.matmul %225, %243, %cst_163 {dimension_numbers = #tpu.dot_dimension_numbers<[1], [0], [0], [1], [0, 0, 1, 1], [], []>} : vector<8x64xbf16>, vector<64x32xbf16>, vector<8x32xf32> -> vector<8x32xf32>
    %c1_164 = arith.constant 1 : index
    %c0_165 = arith.constant 0 : index
    %c0_166 = arith.constant 0 : index
    %c0_167 = arith.constant 0 : index
    %245 = vector.load %arg15[%c1_164, %c0_165, %c0_166, %c0_167] : memref<2x2x1x32xf32, #tpu.memory_space<vmem>>, vector<1x1x1x32xf32>
    %246 = vector.shape_cast %245 : vector<1x1x1x32xf32> to vector<1x32xf32>
    %247 = vector.broadcast %246 : vector<1x32xf32> to vector<8x32xf32>
    %248 = arith.addf %244, %247 : vector<8x32xf32>
    %249 = arith.mulf %234, %2 : vector<8x32xf32>
    %250 = arith.truncf %234 : vector<8x32xf32> to vector<8x32xbf16>
    %cst_168 = arith.constant dense<0.000000e+00> : vector<8x32xf32>
    %251 = tpu.matmul %250, %4, %cst_168 {dimension_numbers = #tpu.dot_dimension_numbers<[1], [0], [0], [1], [0, 0, 1, 1], [], []>} : vector<8x32xbf16>, vector<32x32xbf16>, vector<8x32xf32> -> vector<8x32xf32>
    %252 = arith.mulf %251, %3 : vector<8x32xf32>
    %253 = arith.addf %249, %252 : vector<8x32xf32>
    %254 = arith.mulf %241, %2 : vector<8x32xf32>
    %255 = arith.truncf %241 : vector<8x32xf32> to vector<8x32xbf16>
    %cst_169 = arith.constant dense<0.000000e+00> : vector<8x32xf32>
    %256 = tpu.matmul %255, %4, %cst_169 {dimension_numbers = #tpu.dot_dimension_numbers<[1], [0], [0], [1], [0, 0, 1, 1], [], []>} : vector<8x32xbf16>, vector<32x32xbf16>, vector<8x32xf32> -> vector<8x32xf32>
    %257 = arith.mulf %256, %3 : vector<8x32xf32>
    %258 = arith.addf %254, %257 : vector<8x32xf32>
    %259 = arith.truncf %253 : vector<8x32xf32> to vector<8x32xbf16>
    %260 = arith.truncf %258 : vector<8x32xf32> to vector<8x32xbf16>
    %cst_170 = arith.constant dense<0.000000e+00> : vector<8x8xf32>
    %261 = tpu.matmul %259, %260, %cst_170 {dimension_numbers = #tpu.dot_dimension_numbers<[1], [1], [0], [0], [0, 0, 1, 0], [], []>} : vector<8x32xbf16>, vector<8x32xbf16>, vector<8x8xf32> -> vector<8x8xf32>
    %262 = arith.addf %261, %5 : vector<8x8xf32>
    %cst_171 = arith.constant dense<0xFF800000> : vector<8xf32>
    %263 = vector.multi_reduction <maximumf>, %262, %cst_171 [1] : vector<8x8xf32> to vector<8xf32>
    %264 = vector.shape_cast %263 : vector<8xf32> to vector<8x1xf32>
    %265 = vector.broadcast %264 : vector<8x1xf32> to vector<8x8xf32>
    %266 = arith.subf %262, %265 : vector<8x8xf32>
    %267 = math.exp %266 : vector<8x8xf32>
    %cst_172 = arith.constant dense<0.000000e+00> : vector<8xf32>
    %268 = vector.multi_reduction <add>, %267, %cst_172 [1] : vector<8x8xf32> to vector<8xf32>
    %269 = vector.shape_cast %268 : vector<8xf32> to vector<8x1xf32>
    %270 = tpu.reciprocal %269 {approx = true} : vector<8x1xf32> -> vector<8x1xf32>
    %271 = vector.broadcast %270 : vector<8x1xf32> to vector<8x8xf32>
    %272 = arith.mulf %267, %271 : vector<8x8xf32>
    %273 = arith.truncf %272 : vector<8x8xf32> to vector<8x8xbf16>
    %274 = arith.truncf %248 : vector<8x32xf32> to vector<8x32xbf16>
    %cst_173 = arith.constant dense<0.000000e+00> : vector<8x32xf32>
    %275 = tpu.matmul %273, %274, %cst_173 {dimension_numbers = #tpu.dot_dimension_numbers<[1], [0], [0], [1], [0, 0, 1, 1], [], []>} : vector<8x8xbf16>, vector<8x32xbf16>, vector<8x32xf32> -> vector<8x32xf32>
    %276 = arith.truncf %275 : vector<8x32xf32> to vector<8x32xbf16>
    %c1_174 = arith.constant 1 : index
    %c0_175 = arith.constant 0 : index
    %c0_176 = arith.constant 0 : index
    %c0_177 = arith.constant 0 : index
    %277 = vector.load %arg16[%c1_174, %c0_175, %c0_176, %c0_177] : memref<2x2x32x64xbf16, #tpu.memory_space<vmem>>, vector<1x1x32x64xbf16>
    %278 = vector.shape_cast %277 : vector<1x1x32x64xbf16> to vector<32x64xbf16>
    %cst_178 = arith.constant dense<0.000000e+00> : vector<8x64xf32>
    %279 = tpu.matmul %276, %278, %cst_178 {dimension_numbers = #tpu.dot_dimension_numbers<[1], [0], [0], [1], [0, 0, 1, 1], [], []>} : vector<8x32xbf16>, vector<32x64xbf16>, vector<8x64xf32> -> vector<8x64xf32>
    %280 = vector.broadcast %227 : vector<1x64xf32> to vector<8x64xf32>
    %281 = arith.addf %280, %279 : vector<8x64xf32>
    %c1_179 = arith.constant 1 : index
    %c1_180 = arith.constant 1 : index
    %c0_181 = arith.constant 0 : index
    %c0_182 = arith.constant 0 : index
    %282 = vector.load %arg10[%c1_179, %c1_180, %c0_181, %c0_182] : memref<2x2x64x32xbf16, #tpu.memory_space<vmem>>, vector<1x1x64x32xbf16>
    %283 = vector.shape_cast %282 : vector<1x1x64x32xbf16> to vector<64x32xbf16>
    %cst_183 = arith.constant dense<0.000000e+00> : vector<8x32xf32>
    %284 = tpu.matmul %225, %283, %cst_183 {dimension_numbers = #tpu.dot_dimension_numbers<[1], [0], [0], [1], [0, 0, 1, 1], [], []>} : vector<8x64xbf16>, vector<64x32xbf16>, vector<8x32xf32> -> vector<8x32xf32>
    %c1_184 = arith.constant 1 : index
    %c1_185 = arith.constant 1 : index
    %c0_186 = arith.constant 0 : index
    %c0_187 = arith.constant 0 : index
    %285 = vector.load %arg11[%c1_184, %c1_185, %c0_186, %c0_187] : memref<2x2x1x32xf32, #tpu.memory_space<vmem>>, vector<1x1x1x32xf32>
    %286 = vector.shape_cast %285 : vector<1x1x1x32xf32> to vector<1x32xf32>
    %287 = vector.broadcast %286 : vector<1x32xf32> to vector<8x32xf32>
    %288 = arith.addf %284, %287 : vector<8x32xf32>
    %c1_188 = arith.constant 1 : index
    %c1_189 = arith.constant 1 : index
    %c0_190 = arith.constant 0 : index
    %c0_191 = arith.constant 0 : index
    %289 = vector.load %arg12[%c1_188, %c1_189, %c0_190, %c0_191] : memref<2x2x64x32xbf16, #tpu.memory_space<vmem>>, vector<1x1x64x32xbf16>
    %290 = vector.shape_cast %289 : vector<1x1x64x32xbf16> to vector<64x32xbf16>
    %cst_192 = arith.constant dense<0.000000e+00> : vector<8x32xf32>
    %291 = tpu.matmul %225, %290, %cst_192 {dimension_numbers = #tpu.dot_dimension_numbers<[1], [0], [0], [1], [0, 0, 1, 1], [], []>} : vector<8x64xbf16>, vector<64x32xbf16>, vector<8x32xf32> -> vector<8x32xf32>
    %c1_193 = arith.constant 1 : index
    %c1_194 = arith.constant 1 : index
    %c0_195 = arith.constant 0 : index
    %c0_196 = arith.constant 0 : index
    %292 = vector.load %arg13[%c1_193, %c1_194, %c0_195, %c0_196] : memref<2x2x1x32xf32, #tpu.memory_space<vmem>>, vector<1x1x1x32xf32>
    %293 = vector.shape_cast %292 : vector<1x1x1x32xf32> to vector<1x32xf32>
    %294 = vector.broadcast %293 : vector<1x32xf32> to vector<8x32xf32>
    %295 = arith.addf %291, %294 : vector<8x32xf32>
    %c1_197 = arith.constant 1 : index
    %c1_198 = arith.constant 1 : index
    %c0_199 = arith.constant 0 : index
    %c0_200 = arith.constant 0 : index
    %296 = vector.load %arg14[%c1_197, %c1_198, %c0_199, %c0_200] : memref<2x2x64x32xbf16, #tpu.memory_space<vmem>>, vector<1x1x64x32xbf16>
    %297 = vector.shape_cast %296 : vector<1x1x64x32xbf16> to vector<64x32xbf16>
    %cst_201 = arith.constant dense<0.000000e+00> : vector<8x32xf32>
    %298 = tpu.matmul %225, %297, %cst_201 {dimension_numbers = #tpu.dot_dimension_numbers<[1], [0], [0], [1], [0, 0, 1, 1], [], []>} : vector<8x64xbf16>, vector<64x32xbf16>, vector<8x32xf32> -> vector<8x32xf32>
    %c1_202 = arith.constant 1 : index
    %c1_203 = arith.constant 1 : index
    %c0_204 = arith.constant 0 : index
    %c0_205 = arith.constant 0 : index
    %299 = vector.load %arg15[%c1_202, %c1_203, %c0_204, %c0_205] : memref<2x2x1x32xf32, #tpu.memory_space<vmem>>, vector<1x1x1x32xf32>
    %300 = vector.shape_cast %299 : vector<1x1x1x32xf32> to vector<1x32xf32>
    %301 = vector.broadcast %300 : vector<1x32xf32> to vector<8x32xf32>
    %302 = arith.addf %298, %301 : vector<8x32xf32>
    %303 = arith.mulf %288, %2 : vector<8x32xf32>
    %304 = arith.truncf %288 : vector<8x32xf32> to vector<8x32xbf16>
    %cst_206 = arith.constant dense<0.000000e+00> : vector<8x32xf32>
    %305 = tpu.matmul %304, %4, %cst_206 {dimension_numbers = #tpu.dot_dimension_numbers<[1], [0], [0], [1], [0, 0, 1, 1], [], []>} : vector<8x32xbf16>, vector<32x32xbf16>, vector<8x32xf32> -> vector<8x32xf32>
    %306 = arith.mulf %305, %3 : vector<8x32xf32>
    %307 = arith.addf %303, %306 : vector<8x32xf32>
    %308 = arith.mulf %295, %2 : vector<8x32xf32>
    %309 = arith.truncf %295 : vector<8x32xf32> to vector<8x32xbf16>
    %cst_207 = arith.constant dense<0.000000e+00> : vector<8x32xf32>
    %310 = tpu.matmul %309, %4, %cst_207 {dimension_numbers = #tpu.dot_dimension_numbers<[1], [0], [0], [1], [0, 0, 1, 1], [], []>} : vector<8x32xbf16>, vector<32x32xbf16>, vector<8x32xf32> -> vector<8x32xf32>
    %311 = arith.mulf %310, %3 : vector<8x32xf32>
    %312 = arith.addf %308, %311 : vector<8x32xf32>
    %313 = arith.truncf %307 : vector<8x32xf32> to vector<8x32xbf16>
    %314 = arith.truncf %312 : vector<8x32xf32> to vector<8x32xbf16>
    %cst_208 = arith.constant dense<0.000000e+00> : vector<8x8xf32>
    %315 = tpu.matmul %313, %314, %cst_208 {dimension_numbers = #tpu.dot_dimension_numbers<[1], [1], [0], [0], [0, 0, 1, 0], [], []>} : vector<8x32xbf16>, vector<8x32xbf16>, vector<8x8xf32> -> vector<8x8xf32>
    %316 = arith.addf %315, %5 : vector<8x8xf32>
    %cst_209 = arith.constant dense<0xFF800000> : vector<8xf32>
    %317 = vector.multi_reduction <maximumf>, %316, %cst_209 [1] : vector<8x8xf32> to vector<8xf32>
    %318 = vector.shape_cast %317 : vector<8xf32> to vector<8x1xf32>
    %319 = vector.broadcast %318 : vector<8x1xf32> to vector<8x8xf32>
    %320 = arith.subf %316, %319 : vector<8x8xf32>
    %321 = math.exp %320 : vector<8x8xf32>
    %cst_210 = arith.constant dense<0.000000e+00> : vector<8xf32>
    %322 = vector.multi_reduction <add>, %321, %cst_210 [1] : vector<8x8xf32> to vector<8xf32>
    %323 = vector.shape_cast %322 : vector<8xf32> to vector<8x1xf32>
    %324 = tpu.reciprocal %323 {approx = true} : vector<8x1xf32> -> vector<8x1xf32>
    %325 = vector.broadcast %324 : vector<8x1xf32> to vector<8x8xf32>
    %326 = arith.mulf %321, %325 : vector<8x8xf32>
    %327 = arith.truncf %326 : vector<8x8xf32> to vector<8x8xbf16>
    %328 = arith.truncf %302 : vector<8x32xf32> to vector<8x32xbf16>
    %cst_211 = arith.constant dense<0.000000e+00> : vector<8x32xf32>
    %329 = tpu.matmul %327, %328, %cst_211 {dimension_numbers = #tpu.dot_dimension_numbers<[1], [0], [0], [1], [0, 0, 1, 1], [], []>} : vector<8x8xbf16>, vector<8x32xbf16>, vector<8x32xf32> -> vector<8x32xf32>
    %330 = arith.truncf %329 : vector<8x32xf32> to vector<8x32xbf16>
    %c1_212 = arith.constant 1 : index
    %c1_213 = arith.constant 1 : index
    %c0_214 = arith.constant 0 : index
    %c0_215 = arith.constant 0 : index
    %331 = vector.load %arg16[%c1_212, %c1_213, %c0_214, %c0_215] : memref<2x2x32x64xbf16, #tpu.memory_space<vmem>>, vector<1x1x32x64xbf16>
    %332 = vector.shape_cast %331 : vector<1x1x32x64xbf16> to vector<32x64xbf16>
    %cst_216 = arith.constant dense<0.000000e+00> : vector<8x64xf32>
    %333 = tpu.matmul %330, %332, %cst_216 {dimension_numbers = #tpu.dot_dimension_numbers<[1], [0], [0], [1], [0, 0, 1, 1], [], []>} : vector<8x32xbf16>, vector<32x64xbf16>, vector<8x64xf32> -> vector<8x64xf32>
    %334 = arith.addf %281, %333 : vector<8x64xf32>
    %c1_217 = arith.constant 1 : index
    %c0_218 = arith.constant 0 : index
    %c0_219 = arith.constant 0 : index
    %335 = vector.load %arg8[%c1_217, %c0_218, %c0_219] : memref<2x1x64xf32, #tpu.memory_space<vmem>>, vector<1x1x64xf32>
    %336 = vector.shape_cast %335 : vector<1x1x64xf32> to vector<1x64xf32>
    %c1_220 = arith.constant 1 : index
    %c0_221 = arith.constant 0 : index
    %c0_222 = arith.constant 0 : index
    %337 = vector.load %arg9[%c1_220, %c0_221, %c0_222] : memref<2x1x64xf32, #tpu.memory_space<vmem>>, vector<1x1x64xf32>
    %338 = vector.shape_cast %337 : vector<1x1x64xf32> to vector<1x64xf32>
    %cst_223 = arith.constant dense<0.000000e+00> : vector<8xf32>
    %339 = vector.multi_reduction <add>, %198, %cst_223 [1] : vector<8x64xf32> to vector<8xf32>
    %340 = vector.shape_cast %339 : vector<8xf32> to vector<8x1xf32>
    %cst_224 = arith.constant 6.400000e+01 : f32
    %341 = vector.broadcast %cst_224 : f32 to vector<8x1xf32>
    %342 = arith.divf %340, %341 : vector<8x1xf32>
    %343 = vector.broadcast %342 : vector<8x1xf32> to vector<8x64xf32>
    %344 = arith.subf %198, %343 : vector<8x64xf32>
    %345 = arith.mulf %344, %344 : vector<8x64xf32>
    %cst_225 = arith.constant dense<0.000000e+00> : vector<8xf32>
    %346 = vector.multi_reduction <add>, %345, %cst_225 [1] : vector<8x64xf32> to vector<8xf32>
    %347 = vector.shape_cast %346 : vector<8xf32> to vector<8x1xf32>
    %cst_226 = arith.constant 6.400000e+01 : f32
    %348 = vector.broadcast %cst_226 : f32 to vector<8x1xf32>
    %349 = arith.divf %347, %348 : vector<8x1xf32>
    %350 = vector.broadcast %342 : vector<8x1xf32> to vector<8x64xf32>
    %351 = arith.subf %198, %350 : vector<8x64xf32>
    %cst_227 = arith.constant 9.99999974E-6 : f32
    %352 = vector.broadcast %cst_227 : f32 to vector<8x1xf32>
    %353 = arith.addf %349, %352 : vector<8x1xf32>
    %354 = math.rsqrt %353 : vector<8x1xf32>
    %355 = vector.broadcast %354 : vector<8x1xf32> to vector<8x64xf32>
    %356 = arith.mulf %351, %355 : vector<8x64xf32>
    %357 = vector.broadcast %336 : vector<1x64xf32> to vector<8x64xf32>
    %358 = arith.mulf %356, %357 : vector<8x64xf32>
    %359 = vector.broadcast %338 : vector<1x64xf32> to vector<8x64xf32>
    %360 = arith.addf %358, %359 : vector<8x64xf32>
    %361 = arith.truncf %360 : vector<8x64xf32> to vector<8x64xbf16>
    %c1_228 = arith.constant 1 : index
    %c0_229 = arith.constant 0 : index
    %c0_230 = arith.constant 0 : index
    %362 = vector.load %arg18[%c1_228, %c0_229, %c0_230] : memref<2x64x256xbf16, #tpu.memory_space<vmem>>, vector<1x64x256xbf16>
    %363 = vector.shape_cast %362 : vector<1x64x256xbf16> to vector<64x256xbf16>
    %cst_231 = arith.constant dense<0.000000e+00> : vector<8x256xf32>
    %364 = tpu.matmul %361, %363, %cst_231 {dimension_numbers = #tpu.dot_dimension_numbers<[1], [0], [0], [1], [0, 0, 1, 1], [], []>} : vector<8x64xbf16>, vector<64x256xbf16>, vector<8x256xf32> -> vector<8x256xf32>
    %c1_232 = arith.constant 1 : index
    %c0_233 = arith.constant 0 : index
    %c0_234 = arith.constant 0 : index
    %365 = vector.load %arg19[%c1_232, %c0_233, %c0_234] : memref<2x1x256xf32, #tpu.memory_space<vmem>>, vector<1x1x256xf32>
    %366 = vector.shape_cast %365 : vector<1x1x256xf32> to vector<1x256xf32>
    %367 = vector.broadcast %366 : vector<1x256xf32> to vector<8x256xf32>
    %368 = arith.addf %364, %367 : vector<8x256xf32>
    %369 = arith.mulf %368, %368 : vector<8x256xf32>
    %370 = arith.mulf %368, %369 : vector<8x256xf32>
    %cst_235 = arith.constant 4.471500e-02 : f32
    %371 = vector.broadcast %cst_235 : f32 to vector<8x256xf32>
    %372 = arith.mulf %371, %370 : vector<8x256xf32>
    %373 = arith.addf %368, %372 : vector<8x256xf32>
    %cst_236 = arith.constant 0.797884583 : f32
    %374 = vector.broadcast %cst_236 : f32 to vector<8x256xf32>
    %375 = arith.mulf %374, %373 : vector<8x256xf32>
    %376 = math.tanh %375 : vector<8x256xf32>
    %cst_237 = arith.constant 1.000000e+00 : f32
    %377 = vector.broadcast %cst_237 : f32 to vector<8x256xf32>
    %378 = arith.addf %377, %376 : vector<8x256xf32>
    %cst_238 = arith.constant 5.000000e-01 : f32
    %379 = vector.broadcast %cst_238 : f32 to vector<8x256xf32>
    %380 = arith.mulf %379, %378 : vector<8x256xf32>
    %381 = arith.mulf %368, %380 : vector<8x256xf32>
    %382 = arith.truncf %381 : vector<8x256xf32> to vector<8x256xbf16>
    %c1_239 = arith.constant 1 : index
    %c0_240 = arith.constant 0 : index
    %c0_241 = arith.constant 0 : index
    %383 = vector.load %arg20[%c1_239, %c0_240, %c0_241] : memref<2x256x64xbf16, #tpu.memory_space<vmem>>, vector<1x256x64xbf16>
    %384 = vector.shape_cast %383 : vector<1x256x64xbf16> to vector<256x64xbf16>
    %cst_242 = arith.constant dense<0.000000e+00> : vector<8x64xf32>
    %385 = tpu.matmul %382, %384, %cst_242 {dimension_numbers = #tpu.dot_dimension_numbers<[1], [0], [0], [1], [0, 0, 1, 1], [], []>} : vector<8x256xbf16>, vector<256x64xbf16>, vector<8x64xf32> -> vector<8x64xf32>
    %c1_243 = arith.constant 1 : index
    %c0_244 = arith.constant 0 : index
    %c0_245 = arith.constant 0 : index
    %386 = vector.load %arg21[%c1_243, %c0_244, %c0_245] : memref<2x1x64xf32, #tpu.memory_space<vmem>>, vector<1x1x64xf32>
    %387 = vector.shape_cast %386 : vector<1x1x64xf32> to vector<1x64xf32>
    %388 = vector.broadcast %387 : vector<1x64xf32> to vector<8x64xf32>
    %389 = arith.addf %385, %388 : vector<8x64xf32>
    %390 = arith.addf %198, %334 : vector<8x64xf32>
    %391 = arith.addf %390, %389 : vector<8x64xf32>
    %c0_246 = arith.constant 0 : index
    %c0_247 = arith.constant 0 : index
    %392 = vector.load %arg22[%c0_246, %c0_247] : memref<1x64xf32, #tpu.memory_space<vmem>>, vector<1x64xf32>
    %c0_248 = arith.constant 0 : index
    %c0_249 = arith.constant 0 : index
    %393 = vector.load %arg23[%c0_248, %c0_249] : memref<1x64xf32, #tpu.memory_space<vmem>>, vector<1x64xf32>
    %cst_250 = arith.constant dense<0.000000e+00> : vector<8xf32>
    %394 = vector.multi_reduction <add>, %391, %cst_250 [1] : vector<8x64xf32> to vector<8xf32>
    %395 = vector.shape_cast %394 : vector<8xf32> to vector<8x1xf32>
    %cst_251 = arith.constant 6.400000e+01 : f32
    %396 = vector.broadcast %cst_251 : f32 to vector<8x1xf32>
    %397 = arith.divf %395, %396 : vector<8x1xf32>
    %398 = vector.broadcast %397 : vector<8x1xf32> to vector<8x64xf32>
    %399 = arith.subf %391, %398 : vector<8x64xf32>
    %400 = arith.mulf %399, %399 : vector<8x64xf32>
    %cst_252 = arith.constant dense<0.000000e+00> : vector<8xf32>
    %401 = vector.multi_reduction <add>, %400, %cst_252 [1] : vector<8x64xf32> to vector<8xf32>
    %402 = vector.shape_cast %401 : vector<8xf32> to vector<8x1xf32>
    %cst_253 = arith.constant 6.400000e+01 : f32
    %403 = vector.broadcast %cst_253 : f32 to vector<8x1xf32>
    %404 = arith.divf %402, %403 : vector<8x1xf32>
    %405 = vector.broadcast %397 : vector<8x1xf32> to vector<8x64xf32>
    %406 = arith.subf %391, %405 : vector<8x64xf32>
    %cst_254 = arith.constant 9.99999974E-6 : f32
    %407 = vector.broadcast %cst_254 : f32 to vector<8x1xf32>
    %408 = arith.addf %404, %407 : vector<8x1xf32>
    %409 = math.rsqrt %408 : vector<8x1xf32>
    %410 = vector.broadcast %409 : vector<8x1xf32> to vector<8x64xf32>
    %411 = arith.mulf %406, %410 : vector<8x64xf32>
    %412 = vector.broadcast %392 : vector<1x64xf32> to vector<8x64xf32>
    %413 = arith.mulf %411, %412 : vector<8x64xf32>
    %414 = vector.broadcast %393 : vector<1x64xf32> to vector<8x64xf32>
    %415 = arith.addf %413, %414 : vector<8x64xf32>
    %cst_255 = arith.constant dense<0.000000e+00> : vector<64xf32>
    %416 = vector.multi_reduction <add>, %415, %cst_255 [0] : vector<8x64xf32> to vector<64xf32>
    %417 = vector.shape_cast %416 : vector<64xf32> to vector<1x64xf32>
    %cst_256 = arith.constant 8.000000e+00 : f32
    %418 = vector.broadcast %cst_256 : f32 to vector<1x64xf32>
    %419 = arith.divf %417, %418 : vector<1x64xf32>
    %420 = arith.truncf %419 : vector<1x64xf32> to vector<1x64xbf16>
    %c0_257 = arith.constant 0 : index
    %c0_258 = arith.constant 0 : index
    %421 = vector.load %arg24[%c0_257, %c0_258] : memref<64x128xbf16, #tpu.memory_space<vmem>>, vector<64x128xbf16>
    %cst_259 = arith.constant dense<0.000000e+00> : vector<1x128xf32>
    %422 = tpu.matmul %420, %421, %cst_259 {dimension_numbers = #tpu.dot_dimension_numbers<[1], [0], [0], [1], [0, 0, 1, 1], [], []>} : vector<1x64xbf16>, vector<64x128xbf16>, vector<1x128xf32> -> vector<1x128xf32>
    %423 = vector.shape_cast %422 : vector<1x128xf32> to vector<1x128xf32>
    %424 = vector.broadcast %423 : vector<1x128xf32> to vector<8x128xf32>
    %c0_260 = arith.constant 0 : index
    %c0_261 = arith.constant 0 : index
    %c0_262 = arith.constant 0 : index
    %425 = vector.load %arg25[%c0_260, %c0_261, %c0_262] : memref<1x8x128xf32, #tpu.memory_space<vmem>>, vector<1x8x128xf32>
    %426 = vector.shape_cast %425 : vector<1x8x128xf32> to vector<8x128xf32>
    %427 = vector.shape_cast %424 : vector<8x128xf32> to vector<1x8x128xf32>
    tpu.vector_store %arg25[%c0_260, %c0_261, %c0_262], %427 {strides = array<i32>} : memref<1x8x128xf32, #tpu.memory_space<vmem>>, vector<1x8x128xf32>,
    return
  }
  func.func @transform_0(%arg0: i32) -> (i32, i32, i32) {
    %c0_i32 = arith.constant 0 : i32
    %c0_i32_0 = arith.constant 0 : i32
    %c0_i32_1 = arith.constant 0 : i32
    return %arg0, %c0_i32, %c0_i32_0 : i32, i32, i32
  }
  func.func @transform_1(%arg0: i32) -> (i32, i32) {
    %c0_i32 = arith.constant 0 : i32
    %c0_i32_0 = arith.constant 0 : i32
    %c0_i32_1 = arith.constant 0 : i32
    return %c0_i32, %c0_i32_0 : i32, i32
  }
  func.func @transform_2(%arg0: i32) -> (i32, i32) {
    %c0_i32 = arith.constant 0 : i32
    %c0_i32_0 = arith.constant 0 : i32
    %c0_i32_1 = arith.constant 0 : i32
    return %c0_i32, %c0_i32_0 : i32, i32
  }
  func.func @transform_3(%arg0: i32) -> (i32, i32) {
    %c0_i32 = arith.constant 0 : i32
    %c0_i32_0 = arith.constant 0 : i32
    %c0_i32_1 = arith.constant 0 : i32
    return %c0_i32, %c0_i32_0 : i32, i32
  }
  func.func @transform_4(%arg0: i32) -> (i32, i32) {
    %c0_i32 = arith.constant 0 : i32
    %c0_i32_0 = arith.constant 0 : i32
    %c0_i32_1 = arith.constant 0 : i32
    return %c0_i32, %c0_i32_0 : i32, i32
  }
  func.func @transform_5(%arg0: i32) -> (i32, i32, i32) {
    %c0_i32 = arith.constant 0 : i32
    %c0_i32_0 = arith.constant 0 : i32
    %c0_i32_1 = arith.constant 0 : i32
    %c0_i32_2 = arith.constant 0 : i32
    return %c0_i32, %c0_i32_0, %c0_i32_1 : i32, i32, i32
  }
  func.func @transform_6(%arg0: i32) -> (i32, i32, i32) {
    %c0_i32 = arith.constant 0 : i32
    %c0_i32_0 = arith.constant 0 : i32
    %c0_i32_1 = arith.constant 0 : i32
    %c0_i32_2 = arith.constant 0 : i32
    return %c0_i32, %c0_i32_0, %c0_i32_1 : i32, i32, i32
  }
  func.func @transform_7(%arg0: i32) -> (i32, i32, i32) {
    %c0_i32 = arith.constant 0 : i32
    %c0_i32_0 = arith.constant 0 : i32
    %c0_i32_1 = arith.constant 0 : i32
    %c0_i32_2 = arith.constant 0 : i32
    return %c0_i32, %c0_i32_0, %c0_i32_1 : i32, i32, i32
  }
  func.func @transform_8(%arg0: i32) -> (i32, i32, i32) {
    %c0_i32 = arith.constant 0 : i32
    %c0_i32_0 = arith.constant 0 : i32
    %c0_i32_1 = arith.constant 0 : i32
    %c0_i32_2 = arith.constant 0 : i32
    return %c0_i32, %c0_i32_0, %c0_i32_1 : i32, i32, i32
  }
  func.func @transform_9(%arg0: i32) -> (i32, i32, i32, i32) {
    %c0_i32 = arith.constant 0 : i32
    %c0_i32_0 = arith.constant 0 : i32
    %c0_i32_1 = arith.constant 0 : i32
    %c0_i32_2 = arith.constant 0 : i32
    %c0_i32_3 = arith.constant 0 : i32
    return %c0_i32, %c0_i32_0, %c0_i32_1, %c0_i32_2 : i32, i32, i32, i32
  }
  func.func @transform_10(%arg0: i32) -> (i32, i32, i32, i32) {
    %c0_i32 = arith.constant 0 : i32
    %c0_i32_0 = arith.constant 0 : i32
    %c0_i32_1 = arith.constant 0 : i32
    %c0_i32_2 = arith.constant 0 : i32
    %c0_i32_3 = arith.constant 0 : i32
    return %c0_i32, %c0_i32_0, %c0_i32_1, %c0_i32_2 : i32, i32, i32, i32
  }
  func.func @transform_11(%arg0: i32) -> (i32, i32, i32, i32) {
    %c0_i32 = arith.constant 0 : i32
    %c0_i32_0 = arith.constant 0 : i32
    %c0_i32_1 = arith.constant 0 : i32
    %c0_i32_2 = arith.constant 0 : i32
    %c0_i32_3 = arith.constant 0 : i32
    return %c0_i32, %c0_i32_0, %c0_i32_1, %c0_i32_2 : i32, i32, i32, i32
  }
  func.func @transform_12(%arg0: i32) -> (i32, i32, i32, i32) {
    %c0_i32 = arith.constant 0 : i32
    %c0_i32_0 = arith.constant 0 : i32
    %c0_i32_1 = arith.constant 0 : i32
    %c0_i32_2 = arith.constant 0 : i32
    %c0_i32_3 = arith.constant 0 : i32
    return %c0_i32, %c0_i32_0, %c0_i32_1, %c0_i32_2 : i32, i32, i32, i32
  }
  func.func @transform_13(%arg0: i32) -> (i32, i32, i32, i32) {
    %c0_i32 = arith.constant 0 : i32
    %c0_i32_0 = arith.constant 0 : i32
    %c0_i32_1 = arith.constant 0 : i32
    %c0_i32_2 = arith.constant 0 : i32
    %c0_i32_3 = arith.constant 0 : i32
    return %c0_i32, %c0_i32_0, %c0_i32_1, %c0_i32_2 : i32, i32, i32, i32
  }
  func.func @transform_14(%arg0: i32) -> (i32, i32, i32, i32) {
    %c0_i32 = arith.constant 0 : i32
    %c0_i32_0 = arith.constant 0 : i32
    %c0_i32_1 = arith.constant 0 : i32
    %c0_i32_2 = arith.constant 0 : i32
    %c0_i32_3 = arith.constant 0 : i32
    return %c0_i32, %c0_i32_0, %c0_i32_1, %c0_i32_2 : i32, i32, i32, i32
  }
  func.func @transform_15(%arg0: i32) -> (i32, i32, i32, i32) {
    %c0_i32 = arith.constant 0 : i32
    %c0_i32_0 = arith.constant 0 : i32
    %c0_i32_1 = arith.constant 0 : i32
    %c0_i32_2 = arith.constant 0 : i32
    %c0_i32_3 = arith.constant 0 : i32
    return %c0_i32, %c0_i32_0, %c0_i32_1, %c0_i32_2 : i32, i32, i32, i32
  }
  func.func @transform_16(%arg0: i32) -> (i32, i32, i32) {
    %c0_i32 = arith.constant 0 : i32
    %c0_i32_0 = arith.constant 0 : i32
    %c0_i32_1 = arith.constant 0 : i32
    %c0_i32_2 = arith.constant 0 : i32
    return %c0_i32, %c0_i32_0, %c0_i32_1 : i32, i32, i32
  }
  func.func @transform_17(%arg0: i32) -> (i32, i32, i32) {
    %c0_i32 = arith.constant 0 : i32
    %c0_i32_0 = arith.constant 0 : i32
    %c0_i32_1 = arith.constant 0 : i32
    %c0_i32_2 = arith.constant 0 : i32
    return %c0_i32, %c0_i32_0, %c0_i32_1 : i32, i32, i32
  }
  func.func @transform_18(%arg0: i32) -> (i32, i32, i32) {
    %c0_i32 = arith.constant 0 : i32
    %c0_i32_0 = arith.constant 0 : i32
    %c0_i32_1 = arith.constant 0 : i32
    %c0_i32_2 = arith.constant 0 : i32
    return %c0_i32, %c0_i32_0, %c0_i32_1 : i32, i32, i32
  }
  func.func @transform_19(%arg0: i32) -> (i32, i32, i32) {
    %c0_i32 = arith.constant 0 : i32
    %c0_i32_0 = arith.constant 0 : i32
    %c0_i32_1 = arith.constant 0 : i32
    %c0_i32_2 = arith.constant 0 : i32
    return %c0_i32, %c0_i32_0, %c0_i32_1 : i32, i32, i32
  }
  func.func @transform_20(%arg0: i32) -> (i32, i32, i32) {
    %c0_i32 = arith.constant 0 : i32
    %c0_i32_0 = arith.constant 0 : i32
    %c0_i32_1 = arith.constant 0 : i32
    %c0_i32_2 = arith.constant 0 : i32
    return %c0_i32, %c0_i32_0, %c0_i32_1 : i32, i32, i32
  }
  func.func @transform_21(%arg0: i32) -> (i32, i32) {
    %c0_i32 = arith.constant 0 : i32
    %c0_i32_0 = arith.constant 0 : i32
    %c0_i32_1 = arith.constant 0 : i32
    return %c0_i32, %c0_i32_0 : i32, i32
  }
  func.func @transform_22(%arg0: i32) -> (i32, i32) {
    %c0_i32 = arith.constant 0 : i32
    %c0_i32_0 = arith.constant 0 : i32
    %c0_i32_1 = arith.constant 0 : i32
    return %c0_i32, %c0_i32_0 : i32, i32
  }
  func.func @transform_23(%arg0: i32) -> (i32, i32) {
    %c0_i32 = arith.constant 0 : i32
    %c0_i32_0 = arith.constant 0 : i32
    %c0_i32_1 = arith.constant 0 : i32
    return %c0_i32, %c0_i32_0 : i32, i32
  }
  func.func @transform_24(%arg0: i32) -> (i32, i32, i32) {
    %c0_i32 = arith.constant 0 : i32
    %c0_i32_0 = arith.constant 0 : i32
    %c0_i32_1 = arith.constant 0 : i32
    return %arg0, %c0_i32, %c0_i32_0 : i32, i32, i32
  }
}

</mosaic_0001>

<llo_original>
// kernel: reward_model_forward.1
$region0: #{reward_model_forward.1}
  #allocation0 [shape = 'u32[]', space=smem, size = 0x4, offset = 0x4, fixed_abs, tag = 'smem constant byte address 0x4 - core index']
  #allocation1 [shape = 'u32[144,128]{1,0:T(1,128)}', space=vmem, size = 0x12000, scoped, tag = 'internal scratch']
  %s0 = inlined_call_operand.vmem [shape: f32[2,8,64], index: 0, kind: input, shape index: {}]
  %s1 = inlined_call_operand.vmem [shape: f32[8,32], index: 1, kind: input, shape index: {}]
  %s2 = inlined_call_operand.vmem [shape: f32[8,32], index: 2, kind: input, shape index: {}]
  %s3 = inlined_call_operand.vmem [shape: bf16[32,32], index: 3, kind: input, shape index: {}]
  %s4 = inlined_call_operand.vmem [shape: f32[8,8], index: 4, kind: input, shape index: {}]
  %s5 = inlined_call_operand.vmem [shape: f32[2,1,64], index: 5, kind: input, shape index: {}]
  %s6 = inlined_call_operand.vmem [shape: f32[2,1,64], index: 6, kind: input, shape index: {}]
  %s7 = inlined_call_operand.vmem [shape: f32[2,1,64], index: 7, kind: input, shape index: {}]
  %s8 = inlined_call_operand.vmem [shape: f32[2,1,64], index: 8, kind: input, shape index: {}]
  %s9 = inlined_call_operand.vmem [shape: bf16[2,2,64,32], index: 9, kind: input, shape index: {}]
  %s10 = inlined_call_operand.vmem [shape: f32[2,2,1,32], index: 10, kind: input, shape index: {}]
  %s11 = inlined_call_operand.vmem [shape: bf16[2,2,64,32], index: 11, kind: input, shape index: {}]
  %s12 = inlined_call_operand.vmem [shape: f32[2,2,1,32], index: 12, kind: input, shape index: {}]
  %s13 = inlined_call_operand.vmem [shape: bf16[2,2,64,32], index: 13, kind: input, shape index: {}]
  %s14 = inlined_call_operand.vmem [shape: f32[2,2,1,32], index: 14, kind: input, shape index: {}]
  %s15 = inlined_call_operand.vmem [shape: bf16[2,2,32,64], index: 15, kind: input, shape index: {}]
  %s16 = inlined_call_operand.vmem [shape: f32[2,1,64], index: 16, kind: input, shape index: {}]
  %s17 = inlined_call_operand.vmem [shape: bf16[2,64,256], index: 17, kind: input, shape index: {}]
  %s18 = inlined_call_operand.vmem [shape: f32[2,1,256], index: 18, kind: input, shape index: {}]
  %s19 = inlined_call_operand.vmem [shape: bf16[2,256,64], index: 19, kind: input, shape index: {}]
  %s20 = inlined_call_operand.vmem [shape: f32[2,1,64], index: 20, kind: input, shape index: {}]
  %s21 = inlined_call_operand.vmem [shape: f32[1,64], index: 21, kind: input, shape index: {}]
  %s22 = inlined_call_operand.vmem [shape: f32[1,64], index: 22, kind: input, shape index: {}]
  %s23 = inlined_call_operand.vmem [shape: bf16[64,128], index: 23, kind: input, shape index: {}]
  %s24 = inlined_call_operand.vmem [shape: f32[2,8,128], index: 24, kind: output, shape index: {}]
  %s25 = sld [smem:[#allocation0]]
  $region129: #{reward_model_forward.1} parent=0
    _
  %s27 = ssub.s32 1, %s25
  %s28 = scalar_select 0, %s27, %s25
  loop: start=0, step=1, limit=4
  $region2: #{reward_model_forward.1} parent=0 // loop_pre_header
    _
  $region3: #{reward_model_forward.1} parent=0 // loop_header
    %s30 = sphi 0, %s34
    %p31 = scmp.ge.s32.totalorder %s30, 4
    %s40 = sphi 0, %s42
    %s43 = sphi 0, %s40
    %s44 = sphi 0, %s43
    %s60 = sphi 0, %s44
    %s64 = sphi 0, %s64
    %s66 = sphi 0, %s64
    %s67 = sphi 0, %s66
    %s81 = sphi 0, %s67
    %s85 = sphi 0, %s85
    %s87 = sphi 0, %s85
    %s88 = sphi 0, %s87
    %s102 = sphi 0, %s88
    %s106 = sphi 0, %s106
    %s108 = sphi 0, %s106
    %s109 = sphi 0, %s108
    %s123 = sphi 0, %s109
    %s127 = sphi 0, %s127
    %s129 = sphi 0, %s127
    %s130 = sphi 0, %s129
    %s144 = sphi 0, %s130
    %s148 = sphi 0, %s148
    %s150 = sphi 0, %s148
    %s151 = sphi 0, %s150
    %s165 = sphi 0, %s151
    %s169 = sphi 0, %s169
    %s171 = sphi 0, %s169
    %s172 = sphi 0, %s171
    %s186 = sphi 0, %s172
    %s190 = sphi 0, %s190
    %s192 = sphi 0, %s190
    %s193 = sphi 0, %s192
    %s207 = sphi 0, %s193
    %s211 = sphi 0, %s211
    %s213 = sphi 0, %s211
    %s214 = sphi 0, %s213
    %s228 = sphi 0, %s214
    %s232 = sphi 0, %s232
    %s234 = sphi 0, %s232
    %s235 = sphi 0, %s234
    %s249 = sphi 0, %s235
    %s253 = sphi 0, %s253
    %s255 = sphi 0, %s253
    %s256 = sphi 0, %s255
    %s270 = sphi 0, %s256
    %s274 = sphi 0, %s274
    %s276 = sphi 0, %s274
    %s277 = sphi 0, %s276
    %s291 = sphi 0, %s277
    %s295 = sphi 0, %s295
    %s297 = sphi 0, %s295
    %s298 = sphi 0, %s297
    %s312 = sphi 0, %s298
    %s316 = sphi 0, %s316
    %s318 = sphi 0, %s316
    %s319 = sphi 0, %s318
    %s333 = sphi 0, %s319
    %s337 = sphi 0, %s337
    %s339 = sphi 0, %s337
    %s340 = sphi 0, %s339
    %s354 = sphi 0, %s340
    %s358 = sphi 0, %s358
    %s360 = sphi 0, %s358
    %s361 = sphi 0, %s360
    %s375 = sphi 0, %s361
    %s379 = sphi 0, %s379
    %s381 = sphi 0, %s379
    %s382 = sphi 0, %s381
    %s396 = sphi 0, %s382
    %s400 = sphi 0, %s400
    %s402 = sphi 0, %s400
    %s403 = sphi 0, %s402
    %s417 = sphi 0, %s403
    %s421 = sphi 0, %s421
    %s423 = sphi 0, %s421
    %s424 = sphi 0, %s423
    %s438 = sphi 0, %s424
    %s442 = sphi 0, %s442
    %s444 = sphi 0, %s442
    %s445 = sphi 0, %s444
    %s459 = sphi 0, %s445
    %s463 = sphi 0, %s463
    %s465 = sphi 0, %s463
    %s466 = sphi 0, %s465
    %s480 = sphi 0, %s466
    %s484 = sphi 0, %s484
    %s486 = sphi 0, %s484
    %s487 = sphi 0, %s486
    %s501 = sphi 0, %s487
    %s505 = sphi 0, %s505
    %s507 = sphi 0, %s505
    %s508 = sphi 0, %s507
    %s522 = sphi 0, %s508
    %s526 = sphi 0, %s526
    %s528 = sphi 0, %s526
    %s529 = sphi 0, %s528
    %s543 = sphi 0, %s529
    %s549 = sphi 0, %s551
    %s552 = sphi 0, %s549
    %s553 = sphi 0, %s552
    %s569 = sphi 0, %s553
  $region4: #{reward_model_forward.1} parent=0 // loop_header_branch
    %33 = sbr.rel (%p31) target = $region8
  $region5: #{reward_model_forward.1} parent=0 // loop_body
    %s35 = ssub.s32 %s30, 1
    %s36 = ssub.s32 %s30, 2
    %s37 = sadd.s32 %s30, 1
    %s38 = ssub.s32 %s30, %s37
    %p39 = scmp.eq.s32.totalorder %s38, 0
    %s41 = sadd.s32 %s40, 1
    %s42 = scalar_select %p39, %s40, %s41
    %p45 = pneg %p39
    %p46 = scmp.eq.s32.totalorder %s30, 1
    %p47 = por %p45, %p46
    %p48 = scmp.ne.s32.totalorder %s40, %s43
    %p49 = scmp.eq.s32.totalorder %s30, 0
    %p50 = por %p48, %p49
    %p51 = scmp.ne.s32.totalorder %s40, %s43
    %p52 = scmp.eq.s32.totalorder %s35, 1
    %p53 = por %p51, %p52
    %p54 = scmp.ne.s32.totalorder %s43, %s44
    %p55 = scmp.eq.s32.totalorder %s35, 0
    %p56 = por %p54, %p55
    %p57 = scmp.ne.s32.totalorder %s43, %s44
    %p58 = scmp.eq.s32.totalorder %s36, 1
    %p59 = por %p57, %p58
    %p61 = scmp.ne.s32.totalorder %s44, %s60
    %p62 = scmp.eq.s32.totalorder %s36, 0
    %p63 = por %p61, %p62
    %s65 = sadd.s32 %s64, 1
    %p68 = scmp.eq.s32.totalorder %s30, 1
    %p69 = scmp.ne.s32.totalorder %s64, %s66
    %p70 = scmp.eq.s32.totalorder %s30, 0
    %p71 = por %p69, %p70
    %p72 = scmp.ne.s32.totalorder %s64, %s66
    %p73 = scmp.eq.s32.totalorder %s35, 1
    %p74 = por %p72, %p73
    %p75 = scmp.ne.s32.totalorder %s66, %s67
    %p76 = scmp.eq.s32.totalorder %s35, 0
    %p77 = por %p75, %p76
    %p78 = scmp.ne.s32.totalorder %s66, %s67
    %p79 = scmp.eq.s32.totalorder %s36, 1
    %p80 = por %p78, %p79
    %p82 = scmp.ne.s32.totalorder %s67, %s81
    %p83 = scmp.eq.s32.totalorder %s36, 0
    %p84 = por %p82, %p83
    %s86 = sadd.s32 %s85, 1
    %p89 = scmp.eq.s32.totalorder %s30, 1
    %p90 = scmp.ne.s32.totalorder %s85, %s87
    %p91 = scmp.eq.s32.totalorder %s30, 0
    %p92 = por %p90, %p91
    %p93 = scmp.ne.s32.totalorder %s85, %s87
    %p94 = scmp.eq.s32.totalorder %s35, 1
    %p95 = por %p93, %p94
    %p96 = scmp.ne.s32.totalorder %s87, %s88
    %p97 = scmp.eq.s32.totalorder %s35, 0
    %p98 = por %p96, %p97
    %p99 = scmp.ne.s32.totalorder %s87, %s88
    %p100 = scmp.eq.s32.totalorder %s36, 1
    %p101 = por %p99, %p100
    %p103 = scmp.ne.s32.totalorder %s88, %s102
    %p104 = scmp.eq.s32.totalorder %s36, 0
    %p105 = por %p103, %p104
    %s107 = sadd.s32 %s106, 1
    %p110 = scmp.eq.s32.totalorder %s30, 1
    %p111 = scmp.ne.s32.totalorder %s106, %s108
    %p112 = scmp.eq.s32.totalorder %s30, 0
    %p113 = por %p111, %p112
    %p114 = scmp.ne.s32.totalorder %s106, %s108
    %p115 = scmp.eq.s32.totalorder %s35, 1
    %p116 = por %p114, %p115
    %p117 = scmp.ne.s32.totalorder %s108, %s109
    %p118 = scmp.eq.s32.totalorder %s35, 0
    %p119 = por %p117, %p118
    %p120 = scmp.ne.s32.totalorder %s108, %s109
    %p121 = scmp.eq.s32.totalorder %s36, 1
    %p122 = por %p120, %p121
    %p124 = scmp.ne.s32.totalorder %s109, %s123
    %p125 = scmp.eq.s32.totalorder %s36, 0
    %p126 = por %p124, %p125
    %s128 = sadd.s32 %s127, 1
    %p131 = scmp.eq.s32.totalorder %s30, 1
    %p132 = scmp.ne.s32.totalorder %s127, %s129
    %p133 = scmp.eq.s32.totalorder %s30, 0
    %p134 = por %p132, %p133
    %p135 = scmp.ne.s32.totalorder %s127, %s129
    %p136 = scmp.eq.s32.totalorder %s35, 1
    %p137 = por %p135, %p136
    %p138 = scmp.ne.s32.totalorder %s129, %s130
    %p139 = scmp.eq.s32.totalorder %s35, 0
    %p140 = por %p138, %p139
    %p141 = scmp.ne.s32.totalorder %s129, %s130
    %p142 = scmp.eq.s32.totalorder %s36, 1
    %p143 = por %p141, %p142
    %p145 = scmp.ne.s32.totalorder %s130, %s144
    %p146 = scmp.eq.s32.totalorder %s36, 0
    %p147 = por %p145, %p146
    %s149 = sadd.s32 %s148, 1
    %p152 = scmp.eq.s32.totalorder %s30, 1
    %p153 = scmp.ne.s32.totalorder %s148, %s150
    %p154 = scmp.eq.s32.totalorder %s30, 0
    %p155 = por %p153, %p154
    %p156 = scmp.ne.s32.totalorder %s148, %s150
    %p157 = scmp.eq.s32.totalorder %s35, 1
    %p158 = por %p156, %p157
    %p159 = scmp.ne.s32.totalorder %s150, %s151
    %p160 = scmp.eq.s32.totalorder %s35, 0
    %p161 = por %p159, %p160
    %p162 = scmp.ne.s32.totalorder %s150, %s151
    %p163 = scmp.eq.s32.totalorder %s36, 1
    %p164 = por %p162, %p163
    %p166 = scmp.ne.s32.totalorder %s151, %s165
    %p167 = scmp.eq.s32.totalorder %s36, 0
    %p168 = por %p166, %p167
    %s170 = sadd.s32 %s169, 1
    %p173 = scmp.eq.s32.totalorder %s30, 1
    %p174 = scmp.ne.s32.totalorder %s169, %s171
    %p175 = scmp.eq.s32.totalorder %s30, 0
    %p176 = por %p174, %p175
    %p177 = scmp.ne.s32.totalorder %s169, %s171
    %p178 = scmp.eq.s32.totalorder %s35, 1
    %p179 = por %p177, %p178
    %p180 = scmp.ne.s32.totalorder %s171, %s172
    %p181 = scmp.eq.s32.totalorder %s35, 0
    %p182 = por %p180, %p181
    %p183 = scmp.ne.s32.totalorder %s171, %s172
    %p184 = scmp.eq.s32.totalorder %s36, 1
    %p185 = por %p183, %p184
    %p187 = scmp.ne.s32.totalorder %s172, %s186
    %p188 = scmp.eq.s32.totalorder %s36, 0
    %p189 = por %p187, %p188
    %s191 = sadd.s32 %s190, 1
    %p194 = scmp.eq.s32.totalorder %s30, 1
    %p195 = scmp.ne.s32.totalorder %s190, %s192
    %p196 = scmp.eq.s32.totalorder %s30, 0
    %p197 = por %p195, %p196
    %p198 = scmp.ne.s32.totalorder %s190, %s192
    %p199 = scmp.eq.s32.totalorder %s35, 1
    %p200 = por %p198, %p199
    %p201 = scmp.ne.s32.totalorder %s192, %s193
    %p202 = scmp.eq.s32.totalorder %s35, 0
    %p203 = por %p201, %p202
    %p204 = scmp.ne.s32.totalorder %s192, %s193
    %p205 = scmp.eq.s32.totalorder %s36, 1
    %p206 = por %p204, %p205
    %p208 = scmp.ne.s32.totalorder %s193, %s207
    %p209 = scmp.eq.s32.totalorder %s36, 0
    %p210 = por %p208, %p209
    %s212 = sadd.s32 %s211, 1
    %p215 = scmp.eq.s32.totalorder %s30, 1
    %p216 = scmp.ne.s32.totalorder %s211, %s213
    %p217 = scmp.eq.s32.totalorder %s30, 0
    %p218 = por %p216, %p217
    %p219 = scmp.ne.s32.totalorder %s211, %s213
    %p220 = scmp.eq.s32.totalorder %s35, 1
    %p221 = por %p219, %p220
    %p222 = scmp.ne.s32.totalorder %s213, %s214
    %p223 = scmp.eq.s32.totalorder %s35, 0
    %p224 = por %p222, %p223
    %p225 = scmp.ne.s32.totalorder %s213, %s214
    %p226 = scmp.eq.s32.totalorder %s36, 1
    %p227 = por %p225, %p226
    %p229 = scmp.ne.s32.totalorder %s214, %s228
    %p230 = scmp.eq.s32.totalorder %s36, 0
    %p231 = por %p229, %p230
    %s233 = sadd.s32 %s232, 1
    %p236 = scmp.eq.s32.totalorder %s30, 1
    %p237 = scmp.ne.s32.totalorder %s232, %s234
    %p238 = scmp.eq.s32.totalorder %s30, 0
    %p239 = por %p237, %p238
    %p240 = scmp.ne.s32.totalorder %s232, %s234
    %p241 = scmp.eq.s32.totalorder %s35, 1
    %p242 = por %p240, %p241
    %p243 = scmp.ne.s32.totalorder %s234, %s235
    %p244 = scmp.eq.s32.totalorder %s35, 0
    %p245 = por %p243, %p244
    %p246 = scmp.ne.s32.totalorder %s234, %s235
    %p247 = scmp.eq.s32.totalorder %s36, 1
    %p248 = por %p246, %p247
    %p250 = scmp.ne.s32.totalorder %s235, %s249
    %p251 = scmp.eq.s32.totalorder %s36, 0
    %p252 = por %p250, %p251
    %s254 = sadd.s32 %s253, 1
    %p257 = scmp.eq.s32.totalorder %s30, 1
    %p258 = scmp.ne.s32.totalorder %s253, %s255
    %p259 = scmp.eq.s32.totalorder %s30, 0
    %p260 = por %p258, %p259
    %p261 = scmp.ne.s32.totalorder %s253, %s255
    %p262 = scmp.eq.s32.totalorder %s35, 1
    %p263 = por %p261, %p262
    %p264 = scmp.ne.s32.totalorder %s255, %s256
    %p265 = scmp.eq.s32.totalorder %s35, 0
    %p266 = por %p264, %p265
    %p267 = scmp.ne.s32.totalorder %s255, %s256
    %p268 = scmp.eq.s32.totalorder %s36, 1
    %p269 = por %p267, %p268
    %p271 = scmp.ne.s32.totalorder %s256, %s270
    %p272 = scmp.eq.s32.totalorder %s36, 0
    %p273 = por %p271, %p272
    %s275 = sadd.s32 %s274, 1
    %p278 = scmp.eq.s32.totalorder %s30, 1
    %p279 = scmp.ne.s32.totalorder %s274, %s276
    %p280 = scmp.eq.s32.totalorder %s30, 0
    %p281 = por %p279, %p280
    %p282 = scmp.ne.s32.totalorder %s274, %s276
    %p283 = scmp.eq.s32.totalorder %s35, 1
    %p284 = por %p282, %p283
    %p285 = scmp.ne.s32.totalorder %s276, %s277
    %p286 = scmp.eq.s32.totalorder %s35, 0
    %p287 = por %p285, %p286
    %p288 = scmp.ne.s32.totalorder %s276, %s277
    %p289 = scmp.eq.s32.totalorder %s36, 1
    %p290 = por %p288, %p289
    %p292 = scmp.ne.s32.totalorder %s277, %s291
    %p293 = scmp.eq.s32.totalorder %s36, 0
    %p294 = por %p292, %p293
    %s296 = sadd.s32 %s295, 1
    %p299 = scmp.eq.s32.totalorder %s30, 1
    %p300 = scmp.ne.s32.totalorder %s295, %s297
    %p301 = scmp.eq.s32.totalorder %s30, 0
    %p302 = por %p300, %p301
    %p303 = scmp.ne.s32.totalorder %s295, %s297
    %p304 = scmp.eq.s32.totalorder %s35, 1
    %p305 = por %p303, %p304
    %p306 = scmp.ne.s32.totalorder %s297, %s298
    %p307 = scmp.eq.s32.totalorder %s35, 0
    %p308 = por %p306, %p307
    %p309 = scmp.ne.s32.totalorder %s297, %s298
    %p310 = scmp.eq.s32.totalorder %s36, 1
    %p311 = por %p309, %p310
    %p313 = scmp.ne.s32.totalorder %s298, %s312
    %p314 = scmp.eq.s32.totalorder %s36, 0
    %p315 = por %p313, %p314
    %s317 = sadd.s32 %s316, 1
    %p320 = scmp.eq.s32.totalorder %s30, 1
    %p321 = scmp.ne.s32.totalorder %s316, %s318
    %p322 = scmp.eq.s32.totalorder %s30, 0
    %p323 = por %p321, %p322
    %p324 = scmp.ne.s32.totalorder %s316, %s318
    %p325 = scmp.eq.s32.totalorder %s35, 1
    %p326 = por %p324, %p325
    %p327 = scmp.ne.s32.totalorder %s318, %s319
    %p328 = scmp.eq.s32.totalorder %s35, 0
    %p329 = por %p327, %p328
    %p330 = scmp.ne.s32.totalorder %s318, %s319
    %p331 = scmp.eq.s32.totalorder %s36, 1
    %p332 = por %p330, %p331
    %p334 = scmp.ne.s32.totalorder %s319, %s333
    %p335 = scmp.eq.s32.totalorder %s36, 0
    %p336 = por %p334, %p335
    %s338 = sadd.s32 %s337, 1
    %p341 = scmp.eq.s32.totalorder %s30, 1
    %p342 = scmp.ne.s32.totalorder %s337, %s339
    %p343 = scmp.eq.s32.totalorder %s30, 0
    %p344 = por %p342, %p343
    %p345 = scmp.ne.s32.totalorder %s337, %s339
    %p346 = scmp.eq.s32.totalorder %s35, 1
    %p347 = por %p345, %p346
    %p348 = scmp.ne.s32.totalorder %s339, %s340
    %p349 = scmp.eq.s32.totalorder %s35, 0
    %p350 = por %p348, %p349
    %p351 = scmp.ne.s32.totalorder %s339, %s340
    %p352 = scmp.eq.s32.totalorder %s36, 1
    %p353 = por %p351, %p352
    %p355 = scmp.ne.s32.totalorder %s340, %s354
    %p356 = scmp.eq.s32.totalorder %s36, 0
    %p357 = por %p355, %p356
    %s359 = sadd.s32 %s358, 1
    %p362 = scmp.eq.s32.totalorder %s30, 1
    %p363 = scmp.ne.s32.totalorder %s358, %s360
    %p364 = scmp.eq.s32.totalorder %s30, 0
    %p365 = por %p363, %p364
    %p366 = scmp.ne.s32.totalorder %s358, %s360
    %p367 = scmp.eq.s32.totalorder %s35, 1
    %p368 = por %p366, %p367
    %p369 = scmp.ne.s32.totalorder %s360, %s361
    %p370 = scmp.eq.s32.totalorder %s35, 0
    %p371 = por %p369, %p370
    %p372 = scmp.ne.s32.totalorder %s360, %s361
    %p373 = scmp.eq.s32.totalorder %s36, 1
    %p374 = por %p372, %p373
    %p376 = scmp.ne.s32.totalorder %s361, %s375
    %p377 = scmp.eq.s32.totalorder %s36, 0
    %p378 = por %p376, %p377
    %s380 = sadd.s32 %s379, 1
    %p383 = scmp.eq.s32.totalorder %s30, 1
    %p384 = scmp.ne.s32.totalorder %s379, %s381
    %p385 = scmp.eq.s32.totalorder %s30, 0
    %p386 = por %p384, %p385
    %p387 = scmp.ne.s32.totalorder %s379, %s381
    %p388 = scmp.eq.s32.totalorder %s35, 1
    %p389 = por %p387, %p388
    %p390 = scmp.ne.s32.totalorder %s381, %s382
    %p391 = scmp.eq.s32.totalorder %s35, 0
    %p392 = por %p390, %p391
    %p393 = scmp.ne.s32.totalorder %s381, %s382
    %p394 = scmp.eq.s32.totalorder %s36, 1
    %p395 = por %p393, %p394
    %p397 = scmp.ne.s32.totalorder %s382, %s396
    %p398 = scmp.eq.s32.totalorder %s36, 0
    %p399 = por %p397, %p398
    %s401 = sadd.s32 %s400, 1
    %p404 = scmp.eq.s32.totalorder %s30, 1
    %p405 = scmp.ne.s32.totalorder %s400, %s402
    %p406 = scmp.eq.s32.totalorder %s30, 0
    %p407 = por %p405, %p406
    %p408 = scmp.ne.s32.totalorder %s400, %s402
    %p409 = scmp.eq.s32.totalorder %s35, 1
    %p410 = por %p408, %p409
    %p411 = scmp.ne.s32.totalorder %s402, %s403
    %p412 = scmp.eq.s32.totalorder %s35, 0
    %p413 = por %p411, %p412
    %p414 = scmp.ne.s32.totalorder %s402, %s403
    %p415 = scmp.eq.s32.totalorder %s36, 1
    %p416 = por %p414, %p415
    %p418 = scmp.ne.s32.totalorder %s403, %s417
    %p419 = scmp.eq.s32.totalorder %s36, 0
    %p420 = por %p418, %p419
    %s422 = sadd.s32 %s421, 1
    %p425 = scmp.eq.s32.totalorder %s30, 1
    %p426 = scmp.ne.s32.totalorder %s421, %s423
    %p427 = scmp.eq.s32.totalorder %s30, 0
    %p428 = por %p426, %p427
    %p429 = scmp.ne.s32.totalorder %s421, %s423
    %p430 = scmp.eq.s32.totalorder %s35, 1
    %p431 = por %p429, %p430
    %p432 = scmp.ne.s32.totalorder %s423, %s424
    %p433 = scmp.eq.s32.totalorder %s35, 0
    %p434 = por %p432, %p433
    %p435 = scmp.ne.s32.totalorder %s423, %s424
    %p436 = scmp.eq.s32.totalorder %s36, 1
    %p437 = por %p435, %p436
    %p439 = scmp.ne.s32.totalorder %s424, %s438
    %p440 = scmp.eq.s32.totalorder %s36, 0
    %p441 = por %p439, %p440
    %s443 = sadd.s32 %s442, 1
    %p446 = scmp.eq.s32.totalorder %s30, 1
    %p447 = scmp.ne.s32.totalorder %s442, %s444
    %p448 = scmp.eq.s32.totalorder %s30, 0
    %p449 = por %p447, %p448
    %p450 = scmp.ne.s32.totalorder %s442, %s444
    %p451 = scmp.eq.s32.totalorder %s35, 1
    %p452 = por %p450, %p451
    %p453 = scmp.ne.s32.totalorder %s444, %s445
    %p454 = scmp.eq.s32.totalorder %s35, 0
    %p455 = por %p453, %p454
    %p456 = scmp.ne.s32.totalorder %s444, %s445
    %p457 = scmp.eq.s32.totalorder %s36, 1
    %p458 = por %p456, %p457
    %p460 = scmp.ne.s32.totalorder %s445, %s459
    %p461 = scmp.eq.s32.totalorder %s36, 0
    %p462 = por %p460, %p461
    %s464 = sadd.s32 %s463, 1
    %p467 = scmp.eq.s32.totalorder %s30, 1
    %p468 = scmp.ne.s32.totalorder %s463, %s465
    %p469 = scmp.eq.s32.totalorder %s30, 0
    %p470 = por %p468, %p469
    %p471 = scmp.ne.s32.totalorder %s463, %s465
    %p472 = scmp.eq.s32.totalorder %s35, 1
    %p473 = por %p471, %p472
    %p474 = scmp.ne.s32.totalorder %s465, %s466
    %p475 = scmp.eq.s32.totalorder %s35, 0
    %p476 = por %p474, %p475
    %p477 = scmp.ne.s32.totalorder %s465, %s466
    %p478 = scmp.eq.s32.totalorder %s36, 1
    %p479 = por %p477, %p478
    %p481 = scmp.ne.s32.totalorder %s466, %s480
    %p482 = scmp.eq.s32.totalorder %s36, 0
    %p483 = por %p481, %p482
    %s485 = sadd.s32 %s484, 1
    %p488 = scmp.eq.s32.totalorder %s30, 1
    %p489 = scmp.ne.s32.totalorder %s484, %s486
    %p490 = scmp.eq.s32.totalorder %s30, 0
    %p491 = por %p489, %p490
    %p492 = scmp.ne.s32.totalorder %s484, %s486
    %p493 = scmp.eq.s32.totalorder %s35, 1
    %p494 = por %p492, %p493
    %p495 = scmp.ne.s32.totalorder %s486, %s487
    %p496 = scmp.eq.s32.totalorder %s35, 0
    %p497 = por %p495, %p496
    %p498 = scmp.ne.s32.totalorder %s486, %s487
    %p499 = scmp.eq.s32.totalorder %s36, 1
    %p500 = por %p498, %p499
    %p502 = scmp.ne.s32.totalorder %s487, %s501
    %p503 = scmp.eq.s32.totalorder %s36, 0
    %p504 = por %p502, %p503
    %s506 = sadd.s32 %s505, 1
    %p509 = scmp.eq.s32.totalorder %s30, 1
    %p510 = scmp.ne.s32.totalorder %s505, %s507
    %p511 = scmp.eq.s32.totalorder %s30, 0
    %p512 = por %p510, %p511
    %p513 = scmp.ne.s32.totalorder %s505, %s507
    %p514 = scmp.eq.s32.totalorder %s35, 1
    %p515 = por %p513, %p514
    %p516 = scmp.ne.s32.totalorder %s507, %s508
    %p517 = scmp.eq.s32.totalorder %s35, 0
    %p518 = por %p516, %p517
    %p519 = scmp.ne.s32.totalorder %s507, %s508
    %p520 = scmp.eq.s32.totalorder %s36, 1
    %p521 = por %p519, %p520
    %p523 = scmp.ne.s32.totalorder %s508, %s522
    %p524 = scmp.eq.s32.totalorder %s36, 0
    %p525 = por %p523, %p524
    %s527 = sadd.s32 %s526, 1
    %p530 = scmp.eq.s32.totalorder %s30, 1
    %p531 = scmp.ne.s32.totalorder %s526, %s528
    %p532 = scmp.eq.s32.totalorder %s30, 0
    %p533 = por %p531, %p532
    %p534 = scmp.ne.s32.totalorder %s526, %s528
    %p535 = scmp.eq.s32.totalorder %s35, 1
    %p536 = por %p534, %p535
    %p537 = scmp.ne.s32.totalorder %s528, %s529
    %p538 = scmp.eq.s32.totalorder %s35, 0
    %p539 = por %p537, %p538
    %p540 = scmp.ne.s32.totalorder %s528, %s529
    %p541 = scmp.eq.s32.totalorder %s36, 1
    %p542 = por %p540, %p541
    %p544 = scmp.ne.s32.totalorder %s529, %s543
    %p545 = scmp.eq.s32.totalorder %s36, 0
    %p546 = por %p544, %p545
    %s547 = ssub.s32 %s30, %s37
    %p548 = scmp.eq.s32.totalorder %s547, 0
    %s550 = sadd.s32 %s549, 1
    %s551 = scalar_select %p548, %s549, %s550
    %p554 = pneg %p548
    %p555 = scmp.eq.s32.totalorder %s30, 1
    %p556 = por %p554, %p555
    %p557 = scmp.ne.s32.totalorder %s549, %s552
    %p558 = scmp.eq.s32.totalorder %s30, 0
    %p559 = por %p557, %p558
    %p560 = scmp.ne.s32.totalorder %s549, %s552
    %p561 = scmp.eq.s32.totalorder %s35, 1
    %p562 = por %p560, %p561
    %p563 = scmp.ne.s32.totalorder %s552, %s553
    %p564 = scmp.eq.s32.totalorder %s35, 0
    %p565 = por %p563, %p564
    %p566 = scmp.ne.s32.totalorder %s552, %s553
    %p567 = scmp.eq.s32.totalorder %s36, 1
    %p568 = por %p566, %p567
    %p570 = scmp.ne.s32.totalorder %s553, %s569
    %p571 = scmp.eq.s32.totalorder %s36, 0
    %p572 = por %p570, %p571
    %p573 = scmp.le.s32.totalorder 1, %s30
    %p574 = scmp.lt.s32.totalorder %s30, 3
    %p575 = pnand %p573, %p574
    %p576 = pneg %p575
    // Predicated region
    $region9: #{reward_model_forward.1} parent=5 // pred_check
      _
    $region10: #{reward_model_forward.1} parent=5 // pred_check_branch
      %578 = sbr.rel (%p575) target = $region12
    $region11: #{reward_model_forward.1} parent=5 // pred_region
      %s579 = ssub.s32 %s30, 1
      // Predicated region
      $region13: #{reward_model_forward.1} parent=11 // pred_check
        %p580 = pneg %p77
      $region14: #{reward_model_forward.1} parent=11 // pred_check_branch
        %582 = sbr.rel (%p580) target = $region16
      $region15: #{reward_model_forward.1} parent=11 // pred_region
        _
      $region16: #{reward_model_forward.1} parent=11 // pred_fallthru
        _
      // Predicated region
      $region17: #{reward_model_forward.1} parent=11 // pred_check
        %p583 = pneg %p98
      $region18: #{reward_model_forward.1} parent=11 // pred_check_branch
        %585 = sbr.rel (%p583) target = $region20
      $region19: #{reward_model_forward.1} parent=11 // pred_region
        _
      $region20: #{reward_model_forward.1} parent=11 // pred_fallthru
        _
      // Predicated region
      $region21: #{reward_model_forward.1} parent=11 // pred_check
        %p586 = pneg %p119
      $region22: #{reward_model_forward.1} parent=11 // pred_check_branch
        %588 = sbr.rel (%p586) target = $region24
      $region23: #{reward_model_forward.1} parent=11 // pred_region
        _
      $region24: #{reward_model_forward.1} parent=11 // pred_fallthru
        _
      // Predicated region
      $region25: #{reward_model_forward.1} parent=11 // pred_check
        %p589 = pneg %p140
      $region26: #{reward_model_forward.1} parent=11 // pred_check_branch
        %591 = sbr.rel (%p589) target = $region28
      $region27: #{reward_model_forward.1} parent=11 // pred_region
        _
      $region28: #{reward_model_forward.1} parent=11 // pred_fallthru
        _
      // Predicated region
      $region29: #{reward_model_forward.1} parent=11 // pred_check
        %p592 = pneg %p161
      $region30: #{reward_model_forward.1} parent=11 // pred_check_branch
        %594 = sbr.rel (%p592) target = $region32
      $region31: #{reward_model_forward.1} parent=11 // pred_region
        _
      $region32: #{reward_model_forward.1} parent=11 // pred_fallthru
        _
      // Predicated region
      $region33: #{reward_model_forward.1} parent=11 // pred_check
        %p595 = pneg %p182
      $region34: #{reward_model_forward.1} parent=11 // pred_check_branch
        %597 = sbr.rel (%p595) target = $region36
      $region35: #{reward_model_forward.1} parent=11 // pred_region
        _
      $region36: #{reward_model_forward.1} parent=11 // pred_fallthru
        _
      // Predicated region
      $region37: #{reward_model_forward.1} parent=11 // pred_check
        %p598 = pneg %p203
      $region38: #{reward_model_forward.1} parent=11 // pred_check_branch
        %600 = sbr.rel (%p598) target = $region40
      $region39: #{reward_model_forward.1} parent=11 // pred_region
        _
      $region40: #{reward_model_forward.1} parent=11 // pred_fallthru
        _
      // Predicated region
      $region41: #{reward_model_forward.1} parent=11 // pred_check
        %p601 = pneg %p224
      $region42: #{reward_model_forward.1} parent=11 // pred_check_branch
        %603 = sbr.rel (%p601) target = $region44
      $region43: #{reward_model_forward.1} parent=11 // pred_region
        _
      $region44: #{reward_model_forward.1} parent=11 // pred_fallthru
        _
      // Predicated region
      $region45: #{reward_model_forward.1} parent=11 // pred_check
        %p604 = pneg %p245
      $region46: #{reward_model_forward.1} parent=11 // pred_check_branch
        %606 = sbr.rel (%p604) target = $region48
      $region47: #{reward_model_forward.1} parent=11 // pred_region
        _
      $region48: #{reward_model_forward.1} parent=11 // pred_fallthru
        _
      // Predicated region
      $region49: #{reward_model_forward.1} parent=11 // pred_check
        %p607 = pneg %p266
      $region50: #{reward_model_forward.1} parent=11 // pred_check_branch
        %609 = sbr.rel (%p607) target = $region52
      $region51: #{reward_model_forward.1} parent=11 // pred_region
        _
      $region52: #{reward_model_forward.1} parent=11 // pred_fallthru
        _
      // Predicated region
      $region53: #{reward_model_forward.1} parent=11 // pred_check
        %p610 = pneg %p287
      $region54: #{reward_model_forward.1} parent=11 // pred_check_branch
        %612 = sbr.rel (%p610) target = $region56
      $region55: #{reward_model_forward.1} parent=11 // pred_region
        _
      $region56: #{reward_model_forward.1} parent=11 // pred_fallthru
        _
      // Predicated region
      $region57: #{reward_model_forward.1} parent=11 // pred_check
        %p613 = pneg %p308
      $region58: #{reward_model_forward.1} parent=11 // pred_check_branch
        %615 = sbr.rel (%p613) target = $region60
      $region59: #{reward_model_forward.1} parent=11 // pred_region
        _
      $region60: #{reward_model_forward.1} parent=11 // pred_fallthru
        _
      // Predicated region
      $region61: #{reward_model_forward.1} parent=11 // pred_check
        %p616 = pneg %p329
      $region62: #{reward_model_forward.1} parent=11 // pred_check_branch
        %618 = sbr.rel (%p616) target = $region64
      $region63: #{reward_model_forward.1} parent=11 // pred_region
        _
      $region64: #{reward_model_forward.1} parent=11 // pred_fallthru
        _
      // Predicated region
      $region65: #{reward_model_forward.1} parent=11 // pred_check
        %p619 = pneg %p350
      $region66: #{reward_model_forward.1} parent=11 // pred_check_branch
        %621 = sbr.rel (%p619) target = $region68
      $region67: #{reward_model_forward.1} parent=11 // pred_region
        _
      $region68: #{reward_model_forward.1} parent=11 // pred_fallthru
        _
      // Predicated region
      $region69: #{reward_model_forward.1} parent=11 // pred_check
        %p622 = pneg %p371
      $region70: #{reward_model_forward.1} parent=11 // pred_check_branch
        %624 = sbr.rel (%p622) target = $region72
      $region71: #{reward_model_forward.1} parent=11 // pred_region
        _
      $region72: #{reward_model_forward.1} parent=11 // pred_fallthru
        _
      // Predicated region
      $region73: #{reward_model_forward.1} parent=11 // pred_check
        %p625 = pneg %p392
      $region74: #{reward_model_forward.1} parent=11 // pred_check_branch
        %627 = sbr.rel (%p625) target = $region76
      $region75: #{reward_model_forward.1} parent=11 // pred_region
        _
      $region76: #{reward_model_forward.1} parent=11 // pred_fallthru
        _
      // Predicated region
      $region77: #{reward_model_forward.1} parent=11 // pred_check
        %p628 = pneg %p413
      $region78: #{reward_model_forward.1} parent=11 // pred_check_branch
        %630 = sbr.rel (%p628) target = $region80
      $region79: #{reward_model_forward.1} parent=11 // pred_region
        _
      $region80: #{reward_model_forward.1} parent=11 // pred_fallthru
        _
      // Predicated region
      $region81: #{reward_model_forward.1} parent=11 // pred_check
        %p631 = pneg %p434
      $region82: #{reward_model_forward.1} parent=11 // pred_check_branch
        %633 = sbr.rel (%p631) target = $region84
      $region83: #{reward_model_forward.1} parent=11 // pred_region
        _
      $region84: #{reward_model_forward.1} parent=11 // pred_fallthru
        _
      // Predicated region
      $region85: #{reward_model_forward.1} parent=11 // pred_check
        %p634 = pneg %p455
      $region86: #{reward_model_forward.1} parent=11 // pred_check_branch
        %636 = sbr.rel (%p634) target = $region88
      $region87: #{reward_model_forward.1} parent=11 // pred_region
        _
      $region88: #{reward_model_forward.1} parent=11 // pred_fallthru
        _
      // Predicated region
      $region89: #{reward_model_forward.1} parent=11 // pred_check
        %p637 = pneg %p476
      $region90: #{reward_model_forward.1} parent=11 // pred_check_branch
        %639 = sbr.rel (%p637) target = $region92
      $region91: #{reward_model_forward.1} parent=11 // pred_region
        _
      $region92: #{reward_model_forward.1} parent=11 // pred_fallthru
        _
      // Predicated region
      $region93: #{reward_model_forward.1} parent=11 // pred_check
        %p640 = pneg %p497
      $region94: #{reward_model_forward.1} parent=11 // pred_check_branch
        %642 = sbr.rel (%p640) target = $region96
      $region95: #{reward_model_forward.1} parent=11 // pred_region
        _
      $region96: #{reward_model_forward.1} parent=11 // pred_fallthru
        _
      // Predicated region
      $region97: #{reward_model_forward.1} parent=11 // pred_check
        %p643 = pneg %p518
      $region98: #{reward_model_forward.1} parent=11 // pred_check_branch
        %645 = sbr.rel (%p643) target = $region100
      $region99: #{reward_model_forward.1} parent=11 // pred_region
        _
      $region100: #{reward_model_forward.1} parent=11 // pred_fallthru
        _
      // Predicated region
      $region101: #{reward_model_forward.1} parent=11 // pred_check
        %p646 = pneg %p539
      $region102: #{reward_model_forward.1} parent=11 // pred_check_branch
        %648 = sbr.rel (%p646) target = $region104
      $region103: #{reward_model_forward.1} parent=11 // pred_region
        _
      $region104: #{reward_model_forward.1} parent=11 // pred_fallthru
        _
    $region12: #{reward_model_forward.1} parent=5 // pred_fallthru
      _
    %p649 = scmp.lt.s32.totalorder %s30, 2
    // Predicated region
    $region105: #{reward_model_forward.1} parent=5 // pred_check
      %p650 = pneg %p649
    $region106: #{reward_model_forward.1} parent=5 // pred_check_branch
      %652 = sbr.rel (%p650) target = $region108
    $region107: #{reward_model_forward.1} parent=5 // pred_region
      // Predicated region
      $region109: #{reward_model_forward.1} parent=107 // pred_check
        %p653 = pneg %p50
      $region110: #{reward_model_forward.1} parent=107 // pred_check_branch
        %655 = sbr.rel (%p653) target = $region112
      $region111: #{reward_model_forward.1} parent=107 // pred_region
        %p656 = scmp.lt.s32.totalorder %s30, 1
        %s657 = scalar_select %p656, %s30, 1
        %s658 = smul.addr %s657, 8
        %s659 = scalar_lea.vmem %s0, %s658
      $region112: #{reward_model_forward.1} parent=107 // pred_fallthru
        _
    $region108: #{reward_model_forward.1} parent=5 // pred_fallthru
      _
    %p660 = scmp.le.s32.totalorder 1, %s30
    %p661 = scmp.lt.s32.totalorder %s30, 3
    %p662 = pnand %p660, %p661
    %p663 = pneg %p662
    // Predicated region
    $region113: #{reward_model_forward.1} parent=5 // pred_check
      _
    $region114: #{reward_model_forward.1} parent=5 // pred_check_branch
      %665 = sbr.rel (%p662) target = $region116
    $region115: #{reward_model_forward.1} parent=5 // pred_region
      %s666 = ssub.s32 %s30, 1
      %p667 = scmp.lt.s32.totalorder %s35, 1
      %s668 = scalar_select %p667, %s35, 1
      %s669 = smul.addr %s668, 8
      %s670 = scalar_lea.vmem %s0, %s669
      %p671 = pneg %p56
      %p672 = pneg %p53
      %p673 = pneg %p77
      %p674 = pneg %p74
      %p675 = pneg %p98
      %p676 = pneg %p95
      %p677 = pneg %p119
      %p678 = pneg %p116
      %p679 = pneg %p140
      %p680 = pneg %p137
      %p681 = pneg %p161
      %p682 = pneg %p158
      %p683 = pneg %p182
      %p684 = pneg %p179
      %p685 = pneg %p203
      %p686 = pneg %p200
      %p687 = pneg %p224
      %p688 = pneg %p221
      %p689 = pneg %p245
      %p690 = pneg %p242
      %p691 = pneg %p266
      %p692 = pneg %p263
      %p693 = pneg %p287
      %p694 = pneg %p284
      %p695 = pneg %p308
      %p696 = pneg %p305
      %p697 = pneg %p329
      %p698 = pneg %p326
      %p699 = pneg %p350
      %p700 = pneg %p347
      %p701 = pneg %p371
      %p702 = pneg %p368
      %p703 = pneg %p392
      %p704 = pneg %p389
      %p705 = pneg %p413
      %p706 = pneg %p410
      %p707 = pneg %p434
      %p708 = pneg %p431
      %p709 = pneg %p455
      %p710 = pneg %p452
      %p711 = pneg %p476
      %p712 = pneg %p473
      %p713 = pneg %p497
      %p714 = pneg %p494
      %p715 = pneg %p518
      %p716 = pneg %p515
      %p717 = pneg %p539
      %p718 = pneg %p536
      %p719 = pneg %p565
      %p720 = pneg %p562
      %p721 = scmp.lt.s32.totalorder %s35, 1
      %s722 = scalar_select %p721, %s35, 1
      %s723 = smul.addr %s722, 8
      %s724 = scalar_lea.vmem %s24, %s723
      %p725 = scmp.lt.s32.totalorder %s35, 1
      %s726 = scalar_select %p725, %s35, 1
      %s727 = smul.addr %s726, 8
      %s728 = scalar_lea.vmem %s0, %s727
      %p729 = scmp.lt.s32.totalorder %s35, 1
      %s730 = scalar_select %p729, %s35, 1
      %s731 = smul.addr %s730, 8
      %s732 = scalar_lea.vmem %s24, %s731
      %v734 = vld [vmem:[%s728] sm:$0xff]
      %v735 = vld [vmem:[%s1] sm:$0xff]
      %v736 = vld [vmem:[%s2] sm:$0xff]
      %v737 = vld [vmem:[%s3] sm:$0xf]
      %v738 = vld [vmem:[%s3 + $0x4] sm:$0xf]
      %v739 = vld [vmem:[%s3 + $0x8] sm:$0xf]
      %v740 = vld [vmem:[%s3 + $0xc] sm:$0xf]
      %v741 = vld [vmem:[%s4] sm:$0xff]
      %v742 = vld [vmem:[%s5] sm:$0x1]
      %v743 = vld [vmem:[%s6] sm:$0x1]
      %vm744 = vcmask 523264
      %v745 = vsel %vm744, %v734, 0.0
      %746 = vadd.xlane.f32.xlu0 %v745
      %v747 = vpop.xlane.xlu0 %746
      %v748 = vrcp.pop 64.0
      %v749 = vmul.f32 %v747, %v748
      %v750 = vsub.f32 %v734, %v749
      %v751 = vmul.f32 %v750, %v750
      %v752 = vsel %vm744, %v751, 0.0
      %753 = vadd.xlane.f32.xlu0 %v752
      %v754 = vpop.xlane.xlu0 %753
      %v755 = vmul.f32 %v754, %v748
      %v756 = vadd.f32 %v755, 1e-05
      %v757 = vrsqrt.pop %v756
      %v758 = vmul.f32 %v750, %v757
      %v760 = vlaneseq
      %v761 = vshrl.u32 %v760, 7
      %v762 = vsub.s32 0, %v761
      %v763 = vrot.slane %v742, %v762
      %v765 = vmul.f32 %v758, %v763
      %v767 = vlaneseq
      %v768 = vshrl.u32 %v767, 7
      %v769 = vsub.s32 0, %v768
      %v770 = vrot.slane %v743, %v769
      %v772 = vadd.f32 %v765, %v770
      %v773 = vpack.c.bf16 %v772, %v772
      %v774 = vld [vmem:[%s16] sm:$0x1]
      %v775 = vld [vmem:[%s9] sm:$0xf]
      %v776 = vld [vmem:[%s9 + $0x4] sm:$0xf]
      %v777 = vld [vmem:[%s9 + $0x8] sm:$0xf]
      %v778 = vld [vmem:[%s9 + $0xc] sm:$0xf]
      %v779 = vld [vmem:[%s9 + $0x10] sm:$0xf]
      %v780 = vld [vmem:[%s9 + $0x14] sm:$0xf]
      %v781 = vld [vmem:[%s9 + $0x18] sm:$0xf]
      %v782 = vld [vmem:[%s9 + $0x1c] sm:$0xf]
      %v783 = vld [vmem:[%s10] sm:$0x1]
      %v785 = vlaneseq
      %v786 = vshrl.u32 %v785, 7
      %v787 = vsub.s32 0, %v786
      %v788 = vrot.slane %v783, %v787
      %v798 = vunpack.c.l.b16 %v775
      %v799 = vunpack.c.l.b16 %v776
      %v800 = vunpack.c.l.b16 %v777
      %v801 = vunpack.c.l.b16 %v778
      %v802 = vunpack.c.l.b16 %v779
      %v803 = vunpack.c.l.b16 %v780
      %v804 = vunpack.c.l.b16 %v781
      %v805 = vunpack.c.l.b16 %v782
      %v806 = vpack.c.b16 %v799, %v798
      %v807 = vpack.c.b16 %v801, %v800
      %v808 = vpack.c.b16 %v803, %v802
      %v809 = vpack.c.b16 %v805, %v804
      %v815 = vsel %vm744, %v773, 0
      %817 = vmatprep.subr.bf16.mxu0 0
      %818 = vmatpush1.bf16.msra.mxu0 %v806
      %819 = vmatprep.subr.bf16.mxu0 0
      %820 = vmatpush1.bf16.msra.mxu0 %v807
      %821 = vmatprep.subr.bf16.mxu0 0
      %822 = vmatpush1.bf16.msra.mxu0 %v808
      %823 = vmatprep.subr.bf16.mxu0 0
      %824 = vmatpush1.bf16.msra.mxu0 %v809
      %825 = vmatprep.subr.bf16.mxu0 0
      %826 = vmatpush1.bf16.msra.mxu0 0
      %827 = vmatprep.subr.bf16.mxu0 0
      %828 = vmatpush1.bf16.msra.mxu0 0
      %829 = vmatprep.subr.bf16.mxu0 0
      %830 = vmatpush1.bf16.msra.mxu0 0
      %831 = vmatprep.subr.bf16.mxu0 0
      %832 = vmatpush1.bf16.msra.mxu0 0
      %833 = vmatprep.subr.bf16.mxu0 0
      %834 = vmatpush1.bf16.msra.mxu0 0
      %835 = vmatprep.subr.bf16.mxu0 0
      %836 = vmatpush1.bf16.msra.mxu0 0
      %837 = vmatprep.subr.bf16.mxu0 0
      %838 = vmatpush1.bf16.msra.mxu0 0
      %839 = vmatprep.subr.bf16.mxu0 0
      %840 = vmatpush1.bf16.msra.mxu0 0
      %841 = vmatprep.subr.bf16.mxu0 0
      %842 = vmatpush1.bf16.msra.mxu0 0
      %843 = vmatprep.subr.bf16.mxu0 0
      %844 = vmatpush1.bf16.msra.mxu0 0
      %845 = vmatprep.subr.bf16.mxu0 0
      %846 = vmatpush1.bf16.msra.mxu0 0
      %847 = vmatprep.subr.bf16.mxu0 0
      %848 = vmatpush1.bf16.msra.mxu0 0
      %849 = vmatprep.mubr.bf16.mxu0 0
      %850 = vmatmul.mubr.bf16.gmra.mrb[0].mxu0 %v815
      %v851 = vpop.f32.mrb[0].mxu0
      %v852 = vadd.f32 %v788, %v851
      %v853 = vpop.f32.mrb[0].mxu0
      %v854 = vpop.f32.mrb[0].mxu0
      %v855 = vpop.f32.mrb[0].mxu0
      %856 = vdwg.mxu0
      %v857 = vld [vmem:[%s11] sm:$0xf]
      %v858 = vld [vmem:[%s11 + $0x4] sm:$0xf]
      %v859 = vld [vmem:[%s11 + $0x8] sm:$0xf]
      %v860 = vld [vmem:[%s11 + $0xc] sm:$0xf]
      %v861 = vld [vmem:[%s11 + $0x10] sm:$0xf]
      %v862 = vld [vmem:[%s11 + $0x14] sm:$0xf]
      %v863 = vld [vmem:[%s11 + $0x18] sm:$0xf]
      %v864 = vld [vmem:[%s11 + $0x1c] sm:$0xf]
      %v865 = vld [vmem:[%s12] sm:$0x1]
      %v867 = vlaneseq
      %v868 = vshrl.u32 %v867, 7
      %v869 = vsub.s32 0, %v868
      %v870 = vrot.slane %v865, %v869
      %v880 = vunpack.c.l.b16 %v857
      %v881 = vunpack.c.l.b16 %v858
      %v882 = vunpack.c.l.b16 %v859
      %v883 = vunpack.c.l.b16 %v860
      %v884 = vunpack.c.l.b16 %v861
      %v885 = vunpack.c.l.b16 %v862
      %v886 = vunpack.c.l.b16 %v863
      %v887 = vunpack.c.l.b16 %v864
      %v888 = vpack.c.b16 %v881, %v880
      %v889 = vpack.c.b16 %v883, %v882
      %v890 = vpack.c.b16 %v885, %v884
      %v891 = vpack.c.b16 %v887, %v886
      %896 = vmatprep.subr.bf16.mxu0 0
      %897 = vmatpush1.bf16.msra.mxu0 %v888
      %898 = vmatprep.subr.bf16.mxu0 0
      %899 = vmatpush1.bf16.msra.mxu0 %v889
      %900 = vmatprep.subr.bf16.mxu0 0
      %901 = vmatpush1.bf16.msra.mxu0 %v890
      %902 = vmatprep.subr.bf16.mxu0 0
      %903 = vmatpush1.bf16.msra.mxu0 %v891
      %904 = vmatprep.subr.bf16.mxu0 0
      %905 = vmatpush1.bf16.msra.mxu0 0
      %906 = vmatprep.subr.bf16.mxu0 0
      %907 = vmatpush1.bf16.msra.mxu0 0
      %908 = vmatprep.subr.bf16.mxu0 0
      %909 = vmatpush1.bf16.msra.mxu0 0
      %910 = vmatprep.subr.bf16.mxu0 0
      %911 = vmatpush1.bf16.msra.mxu0 0
      %912 = vmatprep.subr.bf16.mxu0 0
      %913 = vmatpush1.bf16.msra.mxu0 0
      %914 = vmatprep.subr.bf16.mxu0 0
      %915 = vmatpush1.bf16.msra.mxu0 0
      %916 = vmatprep.subr.bf16.mxu0 0
      %917 = vmatpush1.bf16.msra.mxu0 0
      %918 = vmatprep.subr.bf16.mxu0 0
      %919 = vmatpush1.bf16.msra.mxu0 0
      %920 = vmatprep.subr.bf16.mxu0 0
      %921 = vmatpush1.bf16.msra.mxu0 0
      %922 = vmatprep.subr.bf16.mxu0 0
      %923 = vmatpush1.bf16.msra.mxu0 0
      %924 = vmatprep.subr.bf16.mxu0 0
      %925 = vmatpush1.bf16.msra.mxu0 0
      %926 = vmatprep.subr.bf16.mxu0 0
      %927 = vmatpush1.bf16.msra.mxu0 0
      %928 = vmatprep.mubr.bf16.mxu0 0
      %929 = vmatmul.mubr.bf16.gmra.mrb[0].mxu0 %v815
      %v930 = vpop.f32.mrb[0].mxu0
      %v931 = vadd.f32 %v870, %v930
      %v932 = vpop.f32.mrb[0].mxu0
      %v933 = vpop.f32.mrb[0].mxu0
      %v934 = vpop.f32.mrb[0].mxu0
      %935 = vdwg.mxu0
      %v936 = vld [vmem:[%s13] sm:$0xf]
      %v937 = vld [vmem:[%s13 + $0x4] sm:$0xf]
      %v938 = vld [vmem:[%s13 + $0x8] sm:$0xf]
      %v939 = vld [vmem:[%s13 + $0xc] sm:$0xf]
      %v940 = vld [vmem:[%s13 + $0x10] sm:$0xf]
      %v941 = vld [vmem:[%s13 + $0x14] sm:$0xf]
      %v942 = vld [vmem:[%s13 + $0x18] sm:$0xf]
      %v943 = vld [vmem:[%s13 + $0x1c] sm:$0xf]
      %v944 = vld [vmem:[%s14] sm:$0x1]
      %v946 = vlaneseq
      %v947 = vshrl.u32 %v946, 7
      %v948 = vsub.s32 0, %v947
      %v949 = vrot.slane %v944, %v948
      %v959 = vunpack.c.l.b16 %v936
      %v960 = vunpack.c.l.b16 %v937
      %v961 = vunpack.c.l.b16 %v938
      %v962 = vunpack.c.l.b16 %v939
      %v963 = vunpack.c.l.b16 %v940
      %v964 = vunpack.c.l.b16 %v941
      %v965 = vunpack.c.l.b16 %v942
      %v966 = vunpack.c.l.b16 %v943
      %v967 = vpack.c.b16 %v960, %v959
      %v968 = vpack.c.b16 %v962, %v961
      %v969 = vpack.c.b16 %v964, %v963
      %v970 = vpack.c.b16 %v966, %v965
      %975 = vmatprep.subr.bf16.mxu0 0
      %976 = vmatpush1.bf16.msra.mxu0 %v967
      %977 = vmatprep.subr.bf16.mxu0 0
      %978 = vmatpush1.bf16.msra.mxu0 %v968
      %979 = vmatprep.subr.bf16.mxu0 0
      %980 = vmatpush1.bf16.msra.mxu0 %v969
      %981 = vmatprep.subr.bf16.mxu0 0
      %982 = vmatpush1.bf16.msra.mxu0 %v970
      %983 = vmatprep.subr.bf16.mxu0 0
      %984 = vmatpush1.bf16.msra.mxu0 0
      %985 = vmatprep.subr.bf16.mxu0 0
      %986 = vmatpush1.bf16.msra.mxu0 0
      %987 = vmatprep.subr.bf16.mxu0 0
      %988 = vmatpush1.bf16.msra.mxu0 0
      %989 = vmatprep.subr.bf16.mxu0 0
      %990 = vmatpush1.bf16.msra.mxu0 0
      %991 = vmatprep.subr.bf16.mxu0 0
      %992 = vmatpush1.bf16.msra.mxu0 0
      %993 = vmatprep.subr.bf16.mxu0 0
      %994 = vmatpush1.bf16.msra.mxu0 0
      %995 = vmatprep.subr.bf16.mxu0 0
      %996 = vmatpush1.bf16.msra.mxu0 0
      %997 = vmatprep.subr.bf16.mxu0 0
      %998 = vmatpush1.bf16.msra.mxu0 0
      %999 = vmatprep.subr.bf16.mxu0 0
      %1000 = vmatpush1.bf16.msra.mxu0 0
      %1001 = vmatprep.subr.bf16.mxu0 0
      %1002 = vmatpush1.bf16.msra.mxu0 0
      %1003 = vmatprep.subr.bf16.mxu0 0
      %1004 = vmatpush1.bf16.msra.mxu0 0
      %1005 = vmatprep.subr.bf16.mxu0 0
      %1006 = vmatpush1.bf16.msra.mxu0 0
      %1007 = vmatprep.mubr.bf16.mxu0 0
      %1008 = vmatmul.mubr.bf16.gmra.mrb[0].mxu0 %v815
      %v1009 = vpop.f32.mrb[0].mxu0
      %v1010 = vadd.f32 %v949, %v1009
      %v1011 = vpop.f32.mrb[0].mxu0
      %v1012 = vpop.f32.mrb[0].mxu0
      %v1013 = vpop.f32.mrb[0].mxu0
      %1014 = vdwg.mxu0
      %v1015 = vmul.f32 %v852, %v735
      %v1016 = vpack.c.bf16 %v852, %v852
      %v1021 = vunpack.c.l.b16 %v737
      %v1022 = vunpack.c.l.b16 %v738
      %v1023 = vunpack.c.l.b16 %v739
      %v1024 = vunpack.c.l.b16 %v740
      %v1025 = vpack.c.b16 %v1022, %v1021
      %v1026 = vpack.c.b16 %v1024, %v1023
      %vm1029 = vcmask 261120
      %v1031 = vsel %vm1029, %v1016, 0
      %1033 = vmatprep.subr.bf16.mxu0 0
      %1034 = vmatpush1.bf16.msra.mxu0 %v1025
      %1035 = vmatprep.subr.bf16.mxu0 0
      %1036 = vmatpush1.bf16.msra.mxu0 %v1026
      %1037 = vmatprep.subr.bf16.mxu0 0
      %1038 = vmatpush1.bf16.msra.mxu0 0
      %1039 = vmatprep.subr.bf16.mxu0 0
      %1040 = vmatpush1.bf16.msra.mxu0 0
      %1041 = vmatprep.subr.bf16.mxu0 0
      %1042 = vmatpush1.bf16.msra.mxu0 0
      %1043 = vmatprep.subr.bf16.mxu0 0
      %1044 = vmatpush1.bf16.msra.mxu0 0
      %1045 = vmatprep.subr.bf16.mxu0 0
      %1046 = vmatpush1.bf16.msra.mxu0 0
      %1047 = vmatprep.subr.bf16.mxu0 0
      %1048 = vmatpush1.bf16.msra.mxu0 0
      %1049 = vmatprep.subr.bf16.mxu0 0
      %1050 = vmatpush1.bf16.msra.mxu0 0
      %1051 = vmatprep.subr.bf16.mxu0 0
      %1052 = vmatpush1.bf16.msra.mxu0 0
      %1053 = vmatprep.subr.bf16.mxu0 0
      %1054 = vmatpush1.bf16.msra.mxu0 0
      %1055 = vmatprep.subr.bf16.mxu0 0
      %1056 = vmatpush1.bf16.msra.mxu0 0
      %1057 = vmatprep.subr.bf16.mxu0 0
      %1058 = vmatpush1.bf16.msra.mxu0 0
      %1059 = vmatprep.subr.bf16.mxu0 0
      %1060 = vmatpush1.bf16.msra.mxu0 0
      %1061 = vmatprep.subr.bf16.mxu0 0
      %1062 = vmatpush1.bf16.msra.mxu0 0
      %1063 = vmatprep.subr.bf16.mxu0 0
      %1064 = vmatpush1.bf16.msra.mxu0 0
      %1065 = vmatprep.mubr.bf16.mxu0 0
      %1066 = vmatmul.mubr.bf16.gmra.mrb[0].mxu0 %v1031
      %v1067 = vpop.f32.mrb[0].mxu0
      %v1068 = vadd.f32 0.0, %v1067
      %v1069 = vpop.f32.mrb[0].mxu0
      %v1070 = vpop.f32.mrb[0].mxu0
      %v1071 = vpop.f32.mrb[0].mxu0
      %1072 = vdwg.mxu0
      %v1073 = vmul.f32 %v1068, %v736
      %v1074 = vadd.f32 %v1015, %v1073
      %v1075 = vmul.f32 %v931, %v735
      %v1076 = vpack.c.bf16 %v931, %v931
      %v1078 = vsel %vm1029, %v1076, 0
      %1080 = vmatprep.subr.bf16.mxu0 0
      %1081 = vmatpush1.bf16.msra.mxu0 %v1025
      %1082 = vmatprep.subr.bf16.mxu0 0
      %1083 = vmatpush1.bf16.msra.mxu0 %v1026
      %1084 = vmatprep.subr.bf16.mxu0 0
      %1085 = vmatpush1.bf16.msra.mxu0 0
      %1086 = vmatprep.subr.bf16.mxu0 0
      %1087 = vmatpush1.bf16.msra.mxu0 0
      %1088 = vmatprep.subr.bf16.mxu0 0
      %1089 = vmatpush1.bf16.msra.mxu0 0
      %1090 = vmatprep.subr.bf16.mxu0 0
      %1091 = vmatpush1.bf16.msra.mxu0 0
      %1092 = vmatprep.subr.bf16.mxu0 0
      %1093 = vmatpush1.bf16.msra.mxu0 0
      %1094 = vmatprep.subr.bf16.mxu0 0
      %1095 = vmatpush1.bf16.msra.mxu0 0
      %1096 = vmatprep.subr.bf16.mxu0 0
      %1097 = vmatpush1.bf16.msra.mxu0 0
      %1098 = vmatprep.subr.bf16.mxu0 0
      %1099 = vmatpush1.bf16.msra.mxu0 0
      %1100 = vmatprep.subr.bf16.mxu0 0
      %1101 = vmatpush1.bf16.msra.mxu0 0
      %1102 = vmatprep.subr.bf16.mxu0 0
      %1103 = vmatpush1.bf16.msra.mxu0 0
      %1104 = vmatprep.subr.bf16.mxu0 0
      %1105 = vmatpush1.bf16.msra.mxu0 0
      %1106 = vmatprep.subr.bf16.mxu0 0
      %1107 = vmatpush1.bf16.msra.mxu0 0
      %1108 = vmatprep.subr.bf16.mxu0 0
      %1109 = vmatpush1.bf16.msra.mxu0 0
      %1110 = vmatprep.subr.bf16.mxu0 0
      %1111 = vmatpush1.bf16.msra.mxu0 0
      %1112 = vmatprep.mubr.bf16.mxu0 0
      %1113 = vmatmul.mubr.bf16.gmra.mrb[0].mxu0 %v1078
      %v1114 = vpop.f32.mrb[0].mxu0
      %v1115 = vadd.f32 0.0, %v1114
      %v1116 = vpop.f32.mrb[0].mxu0
      %v1117 = vpop.f32.mrb[0].mxu0
      %v1118 = vpop.f32.mrb[0].mxu0
      %1119 = vdwg.mxu0
      %v1120 = vmul.f32 %v1115, %v736
      %v1121 = vadd.f32 %v1075, %v1120
      %v1122 = vpack.c.bf16 %v1074, %v1074
      %v1123 = vpack.c.bf16 %v1121, %v1121
      %v1125 = vsel %vm1029, %v1122, 0
      %v1128 = vsel %vm1029, %v1123, 0
      %1130 = vmatprep.subr.bf16.mxu0 0
      %1131 = vmatpush1.bf16.xpose.msra.mxu0 %v1128
      %1132 = vmatprep.subr.bf16.mxu0 0
      %1133 = vmatpush1.bf16.xpose.msra.mxu0 0
      %1134 = vmatprep.subr.bf16.mxu0 0
      %1135 = vmatpush1.bf16.xpose.msra.mxu0 0
      %1136 = vmatprep.subr.bf16.mxu0 0
      %1137 = vmatpush1.bf16.xpose.msra.mxu0 0
      %1138 = vmatprep.subr.bf16.mxu0 0
      %1139 = vmatpush1.bf16.xpose.msra.mxu0 0
      %1140 = vmatprep.subr.bf16.mxu0 0
      %1141 = vmatpush1.bf16.xpose.msra.mxu0 0
      %1142 = vmatprep.subr.bf16.mxu0 0
      %1143 = vmatpush1.bf16.xpose.msra.mxu0 0
      %1144 = vmatprep.subr.bf16.mxu0 0
      %1145 = vmatpush1.bf16.xpose.msra.mxu0 0
      %1146 = vmatprep.subr.bf16.mxu0 0
      %1147 = vmatpush1.bf16.xpose.msra.mxu0 0
      %1148 = vmatprep.subr.bf16.mxu0 0
      %1149 = vmatpush1.bf16.xpose.msra.mxu0 0
      %1150 = vmatprep.subr.bf16.mxu0 0
      %1151 = vmatpush1.bf16.xpose.msra.mxu0 0
      %1152 = vmatprep.subr.bf16.mxu0 0
      %1153 = vmatpush1.bf16.xpose.msra.mxu0 0
      %1154 = vmatprep.subr.bf16.mxu0 0
      %1155 = vmatpush1.bf16.xpose.msra.mxu0 0
      %1156 = vmatprep.subr.bf16.mxu0 0
      %1157 = vmatpush1.bf16.xpose.msra.mxu0 0
      %1158 = vmatprep.subr.bf16.mxu0 0
      %1159 = vmatpush1.bf16.xpose.msra.mxu0 0
      %1160 = vmatprep.subr.bf16.mxu0 0
      %1161 = vmatpush1.bf16.xpose.msra.mxu0 0
      %1162 = vmatprep.mubr.bf16.mxu0 0
      %1163 = vmatmul.mubr.bf16.gmra.mrb[0].mxu0 %v1125
      %v1164 = vpop.f32.mrb[0].mxu0
      %v1165 = vadd.f32 %v741, %v1164
      %v1166 = vpop.f32.mrb[0].mxu0
      %v1167 = vpop.f32.mrb[0].mxu0
      %v1168 = vpop.f32.mrb[0].mxu0
      %1169 = vdwg.mxu0
      %vm1170 = vcmask 64512
      %v1171 = vsel %vm1170, %v1165, -inf
      %1172 = vmax.xlane.f32.xlu0 %v1171
      %v1173 = vpop.xlane.xlu0 %1172
      %v1174 = vsub.f32 %v1165, %v1173
      %v1175 = vmul.f32 %v1174, 1.442695
      %v1176 = vpow.pop %v1175
      %v1177 = vsel %vm1170, %v1176, 0.0
      %1178 = vadd.xlane.f32.xlu0 %v1177
      %v1179 = vpop.xlane.xlu0 %1178
      %v1180 = vrcp.pop %v1179
      %v1181 = vmul.f32 %v1176, %v1180
      %v1182 = vpack.c.bf16 %v1181, %v1181
      %v1183 = vpack.c.bf16 %v1010, %v1010
      %v1185 = vsel %vm1170, %v1182, 0
      %vm1187 = vcmask 1043456
      %v1189 = vsel %vm1187, %v1183, 0
      %1191 = vmatprep.subr.bf16.mxu0 0
      %1192 = vmatpush1.bf16.msra.mxu0 %v1189
      %1193 = vmatprep.subr.bf16.mxu0 0
      %1194 = vmatpush1.bf16.msra.mxu0 0
      %1195 = vmatprep.subr.bf16.mxu0 0
      %1196 = vmatpush1.bf16.msra.mxu0 0
      %1197 = vmatprep.subr.bf16.mxu0 0
      %1198 = vmatpush1.bf16.msra.mxu0 0
      %1199 = vmatprep.subr.bf16.mxu0 0
      %1200 = vmatpush1.bf16.msra.mxu0 0
      %1201 = vmatprep.subr.bf16.mxu0 0
      %1202 = vmatpush1.bf16.msra.mxu0 0
      %1203 = vmatprep.subr.bf16.mxu0 0
      %1204 = vmatpush1.bf16.msra.mxu0 0
      %1205 = vmatprep.subr.bf16.mxu0 0
      %1206 = vmatpush1.bf16.msra.mxu0 0
      %1207 = vmatprep.subr.bf16.mxu0 0
      %1208 = vmatpush1.bf16.msra.mxu0 0
      %1209 = vmatprep.subr.bf16.mxu0 0
      %1210 = vmatpush1.bf16.msra.mxu0 0
      %1211 = vmatprep.subr.bf16.mxu0 0
      %1212 = vmatpush1.bf16.msra.mxu0 0
      %1213 = vmatprep.subr.bf16.mxu0 0
      %1214 = vmatpush1.bf16.msra.mxu0 0
      %1215 = vmatprep.subr.bf16.mxu0 0
      %1216 = vmatpush1.bf16.msra.mxu0 0
      %1217 = vmatprep.subr.bf16.mxu0 0
      %1218 = vmatpush1.bf16.msra.mxu0 0
      %1219 = vmatprep.subr.bf16.mxu0 0
      %1220 = vmatpush1.bf16.msra.mxu0 0
      %1221 = vmatprep.subr.bf16.mxu0 0
      %1222 = vmatpush1.bf16.msra.mxu0 0
      %1223 = vmatprep.mubr.bf16.mxu0 0
      %1224 = vmatmul.mubr.bf16.gmra.mrb[0].mxu0 %v1185
      %v1225 = vpop.f32.mrb[0].mxu0
      %v1226 = vadd.f32 0.0, %v1225
      %v1227 = vpop.f32.mrb[0].mxu0
      %v1228 = vpop.f32.mrb[0].mxu0
      %v1229 = vpop.f32.mrb[0].mxu0
      %1230 = vdwg.mxu0
      %v1231 = vpack.c.bf16 %v1226, %v1226
      %v1232 = vld [vmem:[%s15] sm:$0xf]
      %v1233 = vld [vmem:[%s15 + $0x4] sm:$0xf]
      %v1234 = vld [vmem:[%s15 + $0x8] sm:$0xf]
      %v1235 = vld [vmem:[%s15 + $0xc] sm:$0xf]
      %v1240 = vunpack.c.l.b16 %v1232
      %v1241 = vunpack.c.l.b16 %v1233
      %v1242 = vunpack.c.l.b16 %v1234
      %v1243 = vunpack.c.l.b16 %v1235
      %v1244 = vpack.c.b16 %v1241, %v1240
      %v1245 = vpack.c.b16 %v1243, %v1242
      %v1249 = vsel %vm1029, %v1231, 0
      %1251 = vmatprep.subr.bf16.mxu0 0
      %1252 = vmatpush1.bf16.msra.mxu0 %v1244
      %1253 = vmatprep.subr.bf16.mxu0 0
      %1254 = vmatpush1.bf16.msra.mxu0 %v1245
      %1255 = vmatprep.subr.bf16.mxu0 0
      %1256 = vmatpush1.bf16.msra.mxu0 0
      %1257 = vmatprep.subr.bf16.mxu0 0
      %1258 = vmatpush1.bf16.msra.mxu0 0
      %1259 = vmatprep.subr.bf16.mxu0 0
      %1260 = vmatpush1.bf16.msra.mxu0 0
      %1261 = vmatprep.subr.bf16.mxu0 0
      %1262 = vmatpush1.bf16.msra.mxu0 0
      %1263 = vmatprep.subr.bf16.mxu0 0
      %1264 = vmatpush1.bf16.msra.mxu0 0
      %1265 = vmatprep.subr.bf16.mxu0 0
      %1266 = vmatpush1.bf16.msra.mxu0 0
      %1267 = vmatprep.subr.bf16.mxu0 0
      %1268 = vmatpush1.bf16.msra.mxu0 0
      %1269 = vmatprep.subr.bf16.mxu0 0
      %1270 = vmatpush1.bf16.msra.mxu0 0
      %1271 = vmatprep.subr.bf16.mxu0 0
      %1272 = vmatpush1.bf16.msra.mxu0 0
      %1273 = vmatprep.subr.bf16.mxu0 0
      %1274 = vmatpush1.bf16.msra.mxu0 0
      %1275 = vmatprep.subr.bf16.mxu0 0
      %1276 = vmatpush1.bf16.msra.mxu0 0
      %1277 = vmatprep.subr.bf16.mxu0 0
      %1278 = vmatpush1.bf16.msra.mxu0 0
      %1279 = vmatprep.subr.bf16.mxu0 0
      %1280 = vmatpush1.bf16.msra.mxu0 0
      %1281 = vmatprep.subr.bf16.mxu0 0
      %1282 = vmatpush1.bf16.msra.mxu0 0
      %1283 = vmatprep.mubr.bf16.mxu0 0
      %1284 = vmatmul.mubr.bf16.gmra.mrb[0].mxu0 %v1249
      %v1285 = vpop.f32.mrb[0].mxu0
      %v1286 = vadd.f32 0.0, %v1285
      %v1287 = vpop.f32.mrb[0].mxu0
      %v1288 = vpop.f32.mrb[0].mxu0
      %v1289 = vpop.f32.mrb[0].mxu0
      %1290 = vdwg.mxu0
      %v1292 = vlaneseq
      %v1293 = vshrl.u32 %v1292, 7
      %v1294 = vsub.s32 0, %v1293
      %v1295 = vrot.slane %v774, %v1294
      %v1297 = vadd.f32 %v1295, %v1286
      %s1298 = scalar_lea.vmem %s9, 32
      %v1299 = vld [vmem:[%s1298] sm:$0xf]
      %v1300 = vld [vmem:[%s1298 + $0x4] sm:$0xf]
      %v1301 = vld [vmem:[%s1298 + $0x8] sm:$0xf]
      %v1302 = vld [vmem:[%s1298 + $0xc] sm:$0xf]
      %v1303 = vld [vmem:[%s1298 + $0x10] sm:$0xf]
      %v1304 = vld [vmem:[%s1298 + $0x14] sm:$0xf]
      %v1305 = vld [vmem:[%s1298 + $0x18] sm:$0xf]
      %v1306 = vld [vmem:[%s1298 + $0x1c] sm:$0xf]
      %s1307 = scalar_lea.vmem %s10, 1
      %v1308 = vld [vmem:[%s1307] sm:$0x1]
      %v1310 = vlaneseq
      %v1311 = vshrl.u32 %v1310, 7
      %v1312 = vsub.s32 0, %v1311
      %v1313 = vrot.slane %v1308, %v1312
      %v1323 = vunpack.c.l.b16 %v1299
      %v1324 = vunpack.c.l.b16 %v1300
      %v1325 = vunpack.c.l.b16 %v1301
      %v1326 = vunpack.c.l.b16 %v1302
      %v1327 = vunpack.c.l.b16 %v1303
      %v1328 = vunpack.c.l.b16 %v1304
      %v1329 = vunpack.c.l.b16 %v1305
      %v1330 = vunpack.c.l.b16 %v1306
      %v1331 = vpack.c.b16 %v1324, %v1323
      %v1332 = vpack.c.b16 %v1326, %v1325
      %v1333 = vpack.c.b16 %v1328, %v1327
      %v1334 = vpack.c.b16 %v1330, %v1329
      %1339 = vmatprep.subr.bf16.mxu0 0
      %1340 = vmatpush1.bf16.msra.mxu0 %v1331
      %1341 = vmatprep.subr.bf16.mxu0 0
      %1342 = vmatpush1.bf16.msra.mxu0 %v1332
      %1343 = vmatprep.subr.bf16.mxu0 0
      %1344 = vmatpush1.bf16.msra.mxu0 %v1333
      %1345 = vmatprep.subr.bf16.mxu0 0
      %1346 = vmatpush1.bf16.msra.mxu0 %v1334
      %1347 = vmatprep.subr.bf16.mxu0 0
      %1348 = vmatpush1.bf16.msra.mxu0 0
      %1349 = vmatprep.subr.bf16.mxu0 0
      %1350 = vmatpush1.bf16.msra.mxu0 0
      %1351 = vmatprep.subr.bf16.mxu0 0
      %1352 = vmatpush1.bf16.msra.mxu0 0
      %1353 = vmatprep.subr.bf16.mxu0 0
      %1354 = vmatpush1.bf16.msra.mxu0 0
      %1355 = vmatprep.subr.bf16.mxu0 0
      %1356 = vmatpush1.bf16.msra.mxu0 0
      %1357 = vmatprep.subr.bf16.mxu0 0
      %1358 = vmatpush1.bf16.msra.mxu0 0
      %1359 = vmatprep.subr.bf16.mxu0 0
      %1360 = vmatpush1.bf16.msra.mxu0 0
      %1361 = vmatprep.subr.bf16.mxu0 0
      %1362 = vmatpush1.bf16.msra.mxu0 0
      %1363 = vmatprep.subr.bf16.mxu0 0
      %1364 = vmatpush1.bf16.msra.mxu0 0
      %1365 = vmatprep.subr.bf16.mxu0 0
      %1366 = vmatpush1.bf16.msra.mxu0 0
      %1367 = vmatprep.subr.bf16.mxu0 0
      %1368 = vmatpush1.bf16.msra.mxu0 0
      %1369 = vmatprep.subr.bf16.mxu0 0
      %1370 = vmatpush1.bf16.msra.mxu0 0
      %1371 = vmatprep.mubr.bf16.mxu0 0
      %1372 = vmatmul.mubr.bf16.gmra.mrb[0].mxu0 %v815
      %v1373 = vpop.f32.mrb[0].mxu0
      %v1374 = vadd.f32 %v1313, %v1373
      %v1375 = vpop.f32.mrb[0].mxu0
      %v1376 = vpop.f32.mrb[0].mxu0
      %v1377 = vpop.f32.mrb[0].mxu0
      %1378 = vdwg.mxu0
      %s1379 = scalar_lea.vmem %s11, 32
      %v1380 = vld [vmem:[%s1379] sm:$0xf]
      %v1381 = vld [vmem:[%s1379 + $0x4] sm:$0xf]
      %v1382 = vld [vmem:[%s1379 + $0x8] sm:$0xf]
      %v1383 = vld [vmem:[%s1379 + $0xc] sm:$0xf]
      %v1384 = vld [vmem:[%s1379 + $0x10] sm:$0xf]
      %v1385 = vld [vmem:[%s1379 + $0x14] sm:$0xf]
      %v1386 = vld [vmem:[%s1379 + $0x18] sm:$0xf]
      %v1387 = vld [vmem:[%s1379 + $0x1c] sm:$0xf]
      %s1388 = scalar_lea.vmem %s12, 1
      %v1389 = vld [vmem:[%s1388] sm:$0x1]
      %v1391 = vlaneseq
      %v1392 = vshrl.u32 %v1391, 7
      %v1393 = vsub.s32 0, %v1392
      %v1394 = vrot.slane %v1389, %v1393
      %v1404 = vunpack.c.l.b16 %v1380
      %v1405 = vunpack.c.l.b16 %v1381
      %v1406 = vunpack.c.l.b16 %v1382
      %v1407 = vunpack.c.l.b16 %v1383
      %v1408 = vunpack.c.l.b16 %v1384
      %v1409 = vunpack.c.l.b16 %v1385
      %v1410 = vunpack.c.l.b16 %v1386
      %v1411 = vunpack.c.l.b16 %v1387
      %v1412 = vpack.c.b16 %v1405, %v1404
      %v1413 = vpack.c.b16 %v1407, %v1406
      %v1414 = vpack.c.b16 %v1409, %v1408
      %v1415 = vpack.c.b16 %v1411, %v1410
      %1420 = vmatprep.subr.bf16.mxu0 0
      %1421 = vmatpush1.bf16.msra.mxu0 %v1412
      %1422 = vmatprep.subr.bf16.mxu0 0
      %1423 = vmatpush1.bf16.msra.mxu0 %v1413
      %1424 = vmatprep.subr.bf16.mxu0 0
      %1425 = vmatpush1.bf16.msra.mxu0 %v1414
      %1426 = vmatprep.subr.bf16.mxu0 0
      %1427 = vmatpush1.bf16.msra.mxu0 %v1415
      %1428 = vmatprep.subr.bf16.mxu0 0
      %1429 = vmatpush1.bf16.msra.mxu0 0
      %1430 = vmatprep.subr.bf16.mxu0 0
      %1431 = vmatpush1.bf16.msra.mxu0 0
      %1432 = vmatprep.subr.bf16.mxu0 0
      %1433 = vmatpush1.bf16.msra.mxu0 0
      %1434 = vmatprep.subr.bf16.mxu0 0
      %1435 = vmatpush1.bf16.msra.mxu0 0
      %1436 = vmatprep.subr.bf16.mxu0 0
      %1437 = vmatpush1.bf16.msra.mxu0 0
      %1438 = vmatprep.subr.bf16.mxu0 0
      %1439 = vmatpush1.bf16.msra.mxu0 0
      %1440 = vmatprep.subr.bf16.mxu0 0
      %1441 = vmatpush1.bf16.msra.mxu0 0
      %1442 = vmatprep.subr.bf16.mxu0 0
      %1443 = vmatpush1.bf16.msra.mxu0 0
      %1444 = vmatprep.subr.bf16.mxu0 0
      %1445 = vmatpush1.bf16.msra.mxu0 0
      %1446 = vmatprep.subr.bf16.mxu0 0
      %1447 = vmatpush1.bf16.msra.mxu0 0
      %1448 = vmatprep.subr.bf16.mxu0 0
      %1449 = vmatpush1.bf16.msra.mxu0 0
      %1450 = vmatprep.subr.bf16.mxu0 0
      %1451 = vmatpush1.bf16.msra.mxu0 0
      %1452 = vmatprep.mubr.bf16.mxu0 0
      %1453 = vmatmul.mubr.bf16.gmra.mrb[0].mxu0 %v815
      %v1454 = vpop.f32.mrb[0].mxu0
      %v1455 = vadd.f32 %v1394, %v1454
      %v1456 = vpop.f32.mrb[0].mxu0
      %v1457 = vpop.f32.mrb[0].mxu0
      %v1458 = vpop.f32.mrb[0].mxu0
      %1459 = vdwg.mxu0
      %s1460 = scalar_lea.vmem %s13, 32
      %v1461 = vld [vmem:[%s1460] sm:$0xf]
      %v1462 = vld [vmem:[%s1460 + $0x4] sm:$0xf]
      %v1463 = vld [vmem:[%s1460 + $0x8] sm:$0xf]
      %v1464 = vld [vmem:[%s1460 + $0xc] sm:$0xf]
      %v1465 = vld [vmem:[%s1460 + $0x10] sm:$0xf]
      %v1466 = vld [vmem:[%s1460 + $0x14] sm:$0xf]
      %v1467 = vld [vmem:[%s1460 + $0x18] sm:$0xf]
      %v1468 = vld [vmem:[%s1460 + $0x1c] sm:$0xf]
      %s1469 = scalar_lea.vmem %s14, 1
      %v1470 = vld [vmem:[%s1469] sm:$0x1]
      %v1472 = vlaneseq
      %v1473 = vshrl.u32 %v1472, 7
      %v1474 = vsub.s32 0, %v1473
      %v1475 = vrot.slane %v1470, %v1474
      %v1485 = vunpack.c.l.b16 %v1461
      %v1486 = vunpack.c.l.b16 %v1462
      %v1487 = vunpack.c.l.b16 %v1463
      %v1488 = vunpack.c.l.b16 %v1464
      %v1489 = vunpack.c.l.b16 %v1465
      %v1490 = vunpack.c.l.b16 %v1466
      %v1491 = vunpack.c.l.b16 %v1467
      %v1492 = vunpack.c.l.b16 %v1468
      %v1493 = vpack.c.b16 %v1486, %v1485
      %v1494 = vpack.c.b16 %v1488, %v1487
      %v1495 = vpack.c.b16 %v1490, %v1489
      %v1496 = vpack.c.b16 %v1492, %v1491
      %1501 = vmatprep.subr.bf16.mxu0 0
      %1502 = vmatpush1.bf16.msra.mxu0 %v1493
      %1503 = vmatprep.subr.bf16.mxu0 0
      %1504 = vmatpush1.bf16.msra.mxu0 %v1494
      %1505 = vmatprep.subr.bf16.mxu0 0
      %1506 = vmatpush1.bf16.msra.mxu0 %v1495
      %1507 = vmatprep.subr.bf16.mxu0 0
      %1508 = vmatpush1.bf16.msra.mxu0 %v1496
      %1509 = vmatprep.subr.bf16.mxu0 0
      %1510 = vmatpush1.bf16.msra.mxu0 0
      %1511 = vmatprep.subr.bf16.mxu0 0
      %1512 = vmatpush1.bf16.msra.mxu0 0
      %1513 = vmatprep.subr.bf16.mxu0 0
      %1514 = vmatpush1.bf16.msra.mxu0 0
      %1515 = vmatprep.subr.bf16.mxu0 0
      %1516 = vmatpush1.bf16.msra.mxu0 0
      %1517 = vmatprep.subr.bf16.mxu0 0
      %1518 = vmatpush1.bf16.msra.mxu0 0
      %1519 = vmatprep.subr.bf16.mxu0 0
      %1520 = vmatpush1.bf16.msra.mxu0 0
      %1521 = vmatprep.subr.bf16.mxu0 0
      %1522 = vmatpush1.bf16.msra.mxu0 0
      %1523 = vmatprep.subr.bf16.mxu0 0
      %1524 = vmatpush1.bf16.msra.mxu0 0
      %1525 = vmatprep.subr.bf16.mxu0 0
      %1526 = vmatpush1.bf16.msra.mxu0 0
      %1527 = vmatprep.subr.bf16.mxu0 0
      %1528 = vmatpush1.bf16.msra.mxu0 0
      %1529 = vmatprep.subr.bf16.mxu0 0
      %1530 = vmatpush1.bf16.msra.mxu0 0
      %1531 = vmatprep.subr.bf16.mxu0 0
      %1532 = vmatpush1.bf16.msra.mxu0 0
      %1533 = vmatprep.mubr.bf16.mxu0 0
      %1534 = vmatmul.mubr.bf16.gmra.mrb[0].mxu0 %v815
      %v1535 = vpop.f32.mrb[0].mxu0
      %v1536 = vadd.f32 %v1475, %v1535
      %v1537 = vpop.f32.mrb[0].mxu0
      %v1538 = vpop.f32.mrb[0].mxu0
      %v1539 = vpop.f32.mrb[0].mxu0
      %1540 = vdwg.mxu0
      %v1541 = vmul.f32 %v1374, %v735
      %v1542 = vpack.c.bf16 %v1374, %v1374
      %v1544 = vsel %vm1029, %v1542, 0
      %1546 = vmatprep.subr.bf16.mxu0 0
      %1547 = vmatpush1.bf16.msra.mxu0 %v1025
      %1548 = vmatprep.subr.bf16.mxu0 0
      %1549 = vmatpush1.bf16.msra.mxu0 %v1026
      %1550 = vmatprep.subr.bf16.mxu0 0
      %1551 = vmatpush1.bf16.msra.mxu0 0
      %1552 = vmatprep.subr.bf16.mxu0 0
      %1553 = vmatpush1.bf16.msra.mxu0 0
      %1554 = vmatprep.subr.bf16.mxu0 0
      %1555 = vmatpush1.bf16.msra.mxu0 0
      %1556 = vmatprep.subr.bf16.mxu0 0
      %1557 = vmatpush1.bf16.msra.mxu0 0
      %1558 = vmatprep.subr.bf16.mxu0 0
      %1559 = vmatpush1.bf16.msra.mxu0 0
      %1560 = vmatprep.subr.bf16.mxu0 0
      %1561 = vmatpush1.bf16.msra.mxu0 0
      %1562 = vmatprep.subr.bf16.mxu0 0
      %1563 = vmatpush1.bf16.msra.mxu0 0
      %1564 = vmatprep.subr.bf16.mxu0 0
      %1565 = vmatpush1.bf16.msra.mxu0 0
      %1566 = vmatprep.subr.bf16.mxu0 0
      %1567 = vmatpush1.bf16.msra.mxu0 0
      %1568 = vmatprep.subr.bf16.mxu0 0
      %1569 = vmatpush1.bf16.msra.mxu0 0
      %1570 = vmatprep.subr.bf16.mxu0 0
      %1571 = vmatpush1.bf16.msra.mxu0 0
      %1572 = vmatprep.subr.bf16.mxu0 0
      %1573 = vmatpush1.bf16.msra.mxu0 0
      %1574 = vmatprep.subr.bf16.mxu0 0
      %1575 = vmatpush1.bf16.msra.mxu0 0
      %1576 = vmatprep.subr.bf16.mxu0 0
      %1577 = vmatpush1.bf16.msra.mxu0 0
      %1578 = vmatprep.mubr.bf16.mxu0 0
      %1579 = vmatmul.mubr.bf16.gmra.mrb[0].mxu0 %v1544
      %v1580 = vpop.f32.mrb[0].mxu0
      %v1581 = vadd.f32 0.0, %v1580
      %v1582 = vpop.f32.mrb[0].mxu0
      %v1583 = vpop.f32.mrb[0].mxu0
      %v1584 = vpop.f32.mrb[0].mxu0
      %1585 = vdwg.mxu0
      %v1586 = vmul.f32 %v1581, %v736
      %v1587 = vadd.f32 %v1541, %v1586
      %v1588 = vmul.f32 %v1455, %v735
      %v1589 = vpack.c.bf16 %v1455, %v1455
      %v1591 = vsel %vm1029, %v1589, 0
      %1593 = vmatprep.subr.bf16.mxu0 0
      %1594 = vmatpush1.bf16.msra.mxu0 %v1025
      %1595 = vmatprep.subr.bf16.mxu0 0
      %1596 = vmatpush1.bf16.msra.mxu0 %v1026
      %1597 = vmatprep.subr.bf16.mxu0 0
      %1598 = vmatpush1.bf16.msra.mxu0 0
      %1599 = vmatprep.subr.bf16.mxu0 0
      %1600 = vmatpush1.bf16.msra.mxu0 0
      %1601 = vmatprep.subr.bf16.mxu0 0
      %1602 = vmatpush1.bf16.msra.mxu0 0
      %1603 = vmatprep.subr.bf16.mxu0 0
      %1604 = vmatpush1.bf16.msra.mxu0 0
      %1605 = vmatprep.subr.bf16.mxu0 0
      %1606 = vmatpush1.bf16.msra.mxu0 0
      %1607 = vmatprep.subr.bf16.mxu0 0
      %1608 = vmatpush1.bf16.msra.mxu0 0
      %1609 = vmatprep.subr.bf16.mxu0 0
      %1610 = vmatpush1.bf16.msra.mxu0 0
      %1611 = vmatprep.subr.bf16.mxu0 0
      %1612 = vmatpush1.bf16.msra.mxu0 0
      %1613 = vmatprep.subr.bf16.mxu0 0
      %1614 = vmatpush1.bf16.msra.mxu0 0
      %1615 = vmatprep.subr.bf16.mxu0 0
      %1616 = vmatpush1.bf16.msra.mxu0 0
      %1617 = vmatprep.subr.bf16.mxu0 0
      %1618 = vmatpush1.bf16.msra.mxu0 0
      %1619 = vmatprep.subr.bf16.mxu0 0
      %1620 = vmatpush1.bf16.msra.mxu0 0
      %1621 = vmatprep.subr.bf16.mxu0 0
      %1622 = vmatpush1.bf16.msra.mxu0 0
      %1623 = vmatprep.subr.bf16.mxu0 0
      %1624 = vmatpush1.bf16.msra.mxu0 0
      %1625 = vmatprep.mubr.bf16.mxu0 0
      %1626 = vmatmul.mubr.bf16.gmra.mrb[0].mxu0 %v1591
      %v1627 = vpop.f32.mrb[0].mxu0
      %v1628 = vadd.f32 0.0, %v1627
      %v1629 = vpop.f32.mrb[0].mxu0
      %v1630 = vpop.f32.mrb[0].mxu0
      %v1631 = vpop.f32.mrb[0].mxu0
      %1632 = vdwg.mxu0
      %v1633 = vmul.f32 %v1628, %v736
      %v1634 = vadd.f32 %v1588, %v1633
      %v1635 = vpack.c.bf16 %v1587, %v1587
      %v1636 = vpack.c.bf16 %v1634, %v1634
      %v1638 = vsel %vm1029, %v1635, 0
      %v1641 = vsel %vm1029, %v1636, 0
      %1643 = vmatprep.subr.bf16.mxu0 0
      %1644 = vmatpush1.bf16.xpose.msra.mxu0 %v1641
      %1645 = vmatprep.subr.bf16.mxu0 0
      %1646 = vmatpush1.bf16.xpose.msra.mxu0 0
      %1647 = vmatprep.subr.bf16.mxu0 0
      %1648 = vmatpush1.bf16.xpose.msra.mxu0 0
      %1649 = vmatprep.subr.bf16.mxu0 0
      %1650 = vmatpush1.bf16.xpose.msra.mxu0 0
      %1651 = vmatprep.subr.bf16.mxu0 0
      %1652 = vmatpush1.bf16.xpose.msra.mxu0 0
      %1653 = vmatprep.subr.bf16.mxu0 0
      %1654 = vmatpush1.bf16.xpose.msra.mxu0 0
      %1655 = vmatprep.subr.bf16.mxu0 0
      %1656 = vmatpush1.bf16.xpose.msra.mxu0 0
      %1657 = vmatprep.subr.bf16.mxu0 0
      %1658 = vmatpush1.bf16.xpose.msra.mxu0 0
      %1659 = vmatprep.subr.bf16.mxu0 0
      %1660 = vmatpush1.bf16.xpose.msra.mxu0 0
      %1661 = vmatprep.subr.bf16.mxu0 0
      %1662 = vmatpush1.bf16.xpose.msra.mxu0 0
      %1663 = vmatprep.subr.bf16.mxu0 0
      %1664 = vmatpush1.bf16.xpose.msra.mxu0 0
      %1665 = vmatprep.subr.bf16.mxu0 0
      %1666 = vmatpush1.bf16.xpose.msra.mxu0 0
      %1667 = vmatprep.subr.bf16.mxu0 0
      %1668 = vmatpush1.bf16.xpose.msra.mxu0 0
      %1669 = vmatprep.subr.bf16.mxu0 0
      %1670 = vmatpush1.bf16.xpose.msra.mxu0 0
      %1671 = vmatprep.subr.bf16.mxu0 0
      %1672 = vmatpush1.bf16.xpose.msra.mxu0 0
      %1673 = vmatprep.subr.bf16.mxu0 0
      %1674 = vmatpush1.bf16.xpose.msra.mxu0 0
      %1675 = vmatprep.mubr.bf16.mxu0 0
      %1676 = vmatmul.mubr.bf16.gmra.mrb[0].mxu0 %v1638
      %v1677 = vpop.f32.mrb[0].mxu0
      %v1678 = vadd.f32 %v741, %v1677
      %v1679 = vpop.f32.mrb[0].mxu0
      %v1680 = vpop.f32.mrb[0].mxu0
      %v1681 = vpop.f32.mrb[0].mxu0
      %1682 = vdwg.mxu0
      %v1683 = vsel %vm1170, %v1678, -inf
      %1684 = vmax.xlane.f32.xlu0 %v1683
      %v1685 = vpop.xlane.xlu0 %1684
      %v1686 = vsub.f32 %v1678, %v1685
      %v1687 = vmul.f32 %v1686, 1.442695
      %v1688 = vpow.pop %v1687
      %v1689 = vsel %vm1170, %v1688, 0.0
      %1690 = vadd.xlane.f32.xlu0 %v1689
      %v1691 = vpop.xlane.xlu0 %1690
      %v1692 = vrcp.pop %v1691
      %v1693 = vmul.f32 %v1688, %v1692
      %v1694 = vpack.c.bf16 %v1693, %v1693
      %v1695 = vpack.c.bf16 %v1536, %v1536
      %v1697 = vsel %vm1170, %v1694, 0
      %v1700 = vsel %vm1187, %v1695, 0
      %1702 = vmatprep.subr.bf16.mxu0 0
      %1703 = vmatpush1.bf16.msra.mxu0 %v1700
      %1704 = vmatprep.subr.bf16.mxu0 0
      %1705 = vmatpush1.bf16.msra.mxu0 0
      %1706 = vmatprep.subr.bf16.mxu0 0
      %1707 = vmatpush1.bf16.msra.mxu0 0
      %1708 = vmatprep.subr.bf16.mxu0 0
      %1709 = vmatpush1.bf16.msra.mxu0 0
      %1710 = vmatprep.subr.bf16.mxu0 0
      %1711 = vmatpush1.bf16.msra.mxu0 0
      %1712 = vmatprep.subr.bf16.mxu0 0
      %1713 = vmatpush1.bf16.msra.mxu0 0
      %1714 = vmatprep.subr.bf16.mxu0 0
      %1715 = vmatpush1.bf16.msra.mxu0 0
      %1716 = vmatprep.subr.bf16.mxu0 0
      %1717 = vmatpush1.bf16.msra.mxu0 0
      %1718 = vmatprep.subr.bf16.mxu0 0
      %1719 = vmatpush1.bf16.msra.mxu0 0
      %1720 = vmatprep.subr.bf16.mxu0 0
      %1721 = vmatpush1.bf16.msra.mxu0 0
      %1722 = vmatprep.subr.bf16.mxu0 0
      %1723 = vmatpush1.bf16.msra.mxu0 0
      %1724 = vmatprep.subr.bf16.mxu0 0
      %1725 = vmatpush1.bf16.msra.mxu0 0
      %1726 = vmatprep.subr.bf16.mxu0 0
      %1727 = vmatpush1.bf16.msra.mxu0 0
      %1728 = vmatprep.subr.bf16.mxu0 0
      %1729 = vmatpush1.bf16.msra.mxu0 0
      %1730 = vmatprep.subr.bf16.mxu0 0
      %1731 = vmatpush1.bf16.msra.mxu0 0
      %1732 = vmatprep.subr.bf16.mxu0 0
      %1733 = vmatpush1.bf16.msra.mxu0 0
      %1734 = vmatprep.mubr.bf16.mxu0 0
      %1735 = vmatmul.mubr.bf16.gmra.mrb[0].mxu0 %v1697
      %v1736 = vpop.f32.mrb[0].mxu0
      %v1737 = vadd.f32 0.0, %v1736
      %v1738 = vpop.f32.mrb[0].mxu0
      %v1739 = vpop.f32.mrb[0].mxu0
      %v1740 = vpop.f32.mrb[0].mxu0
      %1741 = vdwg.mxu0
      %v1742 = vpack.c.bf16 %v1737, %v1737
      %s1743 = scalar_lea.vmem %s15, 16
      %v1744 = vld [vmem:[%s1743] sm:$0xf]
      %v1745 = vld [vmem:[%s1743 + $0x4] sm:$0xf]
      %v1746 = vld [vmem:[%s1743 + $0x8] sm:$0xf]
      %v1747 = vld [vmem:[%s1743 + $0xc] sm:$0xf]
      %v1752 = vunpack.c.l.b16 %v1744
      %v1753 = vunpack.c.l.b16 %v1745
      %v1754 = vunpack.c.l.b16 %v1746
      %v1755 = vunpack.c.l.b16 %v1747
      %v1756 = vpack.c.b16 %v1753, %v1752
      %v1757 = vpack.c.b16 %v1755, %v1754
      %v1761 = vsel %vm1029, %v1742, 0
      %1763 = vmatprep.subr.bf16.mxu0 0
      %1764 = vmatpush1.bf16.msra.mxu0 %v1756
      %1765 = vmatprep.subr.bf16.mxu0 0
      %1766 = vmatpush1.bf16.msra.mxu0 %v1757
      %1767 = vmatprep.subr.bf16.mxu0 0
      %1768 = vmatpush1.bf16.msra.mxu0 0
      %1769 = vmatprep.subr.bf16.mxu0 0
      %1770 = vmatpush1.bf16.msra.mxu0 0
      %1771 = vmatprep.subr.bf16.mxu0 0
      %1772 = vmatpush1.bf16.msra.mxu0 0
      %1773 = vmatprep.subr.bf16.mxu0 0
      %1774 = vmatpush1.bf16.msra.mxu0 0
      %1775 = vmatprep.subr.bf16.mxu0 0
      %1776 = vmatpush1.bf16.msra.mxu0 0
      %1777 = vmatprep.subr.bf16.mxu0 0
      %1778 = vmatpush1.bf16.msra.mxu0 0
      %1779 = vmatprep.subr.bf16.mxu0 0
      %1780 = vmatpush1.bf16.msra.mxu0 0
      %1781 = vmatprep.subr.bf16.mxu0 0
      %1782 = vmatpush1.bf16.msra.mxu0 0
      %1783 = vmatprep.subr.bf16.mxu0 0
      %1784 = vmatpush1.bf16.msra.mxu0 0
      %1785 = vmatprep.subr.bf16.mxu0 0
      %1786 = vmatpush1.bf16.msra.mxu0 0
      %1787 = vmatprep.subr.bf16.mxu0 0
      %1788 = vmatpush1.bf16.msra.mxu0 0
      %1789 = vmatprep.subr.bf16.mxu0 0
      %1790 = vmatpush1.bf16.msra.mxu0 0
      %1791 = vmatprep.subr.bf16.mxu0 0
      %1792 = vmatpush1.bf16.msra.mxu0 0
      %1793 = vmatprep.subr.bf16.mxu0 0
      %1794 = vmatpush1.bf16.msra.mxu0 0
      %1795 = vmatprep.mubr.bf16.mxu0 0
      %1796 = vmatmul.mubr.bf16.gmra.mrb[0].mxu0 %v1761
      %v1797 = vpop.f32.mrb[0].mxu0
      %v1798 = vadd.f32 0.0, %v1797
      %v1799 = vpop.f32.mrb[0].mxu0
      %v1800 = vpop.f32.mrb[0].mxu0
      %v1801 = vpop.f32.mrb[0].mxu0
      %1802 = vdwg.mxu0
      %v1803 = vadd.f32 %v1297, %v1798
      %v1804 = vld [vmem:[%s7] sm:$0x1]
      %v1805 = vld [vmem:[%s8] sm:$0x1]
      %v1807 = vlaneseq
      %v1808 = vshrl.u32 %v1807, 7
      %v1809 = vsub.s32 0, %v1808
      %v1810 = vrot.slane %v1804, %v1809
      %v1812 = vmul.f32 %v758, %v1810
      %v1814 = vlaneseq
      %v1815 = vshrl.u32 %v1814, 7
      %v1816 = vsub.s32 0, %v1815
      %v1817 = vrot.slane %v1805, %v1816
      %v1819 = vadd.f32 %v1812, %v1817
      %v1820 = vpack.c.bf16 %v1819, %v1819
      %v1821 = vld [vmem:[%s17] sm:$0xff]
      %v1822 = vld [vmem:[%s17 + $0x8] sm:$0xff]
      %v1823 = vld [vmem:[%s17 + $0x10] sm:$0xff]
      %v1824 = vld [vmem:[%s17 + $0x18] sm:$0xff]
      %v1825 = vld [vmem:[%s17 + $0x20] sm:$0xff]
      %v1826 = vld [vmem:[%s17 + $0x28] sm:$0xff]
      %v1827 = vld [vmem:[%s17 + $0x30] sm:$0xff]
      %v1828 = vld [vmem:[%s17 + $0x38] sm:$0xff]
      %v1829 = vld [vmem:[%s18] sm:$0x3]
      %v1831 = vlaneseq
      %v1832 = vshrl.u32 %v1831, 7
      %v1833 = vsub.s32 0, %v1832
      %v1834 = vrot.slane %v1829, %v1833
      %v1835 = vlaneseq
      %v1836 = vshrl.u32 %v1835, 7
      %v1837 = vsub.s32 1, %v1836
      %v1838 = vrot.slane %v1829, %v1837
      %v1849 = vunpack.c.l.b16 %v1821
      %v1850 = vunpack.c.h.b16 %v1821
      %v1851 = vunpack.c.l.b16 %v1822
      %v1852 = vunpack.c.h.b16 %v1822
      %v1853 = vunpack.c.l.b16 %v1823
      %v1854 = vunpack.c.h.b16 %v1823
      %v1855 = vunpack.c.l.b16 %v1824
      %v1856 = vunpack.c.h.b16 %v1824
      %v1857 = vunpack.c.l.b16 %v1825
      %v1858 = vunpack.c.h.b16 %v1825
      %v1859 = vunpack.c.l.b16 %v1826
      %v1860 = vunpack.c.h.b16 %v1826
      %v1861 = vunpack.c.l.b16 %v1827
      %v1862 = vunpack.c.h.b16 %v1827
      %v1863 = vunpack.c.l.b16 %v1828
      %v1864 = vunpack.c.h.b16 %v1828
      %v1865 = vpack.c.b16 %v1851, %v1849
      %v1866 = vpack.c.b16 %v1852, %v1850
      %v1867 = vpack.c.b16 %v1855, %v1853
      %v1868 = vpack.c.b16 %v1856, %v1854
      %v1869 = vpack.c.b16 %v1859, %v1857
      %v1870 = vpack.c.b16 %v1860, %v1858
      %v1871 = vpack.c.b16 %v1863, %v1861
      %v1872 = vpack.c.b16 %v1864, %v1862
      %v1882 = vsel %vm744, %v1820, 0
      %1884 = vmatprep.subr.bf16.mxu0 %v1866
      %1885 = vmatpush1.bf16.msra.mxu0 %v1865
      %1886 = vmatprep.subr.bf16.mxu0 %v1868
      %1887 = vmatpush1.bf16.msra.mxu0 %v1867
      %1888 = vmatprep.subr.bf16.mxu0 %v1870
      %1889 = vmatpush1.bf16.msra.mxu0 %v1869
      %1890 = vmatprep.subr.bf16.mxu0 %v1872
      %1891 = vmatpush1.bf16.msra.mxu0 %v1871
      %1892 = vmatprep.subr.bf16.mxu0 0
      %1893 = vmatpush1.bf16.msra.mxu0 0
      %1894 = vmatprep.subr.bf16.mxu0 0
      %1895 = vmatpush1.bf16.msra.mxu0 0
      %1896 = vmatprep.subr.bf16.mxu0 0
      %1897 = vmatpush1.bf16.msra.mxu0 0
      %1898 = vmatprep.subr.bf16.mxu0 0
      %1899 = vmatpush1.bf16.msra.mxu0 0
      %1900 = vmatprep.subr.bf16.mxu0 0
      %1901 = vmatpush1.bf16.msra.mxu0 0
      %1902 = vmatprep.subr.bf16.mxu0 0
      %1903 = vmatpush1.bf16.msra.mxu0 0
      %1904 = vmatprep.subr.bf16.mxu0 0
      %1905 = vmatpush1.bf16.msra.mxu0 0
      %1906 = vmatprep.subr.bf16.mxu0 0
      %1907 = vmatpush1.bf16.msra.mxu0 0
      %1908 = vmatprep.subr.bf16.mxu0 0
      %1909 = vmatpush1.bf16.msra.mxu0 0
      %1910 = vmatprep.subr.bf16.mxu0 0
      %1911 = vmatpush1.bf16.msra.mxu0 0
      %1912 = vmatprep.subr.bf16.mxu0 0
      %1913 = vmatpush1.bf16.msra.mxu0 0
      %1914 = vmatprep.subr.bf16.mxu0 0
      %1915 = vmatpush1.bf16.msra.mxu0 0
      %1916 = vmatprep.mubr.bf16.mxu0 0
      %1917 = vmatmul.mubr.bf16.gmra.mrb[0].mxu0 %v1882
      %v1918 = vpop.f32.mrb[0].mxu0
      %v1919 = vadd.f32 %v1834, %v1918
      %v1920 = vpop.f32.mrb[0].mxu0
      %v1921 = vadd.f32 %v1838, %v1920
      %v1922 = vpop.f32.mrb[0].mxu0
      %v1923 = vpop.f32.mrb[0].mxu0
      %1924 = vdwg.mxu0
      %v1925 = vmul.f32 %v1919, %v1919
      %v1926 = vmul.f32 %v1921, %v1921
      %v1927 = vmul.f32 %v1919, %v1925
      %v1928 = vmul.f32 %v1921, %v1926
      %v1929 = vmul.f32 %v1927, 0.044715
      %v1930 = vmul.f32 %v1928, 0.044715
      %v1931 = vadd.f32 %v1919, %v1929
      %v1932 = vadd.f32 %v1921, %v1930
      %v1933 = vmul.f32 %v1931, 0.7978846
      %v1934 = vmul.f32 %v1932, 0.7978846
      %v1935 = vtanh.pop %v1933
      %v1936 = vtanh.pop %v1934
      %v1937 = vadd.f32 %v1935, 1.0
      %v1938 = vadd.f32 %v1936, 1.0
      %v1939 = vmul.f32 %v1937, 0.5
      %v1940 = vmul.f32 %v1938, 0.5
      %v1941 = vmul.f32 %v1919, %v1939
      %v1942 = vmul.f32 %v1921, %v1940
      %v1943 = vpack.c.bf16 %v1941, %v1941
      %v1944 = vpack.c.bf16 %v1942, %v1942
      %v1945 = vld [vmem:[%s19] sm:$0xf]
      %v1946 = vld [vmem:[%s19 + $0x4] sm:$0xf]
      %v1947 = vld [vmem:[%s19 + $0x8] sm:$0xf]
      %v1948 = vld [vmem:[%s19 + $0xc] sm:$0xf]
      %v1949 = vld [vmem:[%s19 + $0x10] sm:$0xf]
      %v1950 = vld [vmem:[%s19 + $0x14] sm:$0xf]
      %v1951 = vld [vmem:[%s19 + $0x18] sm:$0xf]
      %v1952 = vld [vmem:[%s19 + $0x1c] sm:$0xf]
      %v1953 = vld [vmem:[%s19 + $0x20] sm:$0xf]
      %v1954 = vld [vmem:[%s19 + $0x24] sm:$0xf]
      %v1955 = vld [vmem:[%s19 + $0x28] sm:$0xf]
      %v1956 = vld [vmem:[%s19 + $0x2c] sm:$0xf]
      %v1957 = vld [vmem:[%s19 + $0x30] sm:$0xf]
      %v1958 = vld [vmem:[%s19 + $0x34] sm:$0xf]
      %v1959 = vld [vmem:[%s19 + $0x38] sm:$0xf]
      %v1960 = vld [vmem:[%s19 + $0x3c] sm:$0xf]
      %v1961 = vld [vmem:[%s19 + $0x40] sm:$0xf]
      %v1962 = vld [vmem:[%s19 + $0x44] sm:$0xf]
      %v1963 = vld [vmem:[%s19 + $0x48] sm:$0xf]
      %v1964 = vld [vmem:[%s19 + $0x4c] sm:$0xf]
      %v1965 = vld [vmem:[%s19 + $0x50] sm:$0xf]
      %v1966 = vld [vmem:[%s19 + $0x54] sm:$0xf]
      %v1967 = vld [vmem:[%s19 + $0x58] sm:$0xf]
      %v1968 = vld [vmem:[%s19 + $0x5c] sm:$0xf]
      %v1969 = vld [vmem:[%s19 + $0x60] sm:$0xf]
      %v1970 = vld [vmem:[%s19 + $0x64] sm:$0xf]
      %v1971 = vld [vmem:[%s19 + $0x68] sm:$0xf]
      %v1972 = vld [vmem:[%s19 + $0x6c] sm:$0xf]
      %v1973 = vld [vmem:[%s19 + $0x70] sm:$0xf]
      %v1974 = vld [vmem:[%s19 + $0x74] sm:$0xf]
      %v1975 = vld [vmem:[%s19 + $0x78] sm:$0xf]
      %v1976 = vld [vmem:[%s19 + $0x7c] sm:$0xf]
      %v1977 = vld [vmem:[%s20] sm:$0x1]
      %v1979 = vlaneseq
      %v1980 = vshrl.u32 %v1979, 7
      %v1981 = vsub.s32 0, %v1980
      %v1982 = vrot.slane %v1977, %v1981
      %v2016 = vunpack.c.l.b16 %v1945
      %v2017 = vunpack.c.l.b16 %v1946
      %v2018 = vunpack.c.l.b16 %v1947
      %v2019 = vunpack.c.l.b16 %v1948
      %v2020 = vunpack.c.l.b16 %v1949
      %v2021 = vunpack.c.l.b16 %v1950
      %v2022 = vunpack.c.l.b16 %v1951
      %v2023 = vunpack.c.l.b16 %v1952
      %v2024 = vunpack.c.l.b16 %v1953
      %v2025 = vunpack.c.l.b16 %v1954
      %v2026 = vunpack.c.l.b16 %v1955
      %v2027 = vunpack.c.l.b16 %v1956
      %v2028 = vunpack.c.l.b16 %v1957
      %v2029 = vunpack.c.l.b16 %v1958
      %v2030 = vunpack.c.l.b16 %v1959
      %v2031 = vunpack.c.l.b16 %v1960
      %v2032 = vunpack.c.l.b16 %v1961
      %v2033 = vunpack.c.l.b16 %v1962
      %v2034 = vunpack.c.l.b16 %v1963
      %v2035 = vunpack.c.l.b16 %v1964
      %v2036 = vunpack.c.l.b16 %v1965
      %v2037 = vunpack.c.l.b16 %v1966
      %v2038 = vunpack.c.l.b16 %v1967
      %v2039 = vunpack.c.l.b16 %v1968
      %v2040 = vunpack.c.l.b16 %v1969
      %v2041 = vunpack.c.l.b16 %v1970
      %v2042 = vunpack.c.l.b16 %v1971
      %v2043 = vunpack.c.l.b16 %v1972
      %v2044 = vunpack.c.l.b16 %v1973
      %v2045 = vunpack.c.l.b16 %v1974
      %v2046 = vunpack.c.l.b16 %v1975
      %v2047 = vunpack.c.l.b16 %v1976
      %v2048 = vpack.c.b16 %v2017, %v2016
      %v2049 = vpack.c.b16 %v2019, %v2018
      %v2050 = vpack.c.b16 %v2021, %v2020
      %v2051 = vpack.c.b16 %v2023, %v2022
      %v2052 = vpack.c.b16 %v2025, %v2024
      %v2053 = vpack.c.b16 %v2027, %v2026
      %v2054 = vpack.c.b16 %v2029, %v2028
      %v2055 = vpack.c.b16 %v2031, %v2030
      %v2056 = vpack.c.b16 %v2033, %v2032
      %v2057 = vpack.c.b16 %v2035, %v2034
      %v2058 = vpack.c.b16 %v2037, %v2036
      %v2059 = vpack.c.b16 %v2039, %v2038
      %v2060 = vpack.c.b16 %v2041, %v2040
      %v2061 = vpack.c.b16 %v2043, %v2042
      %v2062 = vpack.c.b16 %v2045, %v2044
      %v2063 = vpack.c.b16 %v2047, %v2046
      %2080 = vmatprep.subr.bf16.mxu0 0
      %2081 = vmatpush1.bf16.msra.mxu0 %v2048
      %2082 = vmatprep.subr.bf16.mxu0 0
      %2083 = vmatpush1.bf16.msra.mxu0 %v2049
      %2084 = vmatprep.subr.bf16.mxu0 0
      %2085 = vmatpush1.bf16.msra.mxu0 %v2050
      %2086 = vmatprep.subr.bf16.mxu0 0
      %2087 = vmatpush1.bf16.msra.mxu0 %v2051
      %2088 = vmatprep.subr.bf16.mxu0 0
      %2089 = vmatpush1.bf16.msra.mxu0 %v2052
      %2090 = vmatprep.subr.bf16.mxu0 0
      %2091 = vmatpush1.bf16.msra.mxu0 %v2053
      %2092 = vmatprep.subr.bf16.mxu0 0
      %2093 = vmatpush1.bf16.msra.mxu0 %v2054
      %2094 = vmatprep.subr.bf16.mxu0 0
      %2095 = vmatpush1.bf16.msra.mxu0 %v2055
      %2096 = vmatprep.subr.bf16.mxu0 0
      %2097 = vmatpush1.bf16.msra.mxu0 %v2056
      %2098 = vmatprep.subr.bf16.mxu0 0
      %2099 = vmatpush1.bf16.msra.mxu0 %v2057
      %2100 = vmatprep.subr.bf16.mxu0 0
      %2101 = vmatpush1.bf16.msra.mxu0 %v2058
      %2102 = vmatprep.subr.bf16.mxu0 0
      %2103 = vmatpush1.bf16.msra.mxu0 %v2059
      %2104 = vmatprep.subr.bf16.mxu0 0
      %2105 = vmatpush1.bf16.msra.mxu0 %v2060
      %2106 = vmatprep.subr.bf16.mxu0 0
      %2107 = vmatpush1.bf16.msra.mxu0 %v2061
      %2108 = vmatprep.subr.bf16.mxu0 0
      %2109 = vmatpush1.bf16.msra.mxu0 %v2062
      %2110 = vmatprep.subr.bf16.mxu0 0
      %2111 = vmatpush1.bf16.msra.mxu0 %v2063
      %2112 = vmatprep.mubr.bf16.mxu0 %v1944
      %2113 = vmatmul.mubr.bf16.gmra.mrb[0].mxu0 %v1943
      %v2114 = vpop.f32.mrb[0].mxu0
      %v2115 = vadd.f32 %v1982, %v2114
      %v2116 = vpop.f32.mrb[0].mxu0
      %v2117 = vpop.f32.mrb[0].mxu0
      %v2118 = vpop.f32.mrb[0].mxu0
      %2119 = vdwg.mxu0
      %v2120 = vadd.f32 %v734, %v1803
      %v2121 = vadd.f32 %v2120, %v2115
      %s2122 = scalar_lea.vmem %s5, 1
      %v2123 = vld [vmem:[%s2122] sm:$0x1]
      %s2124 = scalar_lea.vmem %s6, 1
      %v2125 = vld [vmem:[%s2124] sm:$0x1]
      %v2126 = vsel %vm744, %v2121, 0.0
      %2127 = vadd.xlane.f32.xlu0 %v2126
      %v2128 = vpop.xlane.xlu0 %2127
      %v2129 = vmul.f32 %v2128, %v748
      %v2130 = vsub.f32 %v2121, %v2129
      %v2131 = vmul.f32 %v2130, %v2130
      %v2132 = vsel %vm744, %v2131, 0.0
      %2133 = vadd.xlane.f32.xlu0 %v2132
      %v2134 = vpop.xlane.xlu0 %2133
      %v2135 = vmul.f32 %v2134, %v748
      %v2136 = vadd.f32 %v2135, 1e-05
      %v2137 = vrsqrt.pop %v2136
      %v2138 = vmul.f32 %v2130, %v2137
      %v2140 = vlaneseq
      %v2141 = vshrl.u32 %v2140, 7
      %v2142 = vsub.s32 0, %v2141
      %v2143 = vrot.slane %v2123, %v2142
      %v2145 = vmul.f32 %v2138, %v2143
      %v2147 = vlaneseq
      %v2148 = vshrl.u32 %v2147, 7
      %v2149 = vsub.s32 0, %v2148
      %v2150 = vrot.slane %v2125, %v2149
      %v2152 = vadd.f32 %v2145, %v2150
      %v2153 = vpack.c.bf16 %v2152, %v2152
      %s2154 = scalar_lea.vmem %s16, 1
      %v2155 = vld [vmem:[%s2154] sm:$0x1]
      %s2156 = scalar_lea.vmem %s9, 64
      %v2157 = vld [vmem:[%s2156] sm:$0xf]
      %v2158 = vld [vmem:[%s2156 + $0x4] sm:$0xf]
      %v2159 = vld [vmem:[%s2156 + $0x8] sm:$0xf]
      %v2160 = vld [vmem:[%s2156 + $0xc] sm:$0xf]
      %v2161 = vld [vmem:[%s2156 + $0x10] sm:$0xf]
      %v2162 = vld [vmem:[%s2156 + $0x14] sm:$0xf]
      %v2163 = vld [vmem:[%s2156 + $0x18] sm:$0xf]
      %v2164 = vld [vmem:[%s2156 + $0x1c] sm:$0xf]
      %s2165 = scalar_lea.vmem %s10, 2
      %v2166 = vld [vmem:[%s2165] sm:$0x1]
      %v2168 = vlaneseq
      %v2169 = vshrl.u32 %v2168, 7
      %v2170 = vsub.s32 0, %v2169
      %v2171 = vrot.slane %v2166, %v2170
      %v2181 = vunpack.c.l.b16 %v2157
      %v2182 = vunpack.c.l.b16 %v2158
      %v2183 = vunpack.c.l.b16 %v2159
      %v2184 = vunpack.c.l.b16 %v2160
      %v2185 = vunpack.c.l.b16 %v2161
      %v2186 = vunpack.c.l.b16 %v2162
      %v2187 = vunpack.c.l.b16 %v2163
      %v2188 = vunpack.c.l.b16 %v2164
      %v2189 = vpack.c.b16 %v2182, %v2181
      %v2190 = vpack.c.b16 %v2184, %v2183
      %v2191 = vpack.c.b16 %v2186, %v2185
      %v2192 = vpack.c.b16 %v2188, %v2187
      %v2198 = vsel %vm744, %v2153, 0
      %2200 = vmatprep.subr.bf16.mxu0 0
      %2201 = vmatpush1.bf16.msra.mxu0 %v2189
      %2202 = vmatprep.subr.bf16.mxu0 0
      %2203 = vmatpush1.bf16.msra.mxu0 %v2190
      %2204 = vmatprep.subr.bf16.mxu0 0
      %2205 = vmatpush1.bf16.msra.mxu0 %v2191
      %2206 = vmatprep.subr.bf16.mxu0 0
      %2207 = vmatpush1.bf16.msra.mxu0 %v2192
      %2208 = vmatprep.subr.bf16.mxu0 0
      %2209 = vmatpush1.bf16.msra.mxu0 0
      %2210 = vmatprep.subr.bf16.mxu0 0
      %2211 = vmatpush1.bf16.msra.mxu0 0
      %2212 = vmatprep.subr.bf16.mxu0 0
      %2213 = vmatpush1.bf16.msra.mxu0 0
      %2214 = vmatprep.subr.bf16.mxu0 0
      %2215 = vmatpush1.bf16.msra.mxu0 0
      %2216 = vmatprep.subr.bf16.mxu0 0
      %2217 = vmatpush1.bf16.msra.mxu0 0
      %2218 = vmatprep.subr.bf16.mxu0 0
      %2219 = vmatpush1.bf16.msra.mxu0 0
      %2220 = vmatprep.subr.bf16.mxu0 0
      %2221 = vmatpush1.bf16.msra.mxu0 0
      %2222 = vmatprep.subr.bf16.mxu0 0
      %2223 = vmatpush1.bf16.msra.mxu0 0
      %2224 = vmatprep.subr.bf16.mxu0 0
      %2225 = vmatpush1.bf16.msra.mxu0 0
      %2226 = vmatprep.subr.bf16.mxu0 0
      %2227 = vmatpush1.bf16.msra.mxu0 0
      %2228 = vmatprep.subr.bf16.mxu0 0
      %2229 = vmatpush1.bf16.msra.mxu0 0
      %2230 = vmatprep.subr.bf16.mxu0 0
      %2231 = vmatpush1.bf16.msra.mxu0 0
      %2232 = vmatprep.mubr.bf16.mxu0 0
      %2233 = vmatmul.mubr.bf16.gmra.mrb[0].mxu0 %v2198
      %v2234 = vpop.f32.mrb[0].mxu0
      %v2235 = vadd.f32 %v2171, %v2234
      %v2236 = vpop.f32.mrb[0].mxu0
      %v2237 = vpop.f32.mrb[0].mxu0
      %v2238 = vpop.f32.mrb[0].mxu0
      %2239 = vdwg.mxu0
      %s2240 = scalar_lea.vmem %s11, 64
      %v2241 = vld [vmem:[%s2240] sm:$0xf]
      %v2242 = vld [vmem:[%s2240 + $0x4] sm:$0xf]
      %v2243 = vld [vmem:[%s2240 + $0x8] sm:$0xf]
      %v2244 = vld [vmem:[%s2240 + $0xc] sm:$0xf]
      %v2245 = vld [vmem:[%s2240 + $0x10] sm:$0xf]
      %v2246 = vld [vmem:[%s2240 + $0x14] sm:$0xf]
      %v2247 = vld [vmem:[%s2240 + $0x18] sm:$0xf]
      %v2248 = vld [vmem:[%s2240 + $0x1c] sm:$0xf]
      %s2249 = scalar_lea.vmem %s12, 2
      %v2250 = vld [vmem:[%s2249] sm:$0x1]
      %v2252 = vlaneseq
      %v2253 = vshrl.u32 %v2252, 7
      %v2254 = vsub.s32 0, %v2253
      %v2255 = vrot.slane %v2250, %v2254
      %v2265 = vunpack.c.l.b16 %v2241
      %v2266 = vunpack.c.l.b16 %v2242
      %v2267 = vunpack.c.l.b16 %v2243
      %v2268 = vunpack.c.l.b16 %v2244
      %v2269 = vunpack.c.l.b16 %v2245
      %v2270 = vunpack.c.l.b16 %v2246
      %v2271 = vunpack.c.l.b16 %v2247
      %v2272 = vunpack.c.l.b16 %v2248
      %v2273 = vpack.c.b16 %v2266, %v2265
      %v2274 = vpack.c.b16 %v2268, %v2267
      %v2275 = vpack.c.b16 %v2270, %v2269
      %v2276 = vpack.c.b16 %v2272, %v2271
      %2281 = vmatprep.subr.bf16.mxu0 0
      %2282 = vmatpush1.bf16.msra.mxu0 %v2273
      %2283 = vmatprep.subr.bf16.mxu0 0
      %2284 = vmatpush1.bf16.msra.mxu0 %v2274
      %2285 = vmatprep.subr.bf16.mxu0 0
      %2286 = vmatpush1.bf16.msra.mxu0 %v2275
      %2287 = vmatprep.subr.bf16.mxu0 0
      %2288 = vmatpush1.bf16.msra.mxu0 %v2276
      %2289 = vmatprep.subr.bf16.mxu0 0
      %2290 = vmatpush1.bf16.msra.mxu0 0
      %2291 = vmatprep.subr.bf16.mxu0 0
      %2292 = vmatpush1.bf16.msra.mxu0 0
      %2293 = vmatprep.subr.bf16.mxu0 0
      %2294 = vmatpush1.bf16.msra.mxu0 0
      %2295 = vmatprep.subr.bf16.mxu0 0
      %2296 = vmatpush1.bf16.msra.mxu0 0
      %2297 = vmatprep.subr.bf16.mxu0 0
      %2298 = vmatpush1.bf16.msra.mxu0 0
      %2299 = vmatprep.subr.bf16.mxu0 0
      %2300 = vmatpush1.bf16.msra.mxu0 0
      %2301 = vmatprep.subr.bf16.mxu0 0
      %2302 = vmatpush1.bf16.msra.mxu0 0
      %2303 = vmatprep.subr.bf16.mxu0 0
      %2304 = vmatpush1.bf16.msra.mxu0 0
      %2305 = vmatprep.subr.bf16.mxu0 0
      %2306 = vmatpush1.bf16.msra.mxu0 0
      %2307 = vmatprep.subr.bf16.mxu0 0
      %2308 = vmatpush1.bf16.msra.mxu0 0
      %2309 = vmatprep.subr.bf16.mxu0 0
      %2310 = vmatpush1.bf16.msra.mxu0 0
      %2311 = vmatprep.subr.bf16.mxu0 0
      %2312 = vmatpush1.bf16.msra.mxu0 0
      %2313 = vmatprep.mubr.bf16.mxu0 0
      %2314 = vmatmul.mubr.bf16.gmra.mrb[0].mxu0 %v2198
      %v2315 = vpop.f32.mrb[0].mxu0
      %v2316 = vadd.f32 %v2255, %v2315
      %v2317 = vpop.f32.mrb[0].mxu0
      %v2318 = vpop.f32.mrb[0].mxu0
      %v2319 = vpop.f32.mrb[0].mxu0
      %2320 = vdwg.mxu0
      %s2321 = scalar_lea.vmem %s13, 64
      %v2322 = vld [vmem:[%s2321] sm:$0xf]
      %v2323 = vld [vmem:[%s2321 + $0x4] sm:$0xf]
      %v2324 = vld [vmem:[%s2321 + $0x8] sm:$0xf]
      %v2325 = vld [vmem:[%s2321 + $0xc] sm:$0xf]
      %v2326 = vld [vmem:[%s2321 + $0x10] sm:$0xf]
      %v2327 = vld [vmem:[%s2321 + $0x14] sm:$0xf]
      %v2328 = vld [vmem:[%s2321 + $0x18] sm:$0xf]
      %v2329 = vld [vmem:[%s2321 + $0x1c] sm:$0xf]
      %s2330 = scalar_lea.vmem %s14, 2
      %v2331 = vld [vmem:[%s2330] sm:$0x1]
      %v2333 = vlaneseq
      %v2334 = vshrl.u32 %v2333, 7
      %v2335 = vsub.s32 0, %v2334
      %v2336 = vrot.slane %v2331, %v2335
      %v2346 = vunpack.c.l.b16 %v2322
      %v2347 = vunpack.c.l.b16 %v2323
      %v2348 = vunpack.c.l.b16 %v2324
      %v2349 = vunpack.c.l.b16 %v2325
      %v2350 = vunpack.c.l.b16 %v2326
      %v2351 = vunpack.c.l.b16 %v2327
      %v2352 = vunpack.c.l.b16 %v2328
      %v2353 = vunpack.c.l.b16 %v2329
      %v2354 = vpack.c.b16 %v2347, %v2346
      %v2355 = vpack.c.b16 %v2349, %v2348
      %v2356 = vpack.c.b16 %v2351, %v2350
      %v2357 = vpack.c.b16 %v2353, %v2352
      %2362 = vmatprep.subr.bf16.mxu0 0
      %2363 = vmatpush1.bf16.msra.mxu0 %v2354
      %2364 = vmatprep.subr.bf16.mxu0 0
      %2365 = vmatpush1.bf16.msra.mxu0 %v2355
      %2366 = vmatprep.subr.bf16.mxu0 0
      %2367 = vmatpush1.bf16.msra.mxu0 %v2356
      %2368 = vmatprep.subr.bf16.mxu0 0
      %2369 = vmatpush1.bf16.msra.mxu0 %v2357
      %2370 = vmatprep.subr.bf16.mxu0 0
      %2371 = vmatpush1.bf16.msra.mxu0 0
      %2372 = vmatprep.subr.bf16.mxu0 0
      %2373 = vmatpush1.bf16.msra.mxu0 0
      %2374 = vmatprep.subr.bf16.mxu0 0
      %2375 = vmatpush1.bf16.msra.mxu0 0
      %2376 = vmatprep.subr.bf16.mxu0 0
      %2377 = vmatpush1.bf16.msra.mxu0 0
      %2378 = vmatprep.subr.bf16.mxu0 0
      %2379 = vmatpush1.bf16.msra.mxu0 0
      %2380 = vmatprep.subr.bf16.mxu0 0
      %2381 = vmatpush1.bf16.msra.mxu0 0
      %2382 = vmatprep.subr.bf16.mxu0 0
      %2383 = vmatpush1.bf16.msra.mxu0 0
      %2384 = vmatprep.subr.bf16.mxu0 0
      %2385 = vmatpush1.bf16.msra.mxu0 0
      %2386 = vmatprep.subr.bf16.mxu0 0
      %2387 = vmatpush1.bf16.msra.mxu0 0
      %2388 = vmatprep.subr.bf16.mxu0 0
      %2389 = vmatpush1.bf16.msra.mxu0 0
      %2390 = vmatprep.subr.bf16.mxu0 0
      %2391 = vmatpush1.bf16.msra.mxu0 0
      %2392 = vmatprep.subr.bf16.mxu0 0
      %2393 = vmatpush1.bf16.msra.mxu0 0
      %2394 = vmatprep.mubr.bf16.mxu0 0
      %2395 = vmatmul.mubr.bf16.gmra.mrb[0].mxu0 %v2198
      %v2396 = vpop.f32.mrb[0].mxu0
      %v2397 = vadd.f32 %v2336, %v2396
      %v2398 = vpop.f32.mrb[0].mxu0
      %v2399 = vpop.f32.mrb[0].mxu0
      %v2400 = vpop.f32.mrb[0].mxu0
      %2401 = vdwg.mxu0
      %v2402 = vmul.f32 %v2235, %v735
      %v2403 = vpack.c.bf16 %v2235, %v2235
      %v2405 = vsel %vm1029, %v2403, 0
      %2407 = vmatprep.subr.bf16.mxu0 0
      %2408 = vmatpush1.bf16.msra.mxu0 %v1025
      %2409 = vmatprep.subr.bf16.mxu0 0
      %2410 = vmatpush1.bf16.msra.mxu0 %v1026
      %2411 = vmatprep.subr.bf16.mxu0 0
      %2412 = vmatpush1.bf16.msra.mxu0 0
      %2413 = vmatprep.subr.bf16.mxu0 0
      %2414 = vmatpush1.bf16.msra.mxu0 0
      %2415 = vmatprep.subr.bf16.mxu0 0
      %2416 = vmatpush1.bf16.msra.mxu0 0
      %2417 = vmatprep.subr.bf16.mxu0 0
      %2418 = vmatpush1.bf16.msra.mxu0 0
      %2419 = vmatprep.subr.bf16.mxu0 0
      %2420 = vmatpush1.bf16.msra.mxu0 0
      %2421 = vmatprep.subr.bf16.mxu0 0
      %2422 = vmatpush1.bf16.msra.mxu0 0
      %2423 = vmatprep.subr.bf16.mxu0 0
      %2424 = vmatpush1.bf16.msra.mxu0 0
      %2425 = vmatprep.subr.bf16.mxu0 0
      %2426 = vmatpush1.bf16.msra.mxu0 0
      %2427 = vmatprep.subr.bf16.mxu0 0
      %2428 = vmatpush1.bf16.msra.mxu0 0
      %2429 = vmatprep.subr.bf16.mxu0 0
      %2430 = vmatpush1.bf16.msra.mxu0 0
      %2431 = vmatprep.subr.bf16.mxu0 0
      %2432 = vmatpush1.bf16.msra.mxu0 0
      %2433 = vmatprep.subr.bf16.mxu0 0
      %2434 = vmatpush1.bf16.msra.mxu0 0
      %2435 = vmatprep.subr.bf16.mxu0 0
      %2436 = vmatpush1.bf16.msra.mxu0 0
      %2437 = vmatprep.subr.bf16.mxu0 0
      %2438 = vmatpush1.bf16.msra.mxu0 0
      %2439 = vmatprep.mubr.bf16.mxu0 0
      %2440 = vmatmul.mubr.bf16.gmra.mrb[0].mxu0 %v2405
      %v2441 = vpop.f32.mrb[0].mxu0
      %v2442 = vadd.f32 0.0, %v2441
      %v2443 = vpop.f32.mrb[0].mxu0
      %v2444 = vpop.f32.mrb[0].mxu0
      %v2445 = vpop.f32.mrb[0].mxu0
      %2446 = vdwg.mxu0
      %v2447 = vmul.f32 %v2442, %v736
      %v2448 = vadd.f32 %v2402, %v2447
      %v2449 = vmul.f32 %v2316, %v735
      %v2450 = vpack.c.bf16 %v2316, %v2316
      %v2452 = vsel %vm1029, %v2450, 0
      %2454 = vmatprep.subr.bf16.mxu0 0
      %2455 = vmatpush1.bf16.msra.mxu0 %v1025
      %2456 = vmatprep.subr.bf16.mxu0 0
      %2457 = vmatpush1.bf16.msra.mxu0 %v1026
      %2458 = vmatprep.subr.bf16.mxu0 0
      %2459 = vmatpush1.bf16.msra.mxu0 0
      %2460 = vmatprep.subr.bf16.mxu0 0
      %2461 = vmatpush1.bf16.msra.mxu0 0
      %2462 = vmatprep.subr.bf16.mxu0 0
      %2463 = vmatpush1.bf16.msra.mxu0 0
      %2464 = vmatprep.subr.bf16.mxu0 0
      %2465 = vmatpush1.bf16.msra.mxu0 0
      %2466 = vmatprep.subr.bf16.mxu0 0
      %2467 = vmatpush1.bf16.msra.mxu0 0
      %2468 = vmatprep.subr.bf16.mxu0 0
      %2469 = vmatpush1.bf16.msra.mxu0 0
      %2470 = vmatprep.subr.bf16.mxu0 0
      %2471 = vmatpush1.bf16.msra.mxu0 0
      %2472 = vmatprep.subr.bf16.mxu0 0
      %2473 = vmatpush1.bf16.msra.mxu0 0
      %2474 = vmatprep.subr.bf16.mxu0 0
      %2475 = vmatpush1.bf16.msra.mxu0 0
      %2476 = vmatprep.subr.bf16.mxu0 0
      %2477 = vmatpush1.bf16.msra.mxu0 0
      %2478 = vmatprep.subr.bf16.mxu0 0
      %2479 = vmatpush1.bf16.msra.mxu0 0
      %2480 = vmatprep.subr.bf16.mxu0 0
      %2481 = vmatpush1.bf16.msra.mxu0 0
      %2482 = vmatprep.subr.bf16.mxu0 0
      %2483 = vmatpush1.bf16.msra.mxu0 0
      %2484 = vmatprep.subr.bf16.mxu0 0
      %2485 = vmatpush1.bf16.msra.mxu0 0
      %2486 = vmatprep.mubr.bf16.mxu0 0
      %2487 = vmatmul.mubr.bf16.gmra.mrb[0].mxu0 %v2452
      %v2488 = vpop.f32.mrb[0].mxu0
      %v2489 = vadd.f32 0.0, %v2488
      %v2490 = vpop.f32.mrb[0].mxu0
      %v2491 = vpop.f32.mrb[0].mxu0
      %v2492 = vpop.f32.mrb[0].mxu0
      %2493 = vdwg.mxu0
      %v2494 = vmul.f32 %v2489, %v736
      %v2495 = vadd.f32 %v2449, %v2494
      %v2496 = vpack.c.bf16 %v2448, %v2448
      %v2497 = vpack.c.bf16 %v2495, %v2495
      %v2499 = vsel %vm1029, %v2496, 0
      %v2502 = vsel %vm1029, %v2497, 0
      %2504 = vmatprep.subr.bf16.mxu0 0
      %2505 = vmatpush1.bf16.xpose.msra.mxu0 %v2502
      %2506 = vmatprep.subr.bf16.mxu0 0
      %2507 = vmatpush1.bf16.xpose.msra.mxu0 0
      %2508 = vmatprep.subr.bf16.mxu0 0
      %2509 = vmatpush1.bf16.xpose.msra.mxu0 0
      %2510 = vmatprep.subr.bf16.mxu0 0
      %2511 = vmatpush1.bf16.xpose.msra.mxu0 0
      %2512 = vmatprep.subr.bf16.mxu0 0
      %2513 = vmatpush1.bf16.xpose.msra.mxu0 0
      %2514 = vmatprep.subr.bf16.mxu0 0
      %2515 = vmatpush1.bf16.xpose.msra.mxu0 0
      %2516 = vmatprep.subr.bf16.mxu0 0
      %2517 = vmatpush1.bf16.xpose.msra.mxu0 0
      %2518 = vmatprep.subr.bf16.mxu0 0
      %2519 = vmatpush1.bf16.xpose.msra.mxu0 0
      %2520 = vmatprep.subr.bf16.mxu0 0
      %2521 = vmatpush1.bf16.xpose.msra.mxu0 0
      %2522 = vmatprep.subr.bf16.mxu0 0
      %2523 = vmatpush1.bf16.xpose.msra.mxu0 0
      %2524 = vmatprep.subr.bf16.mxu0 0
      %2525 = vmatpush1.bf16.xpose.msra.mxu0 0
      %2526 = vmatprep.subr.bf16.mxu0 0
      %2527 = vmatpush1.bf16.xpose.msra.mxu0 0
      %2528 = vmatprep.subr.bf16.mxu0 0
      %2529 = vmatpush1.bf16.xpose.msra.mxu0 0
      %2530 = vmatprep.subr.bf16.mxu0 0
      %2531 = vmatpush1.bf16.xpose.msra.mxu0 0
      %2532 = vmatprep.subr.bf16.mxu0 0
      %2533 = vmatpush1.bf16.xpose.msra.mxu0 0
      %2534 = vmatprep.subr.bf16.mxu0 0
      %2535 = vmatpush1.bf16.xpose.msra.mxu0 0
      %2536 = vmatprep.mubr.bf16.mxu0 0
      %2537 = vmatmul.mubr.bf16.gmra.mrb[0].mxu0 %v2499
      %v2538 = vpop.f32.mrb[0].mxu0
      %v2539 = vadd.f32 %v741, %v2538
      %v2540 = vpop.f32.mrb[0].mxu0
      %v2541 = vpop.f32.mrb[0].mxu0
      %v2542 = vpop.f32.mrb[0].mxu0
      %2543 = vdwg.mxu0
      %v2544 = vsel %vm1170, %v2539, -inf
      %2545 = vmax.xlane.f32.xlu0 %v2544
      %v2546 = vpop.xlane.xlu0 %2545
      %v2547 = vsub.f32 %v2539, %v2546
      %v2548 = vmul.f32 %v2547, 1.442695
      %v2549 = vpow.pop %v2548
      %v2550 = vsel %vm1170, %v2549, 0.0
      %2551 = vadd.xlane.f32.xlu0 %v2550
      %v2552 = vpop.xlane.xlu0 %2551
      %v2553 = vrcp.pop %v2552
      %v2554 = vmul.f32 %v2549, %v2553
      %v2555 = vpack.c.bf16 %v2554, %v2554
      %v2556 = vpack.c.bf16 %v2397, %v2397
      %v2558 = vsel %vm1170, %v2555, 0
      %v2561 = vsel %vm1187, %v2556, 0
      %2563 = vmatprep.subr.bf16.mxu0 0
      %2564 = vmatpush1.bf16.msra.mxu0 %v2561
      %2565 = vmatprep.subr.bf16.mxu0 0
      %2566 = vmatpush1.bf16.msra.mxu0 0
      %2567 = vmatprep.subr.bf16.mxu0 0
      %2568 = vmatpush1.bf16.msra.mxu0 0
      %2569 = vmatprep.subr.bf16.mxu0 0
      %2570 = vmatpush1.bf16.msra.mxu0 0
      %2571 = vmatprep.subr.bf16.mxu0 0
      %2572 = vmatpush1.bf16.msra.mxu0 0
      %2573 = vmatprep.subr.bf16.mxu0 0
      %2574 = vmatpush1.bf16.msra.mxu0 0
      %2575 = vmatprep.subr.bf16.mxu0 0
      %2576 = vmatpush1.bf16.msra.mxu0 0
      %2577 = vmatprep.subr.bf16.mxu0 0
      %2578 = vmatpush1.bf16.msra.mxu0 0
      %2579 = vmatprep.subr.bf16.mxu0 0
      %2580 = vmatpush1.bf16.msra.mxu0 0
      %2581 = vmatprep.subr.bf16.mxu0 0
      %2582 = vmatpush1.bf16.msra.mxu0 0
      %2583 = vmatprep.subr.bf16.mxu0 0
      %2584 = vmatpush1.bf16.msra.mxu0 0
      %2585 = vmatprep.subr.bf16.mxu0 0
      %2586 = vmatpush1.bf16.msra.mxu0 0
      %2587 = vmatprep.subr.bf16.mxu0 0
      %2588 = vmatpush1.bf16.msra.mxu0 0
      %2589 = vmatprep.subr.bf16.mxu0 0
      %2590 = vmatpush1.bf16.msra.mxu0 0
      %2591 = vmatprep.subr.bf16.mxu0 0
      %2592 = vmatpush1.bf16.msra.mxu0 0
      %2593 = vmatprep.subr.bf16.mxu0 0
      %2594 = vmatpush1.bf16.msra.mxu0 0
      %2595 = vmatprep.mubr.bf16.mxu0 0
      %2596 = vmatmul.mubr.bf16.gmra.mrb[0].mxu0 %v2558
      %v2597 = vpop.f32.mrb[0].mxu0
      %v2598 = vadd.f32 0.0, %v2597
      %v2599 = vpop.f32.mrb[0].mxu0
      %v2600 = vpop.f32.mrb[0].mxu0
      %v2601 = vpop.f32.mrb[0].mxu0
      %2602 = vdwg.mxu0
      %v2603 = vpack.c.bf16 %v2598, %v2598
      %s2604 = scalar_lea.vmem %s15, 32
      %v2605 = vld [vmem:[%s2604] sm:$0xf]
      %v2606 = vld [vmem:[%s2604 + $0x4] sm:$0xf]
      %v2607 = vld [vmem:[%s2604 + $0x8] sm:$0xf]
      %v2608 = vld [vmem:[%s2604 + $0xc] sm:$0xf]
      %v2613 = vunpack.c.l.b16 %v2605
      %v2614 = vunpack.c.l.b16 %v2606
      %v2615 = vunpack.c.l.b16 %v2607
      %v2616 = vunpack.c.l.b16 %v2608
      %v2617 = vpack.c.b16 %v2614, %v2613
      %v2618 = vpack.c.b16 %v2616, %v2615
      %v2622 = vsel %vm1029, %v2603, 0
      %2624 = vmatprep.subr.bf16.mxu0 0
      %2625 = vmatpush1.bf16.msra.mxu0 %v2617
      %2626 = vmatprep.subr.bf16.mxu0 0
      %2627 = vmatpush1.bf16.msra.mxu0 %v2618
      %2628 = vmatprep.subr.bf16.mxu0 0
      %2629 = vmatpush1.bf16.msra.mxu0 0
      %2630 = vmatprep.subr.bf16.mxu0 0
      %2631 = vmatpush1.bf16.msra.mxu0 0
      %2632 = vmatprep.subr.bf16.mxu0 0
      %2633 = vmatpush1.bf16.msra.mxu0 0
      %2634 = vmatprep.subr.bf16.mxu0 0
      %2635 = vmatpush1.bf16.msra.mxu0 0
      %2636 = vmatprep.subr.bf16.mxu0 0
      %2637 = vmatpush1.bf16.msra.mxu0 0
      %2638 = vmatprep.subr.bf16.mxu0 0
      %2639 = vmatpush1.bf16.msra.mxu0 0
      %2640 = vmatprep.subr.bf16.mxu0 0
      %2641 = vmatpush1.bf16.msra.mxu0 0
      %2642 = vmatprep.subr.bf16.mxu0 0
      %2643 = vmatpush1.bf16.msra.mxu0 0
      %2644 = vmatprep.subr.bf16.mxu0 0
      %2645 = vmatpush1.bf16.msra.mxu0 0
      %2646 = vmatprep.subr.bf16.mxu0 0
      %2647 = vmatpush1.bf16.msra.mxu0 0
      %2648 = vmatprep.subr.bf16.mxu0 0
      %2649 = vmatpush1.bf16.msra.mxu0 0
      %2650 = vmatprep.subr.bf16.mxu0 0
      %2651 = vmatpush1.bf16.msra.mxu0 0
      %2652 = vmatprep.subr.bf16.mxu0 0
      %2653 = vmatpush1.bf16.msra.mxu0 0
      %2654 = vmatprep.subr.bf16.mxu0 0
      %2655 = vmatpush1.bf16.msra.mxu0 0
      %2656 = vmatprep.mubr.bf16.mxu0 0
      %2657 = vmatmul.mubr.bf16.gmra.mrb[0].mxu0 %v2622
      %v2658 = vpop.f32.mrb[0].mxu0
      %v2659 = vadd.f32 0.0, %v2658
      %v2660 = vpop.f32.mrb[0].mxu0
      %v2661 = vpop.f32.mrb[0].mxu0
      %v2662 = vpop.f32.mrb[0].mxu0
      %2663 = vdwg.mxu0
      %v2665 = vlaneseq
      %v2666 = vshrl.u32 %v2665, 7
      %v2667 = vsub.s32 0, %v2666
      %v2668 = vrot.slane %v2155, %v2667
      %v2670 = vadd.f32 %v2668, %v2659
      %s2671 = scalar_lea.vmem %s9, 96
      %v2672 = vld [vmem:[%s2671] sm:$0xf]
      %v2673 = vld [vmem:[%s2671 + $0x4] sm:$0xf]
      %v2674 = vld [vmem:[%s2671 + $0x8] sm:$0xf]
      %v2675 = vld [vmem:[%s2671 + $0xc] sm:$0xf]
      %v2676 = vld [vmem:[%s2671 + $0x10] sm:$0xf]
      %v2677 = vld [vmem:[%s2671 + $0x14] sm:$0xf]
      %v2678 = vld [vmem:[%s2671 + $0x18] sm:$0xf]
      %v2679 = vld [vmem:[%s2671 + $0x1c] sm:$0xf]
      %s2680 = scalar_lea.vmem %s10, 3
      %v2681 = vld [vmem:[%s2680] sm:$0x1]
      %v2683 = vlaneseq
      %v2684 = vshrl.u32 %v2683, 7
      %v2685 = vsub.s32 0, %v2684
      %v2686 = vrot.slane %v2681, %v2685
      %v2696 = vunpack.c.l.b16 %v2672
      %v2697 = vunpack.c.l.b16 %v2673
      %v2698 = vunpack.c.l.b16 %v2674
      %v2699 = vunpack.c.l.b16 %v2675
      %v2700 = vunpack.c.l.b16 %v2676
      %v2701 = vunpack.c.l.b16 %v2677
      %v2702 = vunpack.c.l.b16 %v2678
      %v2703 = vunpack.c.l.b16 %v2679
      %v2704 = vpack.c.b16 %v2697, %v2696
      %v2705 = vpack.c.b16 %v2699, %v2698
      %v2706 = vpack.c.b16 %v2701, %v2700
      %v2707 = vpack.c.b16 %v2703, %v2702
      %2712 = vmatprep.subr.bf16.mxu0 0
      %2713 = vmatpush1.bf16.msra.mxu0 %v2704
      %2714 = vmatprep.subr.bf16.mxu0 0
      %2715 = vmatpush1.bf16.msra.mxu0 %v2705
      %2716 = vmatprep.subr.bf16.mxu0 0
      %2717 = vmatpush1.bf16.msra.mxu0 %v2706
      %2718 = vmatprep.subr.bf16.mxu0 0
      %2719 = vmatpush1.bf16.msra.mxu0 %v2707
      %2720 = vmatprep.subr.bf16.mxu0 0
      %2721 = vmatpush1.bf16.msra.mxu0 0
      %2722 = vmatprep.subr.bf16.mxu0 0
      %2723 = vmatpush1.bf16.msra.mxu0 0
      %2724 = vmatprep.subr.bf16.mxu0 0
      %2725 = vmatpush1.bf16.msra.mxu0 0
      %2726 = vmatprep.subr.bf16.mxu0 0
      %2727 = vmatpush1.bf16.msra.mxu0 0
      %2728 = vmatprep.subr.bf16.mxu0 0
      %2729 = vmatpush1.bf16.msra.mxu0 0
      %2730 = vmatprep.subr.bf16.mxu0 0
      %2731 = vmatpush1.bf16.msra.mxu0 0
      %2732 = vmatprep.subr.bf16.mxu0 0
      %2733 = vmatpush1.bf16.msra.mxu0 0
      %2734 = vmatprep.subr.bf16.mxu0 0
      %2735 = vmatpush1.bf16.msra.mxu0 0
      %2736 = vmatprep.subr.bf16.mxu0 0
      %2737 = vmatpush1.bf16.msra.mxu0 0
      %2738 = vmatprep.subr.bf16.mxu0 0
      %2739 = vmatpush1.bf16.msra.mxu0 0
      %2740 = vmatprep.subr.bf16.mxu0 0
      %2741 = vmatpush1.bf16.msra.mxu0 0
      %2742 = vmatprep.subr.bf16.mxu0 0
      %2743 = vmatpush1.bf16.msra.mxu0 0
      %2744 = vmatprep.mubr.bf16.mxu0 0
      %2745 = vmatmul.mubr.bf16.gmra.mrb[0].mxu0 %v2198
      %v2746 = vpop.f32.mrb[0].mxu0
      %v2747 = vadd.f32 %v2686, %v2746
      %v2748 = vpop.f32.mrb[0].mxu0
      %v2749 = vpop.f32.mrb[0].mxu0
      %v2750 = vpop.f32.mrb[0].mxu0
      %2751 = vdwg.mxu0
      %s2752 = scalar_lea.vmem %s11, 96
      %v2753 = vld [vmem:[%s2752] sm:$0xf]
      %v2754 = vld [vmem:[%s2752 + $0x4] sm:$0xf]
      %v2755 = vld [vmem:[%s2752 + $0x8] sm:$0xf]
      %v2756 = vld [vmem:[%s2752 + $0xc] sm:$0xf]
      %v2757 = vld [vmem:[%s2752 + $0x10] sm:$0xf]
      %v2758 = vld [vmem:[%s2752 + $0x14] sm:$0xf]
      %v2759 = vld [vmem:[%s2752 + $0x18] sm:$0xf]
      %v2760 = vld [vmem:[%s2752 + $0x1c] sm:$0xf]
      %s2761 = scalar_lea.vmem %s12, 3
      %v2762 = vld [vmem:[%s2761] sm:$0x1]
      %v2764 = vlaneseq
      %v2765 = vshrl.u32 %v2764, 7
      %v2766 = vsub.s32 0, %v2765
      %v2767 = vrot.slane %v2762, %v2766
      %v2777 = vunpack.c.l.b16 %v2753
      %v2778 = vunpack.c.l.b16 %v2754
      %v2779 = vunpack.c.l.b16 %v2755
      %v2780 = vunpack.c.l.b16 %v2756
      %v2781 = vunpack.c.l.b16 %v2757
      %v2782 = vunpack.c.l.b16 %v2758
      %v2783 = vunpack.c.l.b16 %v2759
      %v2784 = vunpack.c.l.b16 %v2760
      %v2785 = vpack.c.b16 %v2778, %v2777
      %v2786 = vpack.c.b16 %v2780, %v2779
      %v2787 = vpack.c.b16 %v2782, %v2781
      %v2788 = vpack.c.b16 %v2784, %v2783
      %2793 = vmatprep.subr.bf16.mxu0 0
      %2794 = vmatpush1.bf16.msra.mxu0 %v2785
      %2795 = vmatprep.subr.bf16.mxu0 0
      %2796 = vmatpush1.bf16.msra.mxu0 %v2786
      %2797 = vmatprep.subr.bf16.mxu0 0
      %2798 = vmatpush1.bf16.msra.mxu0 %v2787
      %2799 = vmatprep.subr.bf16.mxu0 0
      %2800 = vmatpush1.bf16.msra.mxu0 %v2788
      %2801 = vmatprep.subr.bf16.mxu0 0
      %2802 = vmatpush1.bf16.msra.mxu0 0
      %2803 = vmatprep.subr.bf16.mxu0 0
      %2804 = vmatpush1.bf16.msra.mxu0 0
      %2805 = vmatprep.subr.bf16.mxu0 0
      %2806 = vmatpush1.bf16.msra.mxu0 0
      %2807 = vmatprep.subr.bf16.mxu0 0
      %2808 = vmatpush1.bf16.msra.mxu0 0
      %2809 = vmatprep.subr.bf16.mxu0 0
      %2810 = vmatpush1.bf16.msra.mxu0 0
      %2811 = vmatprep.subr.bf16.mxu0 0
      %2812 = vmatpush1.bf16.msra.mxu0 0
      %2813 = vmatprep.subr.bf16.mxu0 0
      %2814 = vmatpush1.bf16.msra.mxu0 0
      %2815 = vmatprep.subr.bf16.mxu0 0
      %2816 = vmatpush1.bf16.msra.mxu0 0
      %2817 = vmatprep.subr.bf16.mxu0 0
      %2818 = vmatpush1.bf16.msra.mxu0 0
      %2819 = vmatprep.subr.bf16.mxu0 0
      %2820 = vmatpush1.bf16.msra.mxu0 0
      %2821 = vmatprep.subr.bf16.mxu0 0
      %2822 = vmatpush1.bf16.msra.mxu0 0
      %2823 = vmatprep.subr.bf16.mxu0 0
      %2824 = vmatpush1.bf16.msra.mxu0 0
      %2825 = vmatprep.mubr.bf16.mxu0 0
      %2826 = vmatmul.mubr.bf16.gmra.mrb[0].mxu0 %v2198
      %v2827 = vpop.f32.mrb[0].mxu0
      %v2828 = vadd.f32 %v2767, %v2827
      %v2829 = vpop.f32.mrb[0].mxu0
      %v2830 = vpop.f32.mrb[0].mxu0
      %v2831 = vpop.f32.mrb[0].mxu0
      %2832 = vdwg.mxu0
      %s2833 = scalar_lea.vmem %s13, 96
      %v2834 = vld [vmem:[%s2833] sm:$0xf]
      %v2835 = vld [vmem:[%s2833 + $0x4] sm:$0xf]
      %v2836 = vld [vmem:[%s2833 + $0x8] sm:$0xf]
      %v2837 = vld [vmem:[%s2833 + $0xc] sm:$0xf]
      %v2838 = vld [vmem:[%s2833 + $0x10] sm:$0xf]
      %v2839 = vld [vmem:[%s2833 + $0x14] sm:$0xf]
      %v2840 = vld [vmem:[%s2833 + $0x18] sm:$0xf]
      %v2841 = vld [vmem:[%s2833 + $0x1c] sm:$0xf]
      %s2842 = scalar_lea.vmem %s14, 3
      %v2843 = vld [vmem:[%s2842] sm:$0x1]
      %v2845 = vlaneseq
      %v2846 = vshrl.u32 %v2845, 7
      %v2847 = vsub.s32 0, %v2846
      %v2848 = vrot.slane %v2843, %v2847
      %v2858 = vunpack.c.l.b16 %v2834
      %v2859 = vunpack.c.l.b16 %v2835
      %v2860 = vunpack.c.l.b16 %v2836
      %v2861 = vunpack.c.l.b16 %v2837
      %v2862 = vunpack.c.l.b16 %v2838
      %v2863 = vunpack.c.l.b16 %v2839
      %v2864 = vunpack.c.l.b16 %v2840
      %v2865 = vunpack.c.l.b16 %v2841
      %v2866 = vpack.c.b16 %v2859, %v2858
      %v2867 = vpack.c.b16 %v2861, %v2860
      %v2868 = vpack.c.b16 %v2863, %v2862
      %v2869 = vpack.c.b16 %v2865, %v2864
      %2874 = vmatprep.subr.bf16.mxu0 0
      %2875 = vmatpush1.bf16.msra.mxu0 %v2866
      %2876 = vmatprep.subr.bf16.mxu0 0
      %2877 = vmatpush1.bf16.msra.mxu0 %v2867
      %2878 = vmatprep.subr.bf16.mxu0 0
      %2879 = vmatpush1.bf16.msra.mxu0 %v2868
      %2880 = vmatprep.subr.bf16.mxu0 0
      %2881 = vmatpush1.bf16.msra.mxu0 %v2869
      %2882 = vmatprep.subr.bf16.mxu0 0
      %2883 = vmatpush1.bf16.msra.mxu0 0
      %2884 = vmatprep.subr.bf16.mxu0 0
      %2885 = vmatpush1.bf16.msra.mxu0 0
      %2886 = vmatprep.subr.bf16.mxu0 0
      %2887 = vmatpush1.bf16.msra.mxu0 0
      %2888 = vmatprep.subr.bf16.mxu0 0
      %2889 = vmatpush1.bf16.msra.mxu0 0
      %2890 = vmatprep.subr.bf16.mxu0 0
      %2891 = vmatpush1.bf16.msra.mxu0 0
      %2892 = vmatprep.subr.bf16.mxu0 0
      %2893 = vmatpush1.bf16.msra.mxu0 0
      %2894 = vmatprep.subr.bf16.mxu0 0
      %2895 = vmatpush1.bf16.msra.mxu0 0
      %2896 = vmatprep.subr.bf16.mxu0 0
      %2897 = vmatpush1.bf16.msra.mxu0 0
      %2898 = vmatprep.subr.bf16.mxu0 0
      %2899 = vmatpush1.bf16.msra.mxu0 0
      %2900 = vmatprep.subr.bf16.mxu0 0
      %2901 = vmatpush1.bf16.msra.mxu0 0
      %2902 = vmatprep.subr.bf16.mxu0 0
      %2903 = vmatpush1.bf16.msra.mxu0 0
      %2904 = vmatprep.subr.bf16.mxu0 0
      %2905 = vmatpush1.bf16.msra.mxu0 0
      %2906 = vmatprep.mubr.bf16.mxu0 0
      %2907 = vmatmul.mubr.bf16.gmra.mrb[0].mxu0 %v2198
      %v2908 = vpop.f32.mrb[0].mxu0
      %v2909 = vadd.f32 %v2848, %v2908
      %v2910 = vpop.f32.mrb[0].mxu0
      %v2911 = vpop.f32.mrb[0].mxu0
      %v2912 = vpop.f32.mrb[0].mxu0
      %2913 = vdwg.mxu0
      %v2914 = vmul.f32 %v2747, %v735
      %v2915 = vpack.c.bf16 %v2747, %v2747
      %v2917 = vsel %vm1029, %v2915, 0
      %2919 = vmatprep.subr.bf16.mxu0 0
      %2920 = vmatpush1.bf16.msra.mxu0 %v1025
      %2921 = vmatprep.subr.bf16.mxu0 0
      %2922 = vmatpush1.bf16.msra.mxu0 %v1026
      %2923 = vmatprep.subr.bf16.mxu0 0
      %2924 = vmatpush1.bf16.msra.mxu0 0
      %2925 = vmatprep.subr.bf16.mxu0 0
      %2926 = vmatpush1.bf16.msra.mxu0 0
      %2927 = vmatprep.subr.bf16.mxu0 0
      %2928 = vmatpush1.bf16.msra.mxu0 0
      %2929 = vmatprep.subr.bf16.mxu0 0
      %2930 = vmatpush1.bf16.msra.mxu0 0
      %2931 = vmatprep.subr.bf16.mxu0 0
      %2932 = vmatpush1.bf16.msra.mxu0 0
      %2933 = vmatprep.subr.bf16.mxu0 0
      %2934 = vmatpush1.bf16.msra.mxu0 0
      %2935 = vmatprep.subr.bf16.mxu0 0
      %2936 = vmatpush1.bf16.msra.mxu0 0
      %2937 = vmatprep.subr.bf16.mxu0 0
      %2938 = vmatpush1.bf16.msra.mxu0 0
      %2939 = vmatprep.subr.bf16.mxu0 0
      %2940 = vmatpush1.bf16.msra.mxu0 0
      %2941 = vmatprep.subr.bf16.mxu0 0
      %2942 = vmatpush1.bf16.msra.mxu0 0
      %2943 = vmatprep.subr.bf16.mxu0 0
      %2944 = vmatpush1.bf16.msra.mxu0 0
      %2945 = vmatprep.subr.bf16.mxu0 0
      %2946 = vmatpush1.bf16.msra.mxu0 0
      %2947 = vmatprep.subr.bf16.mxu0 0
      %2948 = vmatpush1.bf16.msra.mxu0 0
      %2949 = vmatprep.subr.bf16.mxu0 0
      %2950 = vmatpush1.bf16.msra.mxu0 0
      %2951 = vmatprep.mubr.bf16.mxu0 0
      %2952 = vmatmul.mubr.bf16.gmra.mrb[0].mxu0 %v2917
      %v2953 = vpop.f32.mrb[0].mxu0
      %v2954 = vadd.f32 0.0, %v2953
      %v2955 = vpop.f32.mrb[0].mxu0
      %v2956 = vpop.f32.mrb[0].mxu0
      %v2957 = vpop.f32.mrb[0].mxu0
      %2958 = vdwg.mxu0
      %v2959 = vmul.f32 %v2954, %v736
      %v2960 = vadd.f32 %v2914, %v2959
      %v2961 = vmul.f32 %v2828, %v735
      %v2962 = vpack.c.bf16 %v2828, %v2828
      %v2964 = vsel %vm1029, %v2962, 0
      %2966 = vmatprep.subr.bf16.mxu0 0
      %2967 = vmatpush1.bf16.msra.mxu0 %v1025
      %2968 = vmatprep.subr.bf16.mxu0 0
      %2969 = vmatpush1.bf16.msra.mxu0 %v1026
      %2970 = vmatprep.subr.bf16.mxu0 0
      %2971 = vmatpush1.bf16.msra.mxu0 0
      %2972 = vmatprep.subr.bf16.mxu0 0
      %2973 = vmatpush1.bf16.msra.mxu0 0
      %2974 = vmatprep.subr.bf16.mxu0 0
      %2975 = vmatpush1.bf16.msra.mxu0 0
      %2976 = vmatprep.subr.bf16.mxu0 0
      %2977 = vmatpush1.bf16.msra.mxu0 0
      %2978 = vmatprep.subr.bf16.mxu0 0
      %2979 = vmatpush1.bf16.msra.mxu0 0
      %2980 = vmatprep.subr.bf16.mxu0 0
      %2981 = vmatpush1.bf16.msra.mxu0 0
      %2982 = vmatprep.subr.bf16.mxu0 0
      %2983 = vmatpush1.bf16.msra.mxu0 0
      %2984 = vmatprep.subr.bf16.mxu0 0
      %2985 = vmatpush1.bf16.msra.mxu0 0
      %2986 = vmatprep.subr.bf16.mxu0 0
      %2987 = vmatpush1.bf16.msra.mxu0 0
      %2988 = vmatprep.subr.bf16.mxu0 0
      %2989 = vmatpush1.bf16.msra.mxu0 0
      %2990 = vmatprep.subr.bf16.mxu0 0
      %2991 = vmatpush1.bf16.msra.mxu0 0
      %2992 = vmatprep.subr.bf16.mxu0 0
      %2993 = vmatpush1.bf16.msra.mxu0 0
      %2994 = vmatprep.subr.bf16.mxu0 0
      %2995 = vmatpush1.bf16.msra.mxu0 0
      %2996 = vmatprep.subr.bf16.mxu0 0
      %2997 = vmatpush1.bf16.msra.mxu0 0
      %2998 = vmatprep.mubr.bf16.mxu0 0
      %2999 = vmatmul.mubr.bf16.gmra.mrb[0].mxu0 %v2964
      %v3000 = vpop.f32.mrb[0].mxu0
      %v3001 = vadd.f32 0.0, %v3000
      %v3002 = vpop.f32.mrb[0].mxu0
      %v3003 = vpop.f32.mrb[0].mxu0
      %v3004 = vpop.f32.mrb[0].mxu0
      %3005 = vdwg.mxu0
      %v3006 = vmul.f32 %v3001, %v736
      %v3007 = vadd.f32 %v2961, %v3006
      %v3008 = vpack.c.bf16 %v2960, %v2960
      %v3009 = vpack.c.bf16 %v3007, %v3007
      %v3011 = vsel %vm1029, %v3008, 0
      %v3014 = vsel %vm1029, %v3009, 0
      %3016 = vmatprep.subr.bf16.mxu0 0
      %3017 = vmatpush1.bf16.xpose.msra.mxu0 %v3014
      %3018 = vmatprep.subr.bf16.mxu0 0
      %3019 = vmatpush1.bf16.xpose.msra.mxu0 0
      %3020 = vmatprep.subr.bf16.mxu0 0
      %3021 = vmatpush1.bf16.xpose.msra.mxu0 0
      %3022 = vmatprep.subr.bf16.mxu0 0
      %3023 = vmatpush1.bf16.xpose.msra.mxu0 0
      %3024 = vmatprep.subr.bf16.mxu0 0
      %3025 = vmatpush1.bf16.xpose.msra.mxu0 0
      %3026 = vmatprep.subr.bf16.mxu0 0
      %3027 = vmatpush1.bf16.xpose.msra.mxu0 0
      %3028 = vmatprep.subr.bf16.mxu0 0
      %3029 = vmatpush1.bf16.xpose.msra.mxu0 0
      %3030 = vmatprep.subr.bf16.mxu0 0
      %3031 = vmatpush1.bf16.xpose.msra.mxu0 0
      %3032 = vmatprep.subr.bf16.mxu0 0
      %3033 = vmatpush1.bf16.xpose.msra.mxu0 0
      %3034 = vmatprep.subr.bf16.mxu0 0
      %3035 = vmatpush1.bf16.xpose.msra.mxu0 0
      %3036 = vmatprep.subr.bf16.mxu0 0
      %3037 = vmatpush1.bf16.xpose.msra.mxu0 0
      %3038 = vmatprep.subr.bf16.mxu0 0
      %3039 = vmatpush1.bf16.xpose.msra.mxu0 0
      %3040 = vmatprep.subr.bf16.mxu0 0
      %3041 = vmatpush1.bf16.xpose.msra.mxu0 0
      %3042 = vmatprep.subr.bf16.mxu0 0
      %3043 = vmatpush1.bf16.xpose.msra.mxu0 0
      %3044 = vmatprep.subr.bf16.mxu0 0
      %3045 = vmatpush1.bf16.xpose.msra.mxu0 0
      %3046 = vmatprep.subr.bf16.mxu0 0
      %3047 = vmatpush1.bf16.xpose.msra.mxu0 0
      %3048 = vmatprep.mubr.bf16.mxu0 0
      %3049 = vmatmul.mubr.bf16.gmra.mrb[0].mxu0 %v3011
      %v3050 = vpop.f32.mrb[0].mxu0
      %v3051 = vadd.f32 %v741, %v3050
      %v3052 = vpop.f32.mrb[0].mxu0
      %v3053 = vpop.f32.mrb[0].mxu0
      %v3054 = vpop.f32.mrb[0].mxu0
      %3055 = vdwg.mxu0
      %v3056 = vsel %vm1170, %v3051, -inf
      %3057 = vmax.xlane.f32.xlu0 %v3056
      %v3058 = vpop.xlane.xlu0 %3057
      %v3059 = vsub.f32 %v3051, %v3058
      %v3060 = vmul.f32 %v3059, 1.442695
      %v3061 = vpow.pop %v3060
      %v3062 = vsel %vm1170, %v3061, 0.0
      %3063 = vadd.xlane.f32.xlu0 %v3062
      %v3064 = vpop.xlane.xlu0 %3063
      %v3065 = vrcp.pop %v3064
      %v3066 = vmul.f32 %v3061, %v3065
      %v3067 = vpack.c.bf16 %v3066, %v3066
      %v3068 = vpack.c.bf16 %v2909, %v2909
      %v3070 = vsel %vm1170, %v3067, 0
      %v3073 = vsel %vm1187, %v3068, 0
      %3075 = vmatprep.subr.bf16.mxu0 0
      %3076 = vmatpush1.bf16.msra.mxu0 %v3073
      %3077 = vmatprep.subr.bf16.mxu0 0
      %3078 = vmatpush1.bf16.msra.mxu0 0
      %3079 = vmatprep.subr.bf16.mxu0 0
      %3080 = vmatpush1.bf16.msra.mxu0 0
      %3081 = vmatprep.subr.bf16.mxu0 0
      %3082 = vmatpush1.bf16.msra.mxu0 0
      %3083 = vmatprep.subr.bf16.mxu0 0
      %3084 = vmatpush1.bf16.msra.mxu0 0
      %3085 = vmatprep.subr.bf16.mxu0 0
      %3086 = vmatpush1.bf16.msra.mxu0 0
      %3087 = vmatprep.subr.bf16.mxu0 0
      %3088 = vmatpush1.bf16.msra.mxu0 0
      %3089 = vmatprep.subr.bf16.mxu0 0
      %3090 = vmatpush1.bf16.msra.mxu0 0
      %3091 = vmatprep.subr.bf16.mxu0 0
      %3092 = vmatpush1.bf16.msra.mxu0 0
      %3093 = vmatprep.subr.bf16.mxu0 0
      %3094 = vmatpush1.bf16.msra.mxu0 0
      %3095 = vmatprep.subr.bf16.mxu0 0
      %3096 = vmatpush1.bf16.msra.mxu0 0
      %3097 = vmatprep.subr.bf16.mxu0 0
      %3098 = vmatpush1.bf16.msra.mxu0 0
      %3099 = vmatprep.subr.bf16.mxu0 0
      %3100 = vmatpush1.bf16.msra.mxu0 0
      %3101 = vmatprep.subr.bf16.mxu0 0
      %3102 = vmatpush1.bf16.msra.mxu0 0
      %3103 = vmatprep.subr.bf16.mxu0 0
      %3104 = vmatpush1.bf16.msra.mxu0 0
      %3105 = vmatprep.subr.bf16.mxu0 0
      %3106 = vmatpush1.bf16.msra.mxu0 0
      %3107 = vmatprep.mubr.bf16.mxu0 0
      %3108 = vmatmul.mubr.bf16.gmra.mrb[0].mxu0 %v3070
      %v3109 = vpop.f32.mrb[0].mxu0
      %v3110 = vadd.f32 0.0, %v3109
      %v3111 = vpop.f32.mrb[0].mxu0
      %v3112 = vpop.f32.mrb[0].mxu0
      %v3113 = vpop.f32.mrb[0].mxu0
      %3114 = vdwg.mxu0
      %v3115 = vpack.c.bf16 %v3110, %v3110
      %s3116 = scalar_lea.vmem %s15, 48
      %v3117 = vld [vmem:[%s3116] sm:$0xf]
      %v3118 = vld [vmem:[%s3116 + $0x4] sm:$0xf]
      %v3119 = vld [vmem:[%s3116 + $0x8] sm:$0xf]
      %v3120 = vld [vmem:[%s3116 + $0xc] sm:$0xf]
      %v3125 = vunpack.c.l.b16 %v3117
      %v3126 = vunpack.c.l.b16 %v3118
      %v3127 = vunpack.c.l.b16 %v3119
      %v3128 = vunpack.c.l.b16 %v3120
      %v3129 = vpack.c.b16 %v3126, %v3125
      %v3130 = vpack.c.b16 %v3128, %v3127
      %v3134 = vsel %vm1029, %v3115, 0
      %3136 = vmatprep.subr.bf16.mxu0 0
      %3137 = vmatpush1.bf16.msra.mxu0 %v3129
      %3138 = vmatprep.subr.bf16.mxu0 0
      %3139 = vmatpush1.bf16.msra.mxu0 %v3130
      %3140 = vmatprep.subr.bf16.mxu0 0
      %3141 = vmatpush1.bf16.msra.mxu0 0
      %3142 = vmatprep.subr.bf16.mxu0 0
      %3143 = vmatpush1.bf16.msra.mxu0 0
      %3144 = vmatprep.subr.bf16.mxu0 0
      %3145 = vmatpush1.bf16.msra.mxu0 0
      %3146 = vmatprep.subr.bf16.mxu0 0
      %3147 = vmatpush1.bf16.msra.mxu0 0
      %3148 = vmatprep.subr.bf16.mxu0 0
      %3149 = vmatpush1.bf16.msra.mxu0 0
      %3150 = vmatprep.subr.bf16.mxu0 0
      %3151 = vmatpush1.bf16.msra.mxu0 0
      %3152 = vmatprep.subr.bf16.mxu0 0
      %3153 = vmatpush1.bf16.msra.mxu0 0
      %3154 = vmatprep.subr.bf16.mxu0 0
      %3155 = vmatpush1.bf16.msra.mxu0 0
      %3156 = vmatprep.subr.bf16.mxu0 0
      %3157 = vmatpush1.bf16.msra.mxu0 0
      %3158 = vmatprep.subr.bf16.mxu0 0
      %3159 = vmatpush1.bf16.msra.mxu0 0
      %3160 = vmatprep.subr.bf16.mxu0 0
      %3161 = vmatpush1.bf16.msra.mxu0 0
      %3162 = vmatprep.subr.bf16.mxu0 0
      %3163 = vmatpush1.bf16.msra.mxu0 0
      %3164 = vmatprep.subr.bf16.mxu0 0
      %3165 = vmatpush1.bf16.msra.mxu0 0
      %3166 = vmatprep.subr.bf16.mxu0 0
      %3167 = vmatpush1.bf16.msra.mxu0 0
      %3168 = vmatprep.mubr.bf16.mxu0 0
      %3169 = vmatmul.mubr.bf16.gmra.mrb[0].mxu0 %v3134
      %v3170 = vpop.f32.mrb[0].mxu0
      %v3171 = vadd.f32 0.0, %v3170
      %v3172 = vpop.f32.mrb[0].mxu0
      %v3173 = vpop.f32.mrb[0].mxu0
      %v3174 = vpop.f32.mrb[0].mxu0
      %3175 = vdwg.mxu0
      %v3176 = vadd.f32 %v2670, %v3171
      %s3177 = scalar_lea.vmem %s7, 1
      %v3178 = vld [vmem:[%s3177] sm:$0x1]
      %s3179 = scalar_lea.vmem %s8, 1
      %v3180 = vld [vmem:[%s3179] sm:$0x1]
      %v3182 = vlaneseq
      %v3183 = vshrl.u32 %v3182, 7
      %v3184 = vsub.s32 0, %v3183
      %v3185 = vrot.slane %v3178, %v3184
      %v3187 = vmul.f32 %v2138, %v3185
      %v3189 = vlaneseq
      %v3190 = vshrl.u32 %v3189, 7
      %v3191 = vsub.s32 0, %v3190
      %v3192 = vrot.slane %v3180, %v3191
      %v3194 = vadd.f32 %v3187, %v3192
      %v3195 = vpack.c.bf16 %v3194, %v3194
      %s3196 = scalar_lea.vmem %s17, 64
      %v3197 = vld [vmem:[%s3196] sm:$0xff]
      %v3198 = vld [vmem:[%s3196 + $0x8] sm:$0xff]
      %v3199 = vld [vmem:[%s3196 + $0x10] sm:$0xff]
      %v3200 = vld [vmem:[%s3196 + $0x18] sm:$0xff]
      %v3201 = vld [vmem:[%s3196 + $0x20] sm:$0xff]
      %v3202 = vld [vmem:[%s3196 + $0x28] sm:$0xff]
      %v3203 = vld [vmem:[%s3196 + $0x30] sm:$0xff]
      %v3204 = vld [vmem:[%s3196 + $0x38] sm:$0xff]
      %s3205 = scalar_lea.vmem %s18, 2
      %v3206 = vld [vmem:[%s3205] sm:$0x3]
      %v3208 = vlaneseq
      %v3209 = vshrl.u32 %v3208, 7
      %v3210 = vsub.s32 0, %v3209
      %v3211 = vrot.slane %v3206, %v3210
      %v3212 = vlaneseq
      %v3213 = vshrl.u32 %v3212, 7
      %v3214 = vsub.s32 1, %v3213
      %v3215 = vrot.slane %v3206, %v3214
      %v3226 = vunpack.c.l.b16 %v3197
      %v3227 = vunpack.c.h.b16 %v3197
      %v3228 = vunpack.c.l.b16 %v3198
      %v3229 = vunpack.c.h.b16 %v3198
      %v3230 = vunpack.c.l.b16 %v3199
      %v3231 = vunpack.c.h.b16 %v3199
      %v3232 = vunpack.c.l.b16 %v3200
      %v3233 = vunpack.c.h.b16 %v3200
      %v3234 = vunpack.c.l.b16 %v3201
      %v3235 = vunpack.c.h.b16 %v3201
      %v3236 = vunpack.c.l.b16 %v3202
      %v3237 = vunpack.c.h.b16 %v3202
      %v3238 = vunpack.c.l.b16 %v3203
      %v3239 = vunpack.c.h.b16 %v3203
      %v3240 = vunpack.c.l.b16 %v3204
      %v3241 = vunpack.c.h.b16 %v3204
      %v3242 = vpack.c.b16 %v3228, %v3226
      %v3243 = vpack.c.b16 %v3229, %v3227
      %v3244 = vpack.c.b16 %v3232, %v3230
      %v3245 = vpack.c.b16 %v3233, %v3231
      %v3246 = vpack.c.b16 %v3236, %v3234
      %v3247 = vpack.c.b16 %v3237, %v3235
      %v3248 = vpack.c.b16 %v3240, %v3238
      %v3249 = vpack.c.b16 %v3241, %v3239
      %v3259 = vsel %vm744, %v3195, 0
      %3261 = vmatprep.subr.bf16.mxu0 %v3243
      %3262 = vmatpush1.bf16.msra.mxu0 %v3242
      %3263 = vmatprep.subr.bf16.mxu0 %v3245
      %3264 = vmatpush1.bf16.msra.mxu0 %v3244
      %3265 = vmatprep.subr.bf16.mxu0 %v3247
      %3266 = vmatpush1.bf16.msra.mxu0 %v3246
      %3267 = vmatprep.subr.bf16.mxu0 %v3249
      %3268 = vmatpush1.bf16.msra.mxu0 %v3248
      %3269 = vmatprep.subr.bf16.mxu0 0
      %3270 = vmatpush1.bf16.msra.mxu0 0
      %3271 = vmatprep.subr.bf16.mxu0 0
      %3272 = vmatpush1.bf16.msra.mxu0 0
      %3273 = vmatprep.subr.bf16.mxu0 0
      %3274 = vmatpush1.bf16.msra.mxu0 0
      %3275 = vmatprep.subr.bf16.mxu0 0
      %3276 = vmatpush1.bf16.msra.mxu0 0
      %3277 = vmatprep.subr.bf16.mxu0 0
      %3278 = vmatpush1.bf16.msra.mxu0 0
      %3279 = vmatprep.subr.bf16.mxu0 0
      %3280 = vmatpush1.bf16.msra.mxu0 0
      %3281 = vmatprep.subr.bf16.mxu0 0
      %3282 = vmatpush1.bf16.msra.mxu0 0
      %3283 = vmatprep.subr.bf16.mxu0 0
      %3284 = vmatpush1.bf16.msra.mxu0 0
      %3285 = vmatprep.subr.bf16.mxu0 0
      %3286 = vmatpush1.bf16.msra.mxu0 0
      %3287 = vmatprep.subr.bf16.mxu0 0
      %3288 = vmatpush1.bf16.msra.mxu0 0
      %3289 = vmatprep.subr.bf16.mxu0 0
      %3290 = vmatpush1.bf16.msra.mxu0 0
      %3291 = vmatprep.subr.bf16.mxu0 0
      %3292 = vmatpush1.bf16.msra.mxu0 0
      %3293 = vmatprep.mubr.bf16.mxu0 0
      %3294 = vmatmul.mubr.bf16.gmra.mrb[0].mxu0 %v3259
      %v3295 = vpop.f32.mrb[0].mxu0
      %v3296 = vadd.f32 %v3211, %v3295
      %v3297 = vpop.f32.mrb[0].mxu0
      %v3298 = vadd.f32 %v3215, %v3297
      %v3299 = vpop.f32.mrb[0].mxu0
      %v3300 = vpop.f32.mrb[0].mxu0
      %3301 = vdwg.mxu0
      %v3302 = vmul.f32 %v3296, %v3296
      %v3303 = vmul.f32 %v3298, %v3298
      %v3304 = vmul.f32 %v3296, %v3302
      %v3305 = vmul.f32 %v3298, %v3303
      %v3306 = vmul.f32 %v3304, 0.044715
      %v3307 = vmul.f32 %v3305, 0.044715
      %v3308 = vadd.f32 %v3296, %v3306
      %v3309 = vadd.f32 %v3298, %v3307
      %v3310 = vmul.f32 %v3308, 0.7978846
      %v3311 = vmul.f32 %v3309, 0.7978846
      %v3312 = vtanh.pop %v3310
      %v3313 = vtanh.pop %v3311
      %v3314 = vadd.f32 %v3312, 1.0
      %v3315 = vadd.f32 %v3313, 1.0
      %v3316 = vmul.f32 %v3314, 0.5
      %v3317 = vmul.f32 %v3315, 0.5
      %v3318 = vmul.f32 %v3296, %v3316
      %v3319 = vmul.f32 %v3298, %v3317
      %v3320 = vpack.c.bf16 %v3318, %v3318
      %v3321 = vpack.c.bf16 %v3319, %v3319
      %s3322 = scalar_lea.vmem %s19, 128
      %v3323 = vld [vmem:[%s3322] sm:$0xf]
      %v3324 = vld [vmem:[%s3322 + $0x4] sm:$0xf]
      %v3325 = vld [vmem:[%s3322 + $0x8] sm:$0xf]
      %v3326 = vld [vmem:[%s3322 + $0xc] sm:$0xf]
      %v3327 = vld [vmem:[%s3322 + $0x10] sm:$0xf]
      %v3328 = vld [vmem:[%s3322 + $0x14] sm:$0xf]
      %v3329 = vld [vmem:[%s3322 + $0x18] sm:$0xf]
      %v3330 = vld [vmem:[%s3322 + $0x1c] sm:$0xf]
      %v3331 = vld [vmem:[%s3322 + $0x20] sm:$0xf]
      %v3332 = vld [vmem:[%s3322 + $0x24] sm:$0xf]
      %v3333 = vld [vmem:[%s3322 + $0x28] sm:$0xf]
      %v3334 = vld [vmem:[%s3322 + $0x2c] sm:$0xf]
      %v3335 = vld [vmem:[%s3322 + $0x30] sm:$0xf]
      %v3336 = vld [vmem:[%s3322 + $0x34] sm:$0xf]
      %v3337 = vld [vmem:[%s3322 + $0x38] sm:$0xf]
      %v3338 = vld [vmem:[%s3322 + $0x3c] sm:$0xf]
      %v3339 = vld [vmem:[%s3322 + $0x40] sm:$0xf]
      %v3340 = vld [vmem:[%s3322 + $0x44] sm:$0xf]
      %v3341 = vld [vmem:[%s3322 + $0x48] sm:$0xf]
      %v3342 = vld [vmem:[%s3322 + $0x4c] sm:$0xf]
      %v3343 = vld [vmem:[%s3322 + $0x50] sm:$0xf]
      %v3344 = vld [vmem:[%s3322 + $0x54] sm:$0xf]
      %v3345 = vld [vmem:[%s3322 + $0x58] sm:$0xf]
      %v3346 = vld [vmem:[%s3322 + $0x5c] sm:$0xf]
      %v3347 = vld [vmem:[%s3322 + $0x60] sm:$0xf]
      %v3348 = vld [vmem:[%s3322 + $0x64] sm:$0xf]
      %v3349 = vld [vmem:[%s3322 + $0x68] sm:$0xf]
      %v3350 = vld [vmem:[%s3322 + $0x6c] sm:$0xf]
      %v3351 = vld [vmem:[%s3322 + $0x70] sm:$0xf]
      %v3352 = vld [vmem:[%s3322 + $0x74] sm:$0xf]
      %v3353 = vld [vmem:[%s3322 + $0x78] sm:$0xf]
      %v3354 = vld [vmem:[%s3322 + $0x7c] sm:$0xf]
      %s3355 = scalar_lea.vmem %s20, 1
      %v3356 = vld [vmem:[%s3355] sm:$0x1]
      %v3358 = vlaneseq
      %v3359 = vshrl.u32 %v3358, 7
      %v3360 = vsub.s32 0, %v3359
      %v3361 = vrot.slane %v3356, %v3360
      %v3395 = vunpack.c.l.b16 %v3323
      %v3396 = vunpack.c.l.b16 %v3324
      %v3397 = vunpack.c.l.b16 %v3325
      %v3398 = vunpack.c.l.b16 %v3326
      %v3399 = vunpack.c.l.b16 %v3327
      %v3400 = vunpack.c.l.b16 %v3328
      %v3401 = vunpack.c.l.b16 %v3329
      %v3402 = vunpack.c.l.b16 %v3330
      %v3403 = vunpack.c.l.b16 %v3331
      %v3404 = vunpack.c.l.b16 %v3332
      %v3405 = vunpack.c.l.b16 %v3333
      %v3406 = vunpack.c.l.b16 %v3334
      %v3407 = vunpack.c.l.b16 %v3335
      %v3408 = vunpack.c.l.b16 %v3336
      %v3409 = vunpack.c.l.b16 %v3337
      %v3410 = vunpack.c.l.b16 %v3338
      %v3411 = vunpack.c.l.b16 %v3339
      %v3412 = vunpack.c.l.b16 %v3340
      %v3413 = vunpack.c.l.b16 %v3341
      %v3414 = vunpack.c.l.b16 %v3342
      %v3415 = vunpack.c.l.b16 %v3343
      %v3416 = vunpack.c.l.b16 %v3344
      %v3417 = vunpack.c.l.b16 %v3345
      %v3418 = vunpack.c.l.b16 %v3346
      %v3419 = vunpack.c.l.b16 %v3347
      %v3420 = vunpack.c.l.b16 %v3348
      %v3421 = vunpack.c.l.b16 %v3349
      %v3422 = vunpack.c.l.b16 %v3350
      %v3423 = vunpack.c.l.b16 %v3351
      %v3424 = vunpack.c.l.b16 %v3352
      %v3425 = vunpack.c.l.b16 %v3353
      %v3426 = vunpack.c.l.b16 %v3354
      %v3427 = vpack.c.b16 %v3396, %v3395
      %v3428 = vpack.c.b16 %v3398, %v3397
      %v3429 = vpack.c.b16 %v3400, %v3399
      %v3430 = vpack.c.b16 %v3402, %v3401
      %v3431 = vpack.c.b16 %v3404, %v3403
      %v3432 = vpack.c.b16 %v3406, %v3405
      %v3433 = vpack.c.b16 %v3408, %v3407
      %v3434 = vpack.c.b16 %v3410, %v3409
      %v3435 = vpack.c.b16 %v3412, %v3411
      %v3436 = vpack.c.b16 %v3414, %v3413
      %v3437 = vpack.c.b16 %v3416, %v3415
      %v3438 = vpack.c.b16 %v3418, %v3417
      %v3439 = vpack.c.b16 %v3420, %v3419
      %v3440 = vpack.c.b16 %v3422, %v3421
      %v3441 = vpack.c.b16 %v3424, %v3423
      %v3442 = vpack.c.b16 %v3426, %v3425
      %3459 = vmatprep.subr.bf16.mxu0 0
      %3460 = vmatpush1.bf16.msra.mxu0 %v3427
      %3461 = vmatprep.subr.bf16.mxu0 0
      %3462 = vmatpush1.bf16.msra.mxu0 %v3428
      %3463 = vmatprep.subr.bf16.mxu0 0
      %3464 = vmatpush1.bf16.msra.mxu0 %v3429
      %3465 = vmatprep.subr.bf16.mxu0 0
      %3466 = vmatpush1.bf16.msra.mxu0 %v3430
      %3467 = vmatprep.subr.bf16.mxu0 0
      %3468 = vmatpush1.bf16.msra.mxu0 %v3431
      %3469 = vmatprep.subr.bf16.mxu0 0
      %3470 = vmatpush1.bf16.msra.mxu0 %v3432
      %3471 = vmatprep.subr.bf16.mxu0 0
      %3472 = vmatpush1.bf16.msra.mxu0 %v3433
      %3473 = vmatprep.subr.bf16.mxu0 0
      %3474 = vmatpush1.bf16.msra.mxu0 %v3434
      %3475 = vmatprep.subr.bf16.mxu0 0
      %3476 = vmatpush1.bf16.msra.mxu0 %v3435
      %3477 = vmatprep.subr.bf16.mxu0 0
      %3478 = vmatpush1.bf16.msra.mxu0 %v3436
      %3479 = vmatprep.subr.bf16.mxu0 0
      %3480 = vmatpush1.bf16.msra.mxu0 %v3437
      %3481 = vmatprep.subr.bf16.mxu0 0
      %3482 = vmatpush1.bf16.msra.mxu0 %v3438
      %3483 = vmatprep.subr.bf16.mxu0 0
      %3484 = vmatpush1.bf16.msra.mxu0 %v3439
      %3485 = vmatprep.subr.bf16.mxu0 0
      %3486 = vmatpush1.bf16.msra.mxu0 %v3440
      %3487 = vmatprep.subr.bf16.mxu0 0
      %3488 = vmatpush1.bf16.msra.mxu0 %v3441
      %3489 = vmatprep.subr.bf16.mxu0 0
      %3490 = vmatpush1.bf16.msra.mxu0 %v3442
      %3491 = vmatprep.mubr.bf16.mxu0 %v3321
      %3492 = vmatmul.mubr.bf16.gmra.mrb[0].mxu0 %v3320
      %v3493 = vpop.f32.mrb[0].mxu0
      %v3494 = vadd.f32 %v3361, %v3493
      %v3495 = vpop.f32.mrb[0].mxu0
      %v3496 = vpop.f32.mrb[0].mxu0
      %v3497 = vpop.f32.mrb[0].mxu0
      %3498 = vdwg.mxu0
      %v3499 = vadd.f32 %v2121, %v3176
      %v3500 = vadd.f32 %v3499, %v3494
      %v3501 = vld [vmem:[%s21] sm:$0x1]
      %v3502 = vld [vmem:[%s22] sm:$0x1]
      %v3503 = vsel %vm744, %v3500, 0.0
      %3504 = vadd.xlane.f32.xlu0 %v3503
      %v3505 = vpop.xlane.xlu0 %3504
      %v3506 = vmul.f32 %v3505, %v748
      %v3507 = vsub.f32 %v3500, %v3506
      %v3508 = vmul.f32 %v3507, %v3507
      %v3509 = vsel %vm744, %v3508, 0.0
      %3510 = vadd.xlane.f32.xlu0 %v3509
      %v3511 = vpop.xlane.xlu0 %3510
      %v3512 = vmul.f32 %v3511, %v748
      %v3513 = vadd.f32 %v3512, 1e-05
      %v3514 = vrsqrt.pop %v3513
      %v3515 = vmul.f32 %v3507, %v3514
      %v3517 = vlaneseq
      %v3518 = vshrl.u32 %v3517, 7
      %v3519 = vsub.s32 0, %v3518
      %v3520 = vrot.slane %v3501, %v3519
      %v3522 = vmul.f32 %v3515, %v3520
      %v3524 = vlaneseq
      %v3525 = vshrl.u32 %v3524, 7
      %v3526 = vsub.s32 0, %v3525
      %v3527 = vrot.slane %v3502, %v3526
      %v3529 = vadd.f32 %v3522, %v3527
      %v3530 = vsel %vm744, %v3529, 0.0
      %v3531 = vrot.slane %v3530, 4
      %v3532 = vadd.f32 %v3530, %v3531
      %v3533 = vrot.slane %v3532, 2
      %v3534 = vadd.f32 %v3532, %v3533
      %v3535 = vrot.slane %v3534, 1
      %v3536 = vadd.f32 %v3534, %v3535
      %v3537 = vrcp.pop 8.0
      %v3538 = vmul.f32 %v3536, %v3537
      %v3539 = vpack.c.bf16 %v3538, %v3538
      %v3540 = vld [vmem:[%s23] sm:$0xf]
      %v3541 = vld [vmem:[%s23 + $0x4] sm:$0xf]
      %v3542 = vld [vmem:[%s23 + $0x8] sm:$0xf]
      %v3543 = vld [vmem:[%s23 + $0xc] sm:$0xf]
      %v3544 = vld [vmem:[%s23 + $0x10] sm:$0xf]
      %v3545 = vld [vmem:[%s23 + $0x14] sm:$0xf]
      %v3546 = vld [vmem:[%s23 + $0x18] sm:$0xf]
      %v3547 = vld [vmem:[%s23 + $0x1c] sm:$0xf]
      %v3556 = vunpack.c.l.b16 %v3540
      %v3557 = vunpack.c.l.b16 %v3541
      %v3558 = vunpack.c.l.b16 %v3542
      %v3559 = vunpack.c.l.b16 %v3543
      %v3560 = vunpack.c.l.b16 %v3544
      %v3561 = vunpack.c.l.b16 %v3545
      %v3562 = vunpack.c.l.b16 %v3546
      %v3563 = vunpack.c.l.b16 %v3547
      %v3564 = vpack.c.b16 %v3557, %v3556
      %v3565 = vpack.c.b16 %v3559, %v3558
      %v3566 = vpack.c.b16 %v3561, %v3560
      %v3567 = vpack.c.b16 %v3563, %v3562
      %v3573 = vsel %vm744, %v3539, 0
      %3575 = vmatprep.subr.bf16.mxu0 0
      %3576 = vmatpush1.bf16.msra.mxu0 %v3564
      %3577 = vmatprep.subr.bf16.mxu0 0
      %3578 = vmatpush1.bf16.msra.mxu0 %v3565
      %3579 = vmatprep.subr.bf16.mxu0 0
      %3580 = vmatpush1.bf16.msra.mxu0 %v3566
      %3581 = vmatprep.subr.bf16.mxu0 0
      %3582 = vmatpush1.bf16.msra.mxu0 %v3567
      %3583 = vmatprep.subr.bf16.mxu0 0
      %3584 = vmatpush1.bf16.msra.mxu0 0
      %3585 = vmatprep.subr.bf16.mxu0 0
      %3586 = vmatpush1.bf16.msra.mxu0 0
      %3587 = vmatprep.subr.bf16.mxu0 0
      %3588 = vmatpush1.bf16.msra.mxu0 0
      %3589 = vmatprep.subr.bf16.mxu0 0
      %3590 = vmatpush1.bf16.msra.mxu0 0
      %3591 = vmatprep.subr.bf16.mxu0 0
      %3592 = vmatpush1.bf16.msra.mxu0 0
      %3593 = vmatprep.subr.bf16.mxu0 0
      %3594 = vmatpush1.bf16.msra.mxu0 0
      %3595 = vmatprep.subr.bf16.mxu0 0
      %3596 = vmatpush1.bf16.msra.mxu0 0
      %3597 = vmatprep.subr.bf16.mxu0 0
      %3598 = vmatpush1.bf16.msra.mxu0 0
      %3599 = vmatprep.subr.bf16.mxu0 0
      %3600 = vmatpush1.bf16.msra.mxu0 0
      %3601 = vmatprep.subr.bf16.mxu0 0
      %3602 = vmatpush1.bf16.msra.mxu0 0
      %3603 = vmatprep.subr.bf16.mxu0 0
      %3604 = vmatpush1.bf16.msra.mxu0 0
      %3605 = vmatprep.subr.bf16.mxu0 0
      %3606 = vmatpush1.bf16.msra.mxu0 0
      %3607 = vmatprep.mubr.bf16.mxu0 0
      %3608 = vmatmul.mubr.bf16.gmra.mrb[0].mxu0 %v3573
      %v3609 = vpop.f32.mrb[0].mxu0
      %v3610 = vadd.f32 0.0, %v3609
      %v3611 = vpop.f32.mrb[0].mxu0
      %v3612 = vpop.f32.mrb[0].mxu0
      %v3613 = vpop.f32.mrb[0].mxu0
      %3614 = vdwg.mxu0
      %v3615 = vlaneseq
      %v3616 = vshrl.u32 %v3615, 7
      %v3617 = vsub.s32 0, %v3616
      %v3618 = vrot.slane %v3610, %v3617
      %3619 = vst [vmem:[%s732] sm:$0xff] %v3618
      %p3620 = scmp.lt.s32.totalorder %s35, 1
      %s3621 = scalar_select %p3620, %s35, 1
      %s3622 = smul.addr %s3621, 8
      %s3623 = scalar_lea.vmem %s24, %s3622
      // Predicated region
      $region117: #{reward_model_forward.1} parent=115 // pred_check
        %p3624 = pneg %p562
      $region118: #{reward_model_forward.1} parent=115 // pred_check_branch
        %3626 = sbr.rel (%p3624) target = $region120
      $region119: #{reward_model_forward.1} parent=115 // pred_region
        _
      $region120: #{reward_model_forward.1} parent=115 // pred_fallthru
        _
    $region116: #{reward_model_forward.1} parent=5 // pred_fallthru
      _
    %p3627 = scmp.le.s32.totalorder 2, %s30
    // Predicated region
    $region121: #{reward_model_forward.1} parent=5 // pred_check
      %p3628 = pneg %p3627
    $region122: #{reward_model_forward.1} parent=5 // pred_check_branch
      %3630 = sbr.rel (%p3628) target = $region124
    $region123: #{reward_model_forward.1} parent=5 // pred_region
      %s3631 = ssub.s32 %s30, 2
      // Predicated region
      $region125: #{reward_model_forward.1} parent=123 // pred_check
        %p3632 = pneg %p568
      $region126: #{reward_model_forward.1} parent=123 // pred_check_branch
        %3634 = sbr.rel (%p3632) target = $region128
      $region127: #{reward_model_forward.1} parent=123 // pred_region
        %p3635 = scmp.lt.s32.totalorder %s36, 1
        %s3636 = scalar_select %p3635, %s36, 1
        %s3637 = smul.addr %s3636, 8
        %s3638 = scalar_lea.vmem %s24, %s3637
      $region128: #{reward_model_forward.1} parent=123 // pred_fallthru
        _
    $region124: #{reward_model_forward.1} parent=5 // pred_fallthru
      _
  $region6: #{reward_model_forward.1} parent=0 // loop_footer
    %s34 = sadd.s32 1, %s30
  $region7: #{reward_model_forward.1} parent=0 // loop_footer_branch
    %29 = sbr.rel target = $region3
  $region8: #{reward_model_forward.1} parent=0 // loop_exit
    _

</llo_original>
